<compile_context>
chip_gen: v6e
topology: v6e:2x2x1
jax: 0.10.0
libtpu: 0.0.40
codegen_flags: <defaults>
</compile_context>

<pallas_src>
import jax
import jax.numpy as jnp
from jax.experimental import pallas as pl
from jax.experimental.pallas import tpu as pltpu


# Prepared (kernel-facing) parameter order.
_PARAM_NAMES = (
    "enc_wc", "enc_bc", "enc_wih", "enc_whh", "enc_bih", "enc_bhh",
    "att_w1e", "att_b1", "att_w2", "att_b2", "att_wv",
    "dec_whcat",                 # [att_w1h | dec_whh]  -> (H, 4H)
    "dec_wih_e", "dec_wih_c", "dec_bih", "dec_bhh",
    "dec_emb_p",                 # embedding padded to (Vp, W)
    "dec_wout_p", "dec_bout_p",  # vocab head padded to Vp lanes
)
_NP = len(_PARAM_NAMES)


def _vmem():
    # Whole-array blocks resident in VMEM (shapes here are tiny).
    return pl.BlockSpec(memory_space=pltpu.MemorySpace.VMEM)


def _dot(a, b):
    return jnp.dot(a, b, preferred_element_type=jnp.float32)


def _bt_dot(x, w):
    # (B,T,K) @ (K,N) -> (B,T,N) on the MXU with no (B*T, K) relayout.
    return jnp.einsum("btk,kn->btn", x, w, preferred_element_type=jnp.float32)


# --------------------------------------------------------------------------
# Encoder: Linear(feat -> H) + single-layer GRU over time (torch gate order
# r, z, n).  Input projections for all timesteps are hoisted out of the
# recurrence; the serial path is ONE packed (H,3H) matmul per timestep.
# --------------------------------------------------------------------------
def _encoder_body(x, p):
    B, T, _ = x.shape
    H = p["enc_bc"].shape[1]

    xc = _bt_dot(x, p["enc_wc"]) + p["enc_bc"]
    # TODO(synk): nn.Dropout after the compress Linear is identity (eval mode).
    gi = _bt_dot(xc, p["enc_wih"]) + p["enc_bih"]          # (B, T, 3H)
    bhh = jnp.broadcast_to(p["enc_bhh"], (B, 3 * H))       # hoisted broadcast

    h = jnp.zeros((B, H), jnp.float32)
    hs = []
    for t in range(T):                   # static trip count, fully unrolled
        gh = _dot(h, p["enc_whh"]) + bhh                   # ONE matmul / step
        gi_t = gi[:, t, :]
        r = jax.nn.sigmoid(gi_t[:, :H] + gh[:, :H])
        z = jax.nn.sigmoid(gi_t[:, H:2 * H] + gh[:, H:2 * H])
        n = jnp.tanh(gi_t[:, 2 * H:] + r * gh[:, 2 * H:])
        h = (1.0 - z) * n + z * h
        hs.append(h)
    enc = jnp.stack(hs, axis=1)                            # (B, T, H) in vregs
    return enc, h


# --------------------------------------------------------------------------
# Decoder step builders.  Step-invariant work (enc-side attention projection,
# bias broadcasts, weight concatenations) is done once per kernel.
# --------------------------------------------------------------------------
def _make_decoder_steps(p, enc):
    B, T, H = enc.shape
    Vp = p["dec_bout_p"].shape[1]

    # Attention encoder-side projection (+ b1 folded in), computed once.
    enc_proj = _bt_dot(enc, p["att_w1e"]) + p["att_b1"]    # (B, T, H)
    b2 = jnp.broadcast_to(p["att_b2"], (B, T, H))
    wv = jnp.broadcast_to(p["att_wv"], (B, T, H))
    bih = jnp.broadcast_to(p["dec_bih"], (B, 3 * H))
    bhh = jnp.broadcast_to(p["dec_bhh"], (B, 3 * H))
    bout = jnp.broadcast_to(p["dec_bout_p"], (B, Vp))
    w_in_cat = jnp.concatenate([p["dec_wih_e"], p["dec_wih_c"]], axis=0)  # (W+H,3H)
    whcat = p["dec_whcat"]                                                # (H, 4H)

    def _attend(h):
        # ONE h-matmul yields the attention query projection AND all three
        # hidden-side GRU gates (4H = 128 lanes = one lane-dense vreg tile).
        hh = _dot(h, whcat)                                # (B, 4H)
        hproj = hh[:, :H]
        gh = hh[:, H:] + bhh                               # (B, 3H)
        x1 = jnp.tanh(enc_proj + hproj[:, None, :])        # (B, T, H)
        x2 = jnp.tanh(_bt_dot(x1, p["att_w2"]) + b2)       # (B, T, H)
        scores = jnp.sum(x2 * wv, axis=-1)                 # (B, T)
        m = jnp.max(scores, axis=-1, keepdims=True)
        e = jnp.exp(scores - m)
        alpha = e / jnp.sum(e, axis=-1, keepdims=True)     # exact softmax
        context = jnp.sum(alpha[:, :, None] * enc, axis=1)  # (B, H) VPU+XLU
        return gh, context

    def _cell(h, gi, gh):
        r = jax.nn.sigmoid(gi[:, :H] + gh[:, :H])
        z = jax.nn.sigmoid(gi[:, H:2 * H] + gh[:, H:2 * H])
        n = jnp.tanh(gi[:, 2 * H:] + r * gh[:, 2 * H:])
        h_new = (1.0 - z) * n + z * h
        logits = _dot(h_new, p["dec_wout_p"]) + bout       # (B, Vp) lane-dense
        return h_new, logits

    def step_train(h, gi_emb_t):
        # emb-side gates (incl. bih) are precomputed for all steps.
        gh, context = _attend(h)
        gi = gi_emb_t + _dot(context, p["dec_wih_c"])
        return _cell(h, gi, gh)

    def step_infer(h, emb):
        gh, context = _attend(h)
        gi = _dot(jnp.concatenate([emb, context], axis=1), w_in_cat) + bih
        return _cell(h, gi, gh)

    return step_train, step_infer


def _finalize_logits(logits):
    """Fused log-softmax + greedy argmax (first max index, like torch).

    `logits` is Vp-lane padded with -1e30, so padded lanes never win the
    argmax and contribute nothing to the log-sum-exp.
    """
    Vp = logits.shape[1]
    m = jnp.max(logits, axis=-1, keepdims=True)
    z = logits - m
    lse = jnp.log(jnp.sum(jnp.exp(z), axis=-1, keepdims=True))
    logp = z - lse
    idx = jax.lax.broadcasted_iota(jnp.int32, logits.shape, 1)
    word = jnp.min(jnp.where(logits >= m, idx, Vp), axis=-1, keepdims=True)
    return logp, word.astype(jnp.int32)


# --------------------------------------------------------------------------
# Fused forward kernels (encoder + full decode loop in ONE pallas_call).
# --------------------------------------------------------------------------
def _train_kernel(x_ref, tgt_ref, *refs):
    param_refs = refs[:_NP]
    logp_ref, pred_ref = refs[_NP:]
    p = {n: r[...] for n, r in zip(_PARAM_NAMES, param_refs)}

    x = x_ref[...]
    tgt = tgt_ref[...]                                     # (B, L) int32
    enc, h = _encoder_body(x, p)
    step_train, _ = _make_decoder_steps(p, enc)

    B, L = tgt.shape
    Vp = p["dec_bout_p"].shape[1]
    n_steps = L - 1

    # Teacher-forcing path hoisted off the serial loop: one-hot embed every
    # input word and compute the emb-side GRU gate pre-activations (incl. bih)
    # for all steps with two batched matmuls.
    words = tgt[:, :n_steps]                               # (B, L-1)
    iota = jax.lax.broadcasted_iota(jnp.int32, (B, n_steps, Vp), 2)
    onehot = jnp.where(iota == words[:, :, None], 1.0, 0.0).astype(jnp.float32)
    emb_all = jnp.einsum("blv,vw->blw", onehot, p["dec_emb_p"],
                         preferred_element_type=jnp.float32)      # (B, L-1, W)
    gi_emb_all = (jnp.einsum("blw,wk->blk", emb_all, p["dec_wih_e"],
                             preferred_element_type=jnp.float32)
                  + p["dec_bih"])                                  # (B, L-1, 3H)

    # TODO(synk): scheduled-sampling randomness (uses `step`) omitted;
    # deterministic teacher forcing is used instead.
    logps, preds = [], []
    for t in range(n_steps):             # static trip count, fully unrolled
        h, logits = step_train(h, gi_emb_all[:, t, :])
        logp, word = _finalize_logits(logits)
        logps.append(logp)
        preds.append(word)

    # Single lane-dense stores (no per-step masked partial stores).
    logp_ref[...] = jnp.stack(logps, axis=1)               # (B, L-1, Vp)
    pred_ref[...] = jnp.concatenate(preds, axis=1)         # (B, L-1)


def _make_infer_kernel(max_len, bos_id):
    def kernel(x_ref, *refs):
        param_refs = refs[:_NP]
        logp_ref, pred_ref = refs[_NP:]
        p = {n: r[...] for n, r in zip(_PARAM_NAMES, param_refs)}

        x = x_ref[...]
        enc, h = _encoder_body(x, p)
        _, step_infer = _make_decoder_steps(p, enc)

        B = x.shape[0]
        Vp = p["dec_bout_p"].shape[1]
        iota_v = jax.lax.broadcasted_iota(jnp.int32, (B, Vp), 1)

        word = jnp.full((B, 1), bos_id, jnp.int32)          # <BOS>
        logps, preds = [], []
        for _ in range(max_len):         # greedy decode, fully on-chip
            onehot = jnp.where(iota_v == word, 1.0, 0.0).astype(jnp.float32)
            emb = _dot(onehot, p["dec_emb_p"])              # (B, W)
            h, logits = step_infer(h, emb)
            logp, word = _finalize_logits(logits)
            logps.append(logp)
            preds.append(word)

        logp_ref[...] = jnp.stack(logps, axis=1)            # (B, max_len, Vp)
        pred_ref[...] = jnp.concatenate(preds, axis=1)      # (B, max_len)
    return kernel


# --------------------------------------------------------------------------
# Parameter preparation: pad the vocab head / embedding to a 128-lane block
# and pre-concatenate the packed recurrence weights.
# --------------------------------------------------------------------------
def _prepare_params(params):
    V, W = params["dec_emb"].shape
    H = params["enc_bc"].shape[1]
    Vp = ((V + 127) // 128) * 128

    emb_p = jnp.zeros((Vp, W), jnp.float32).at[:V, :].set(params["dec_emb"])
    wout_p = jnp.zeros((H, Vp), jnp.float32).at[:, :V].set(params["dec_wout"])
    bout_p = jnp.full((1, Vp), -1e30, jnp.float32).at[:, :V].set(params["dec_bout"])

    prep = dict(
        enc_wc=params["enc_wc"], enc_bc=params["enc_bc"],
        enc_wih=params["enc_wih"], enc_whh=params["enc_whh"],
        enc_bih=params["enc_bih"], enc_bhh=params["enc_bhh"],
        att_w1e=params["att_w1e"], att_b1=params["att_b1"],
        att_w2=params["att_w2"], att_b2=params["att_b2"], att_wv=params["att_wv"],
        dec_whcat=jnp.concatenate([params["att_w1h"], params["dec_whh"]], axis=1),
        dec_wih_e=params["dec_wih_e"], dec_wih_c=params["dec_wih_c"],
        dec_bih=params["dec_bih"], dec_bhh=params["dec_bhh"],
        dec_emb_p=emb_p, dec_wout_p=wout_p, dec_bout_p=bout_p,
    )
    return prep, Vp, V


# --------------------------------------------------------------------------
# Python wrappers (one pallas_call per forward).
# --------------------------------------------------------------------------
def model_forward_train(params, avi_feats, targets):
    B = avi_feats.shape[0]
    L = targets.shape[1]
    prep, Vp, V = _prepare_params(params)
    args = [prep[n] for n in _PARAM_NAMES]
    logp_p, pred = pl.pallas_call(
        _train_kernel,
        out_shape=(jax.ShapeDtypeStruct((B, L - 1, Vp), jnp.float32),
                   jax.ShapeDtypeStruct((B, L - 1), jnp.int32)),
        in_specs=[_vmem()] * (2 + _NP),
        out_specs=(_vmem(), _vmem()),
    )(avi_feats, targets.astype(jnp.int32), *args)
    return logp_p[:, :, :V], pred


def model_forward_infer(params, avi_feats, max_len=8, bos_id=1):
    B = avi_feats.shape[0]
    prep, Vp, V = _prepare_params(params)
    args = [prep[n] for n in _PARAM_NAMES]
    logp_p, pred = pl.pallas_call(
        _make_infer_kernel(max_len, bos_id),
        out_shape=(jax.ShapeDtypeStruct((B, max_len, Vp), jnp.float32),
                   jax.ShapeDtypeStruct((B, max_len), jnp.int32)),
        in_specs=[_vmem()] * (1 + _NP),
        out_specs=(_vmem(), _vmem()),
    )(avi_feats, *args)
    return logp_p[:, :, :V], pred


class PallasModel:
    """Combined encoder-decoder model (Pallas TPU version of `Model`)."""

    def __init__(self, params):
        self.params = params

    def __call__(self, avi_feats, mode, target_sentences=None, step=None):
        if mode == "train":
            return model_forward_train(self.params, avi_feats, target_sentences)
        elif mode == "inference":
            return model_forward_infer(self.params, avi_feats)


# --------------------------------------------------------------------------
# Deterministic parameter initialization (same layout as PyTorch reference,
# stored input-major so kernels compute x @ W).
# --------------------------------------------------------------------------
def init_params(key, F, H, W, V):
    keys = jax.random.split(key, 20)

    def nrm(k, shape, scale=0.1):
        return (scale * jax.random.normal(k, shape)).astype(jnp.float32)

    return dict(
        # encoder: compress Linear + GRU
        enc_wc=nrm(keys[0], (F, H)), enc_bc=nrm(keys[1], (1, H)),
        enc_wih=nrm(keys[2], (H, 3 * H)), enc_whh=nrm(keys[3], (H, 3 * H)),
        enc_bih=nrm(keys[4], (1, 3 * H)), enc_bhh=nrm(keys[5], (1, 3 * H)),
        # attention net
        att_w1e=nrm(keys[6], (H, H)), att_w1h=nrm(keys[7], (H, H)), att_b1=nrm(keys[8], (1, H)),
        att_w2=nrm(keys[9], (H, H)), att_b2=nrm(keys[10], (1, H)),
        att_wv=nrm(keys[11], (1, H)),
        # decoder: embedding + GRU cell + output projection
        dec_emb=nrm(keys[12], (V, W)),
        dec_wih_e=nrm(keys[13], (W, 3 * H)), dec_wih_c=nrm(keys[14], (H, 3 * H)),
        dec_whh=nrm(keys[15], (H, 3 * H)),
        dec_bih=nrm(keys[16], (1, 3 * H)), dec_bhh=nrm(keys[17], (1, 3 * H)),
        dec_wout=nrm(keys[18], (H, V)), dec_bout=nrm(keys[19], (1, V)),
    )


if __name__ == "__main__":
    B, T, F, H, W, V, L = 2, 8, 64, 32, 32, 24, 6
    key = jax.random.PRNGKey(0)
    k_feat, k_tgt, k_par = jax.random.split(key, 3)

    params = init_params(k_par, F, H, W, V)
    avi_feats = jax.random.normal(k_feat, (B, T, F), dtype=jnp.float32)
    targets = jax.random.randint(k_tgt, (B, L), 0, V, dtype=jnp.int32).at[:, 0].set(1)  # BOS=1

    model = PallasModel(params)

    logp_tr, pred_tr = model(avi_feats, "train", target_sentences=targets, step=0)
    logp_inf, pred_inf = model(avi_feats, "inference")
    jax.block_until_ready((logp_tr, pred_tr, logp_inf, pred_inf))

    assert logp_tr.shape == (B, L - 1, V) and pred_tr.shape == (B, L - 1)
    assert logp_inf.shape == (B, 8, V) and pred_inf.shape == (B, 8)
    assert bool(jnp.all(jnp.isfinite(logp_tr))) and bool(jnp.all(jnp.isfinite(logp_inf)))
    assert bool(jnp.all((pred_tr >= 0) & (pred_tr < V)))
    assert bool(jnp.all((pred_inf >= 0) & (pred_inf < V)))
    print("KERNEL_OK")
</pallas_src>

<mosaic_0001>
module attributes {stable_mosaic.version = 11 : i64} {
  func.func @_train_kernel(%arg0: memref<2x8x64xf32, #tpu.memory_space<vmem>>, %arg1: memref<2x6xi32, #tpu.memory_space<vmem>>, %arg2: memref<64x32xf32, #tpu.memory_space<vmem>>, %arg3: memref<1x32xf32, #tpu.memory_space<vmem>>, %arg4: memref<32x96xf32, #tpu.memory_space<vmem>>, %arg5: memref<32x96xf32, #tpu.memory_space<vmem>>, %arg6: memref<1x96xf32, #tpu.memory_space<vmem>>, %arg7: memref<1x96xf32, #tpu.memory_space<vmem>>, %arg8: memref<32x32xf32, #tpu.memory_space<vmem>>, %arg9: memref<1x32xf32, #tpu.memory_space<vmem>>, %arg10: memref<32x32xf32, #tpu.memory_space<vmem>>, %arg11: memref<1x32xf32, #tpu.memory_space<vmem>>, %arg12: memref<1x32xf32, #tpu.memory_space<vmem>>, %arg13: memref<32x128xf32, #tpu.memory_space<vmem>>, %arg14: memref<32x96xf32, #tpu.memory_space<vmem>>, %arg15: memref<32x96xf32, #tpu.memory_space<vmem>>, %arg16: memref<1x96xf32, #tpu.memory_space<vmem>>, %arg17: memref<1x96xf32, #tpu.memory_space<vmem>>, %arg18: memref<128x32xf32, #tpu.memory_space<vmem>>, %arg19: memref<32x128xf32, #tpu.memory_space<vmem>>, %arg20: memref<1x128xf32, #tpu.memory_space<vmem>>, %arg21: memref<2x5x128xf32, #tpu.memory_space<vmem>>, %arg22: memref<2x5xi32, #tpu.memory_space<vmem>>) attributes {dimension_semantics = [], scalar_prefetch = 0 : i64, scratch_operands = 0 : i64, tpu.core_type = #tpu.core_type<tc>} {
    %c0 = arith.constant 0 : index
    %c0_0 = arith.constant 0 : index
    %0 = vector.load %arg2[%c0, %c0_0] : memref<64x32xf32, #tpu.memory_space<vmem>>, vector<64x32xf32>
    %c0_1 = arith.constant 0 : index
    %c0_2 = arith.constant 0 : index
    %1 = vector.load %arg3[%c0_1, %c0_2] : memref<1x32xf32, #tpu.memory_space<vmem>>, vector<1x32xf32>
    %c0_3 = arith.constant 0 : index
    %c0_4 = arith.constant 0 : index
    %2 = vector.load %arg4[%c0_3, %c0_4] : memref<32x96xf32, #tpu.memory_space<vmem>>, vector<32x96xf32>
    %c0_5 = arith.constant 0 : index
    %c0_6 = arith.constant 0 : index
    %3 = vector.load %arg5[%c0_5, %c0_6] : memref<32x96xf32, #tpu.memory_space<vmem>>, vector<32x96xf32>
    %c0_7 = arith.constant 0 : index
    %c0_8 = arith.constant 0 : index
    %4 = vector.load %arg6[%c0_7, %c0_8] : memref<1x96xf32, #tpu.memory_space<vmem>>, vector<1x96xf32>
    %c0_9 = arith.constant 0 : index
    %c0_10 = arith.constant 0 : index
    %5 = vector.load %arg7[%c0_9, %c0_10] : memref<1x96xf32, #tpu.memory_space<vmem>>, vector<1x96xf32>
    %c0_11 = arith.constant 0 : index
    %c0_12 = arith.constant 0 : index
    %6 = vector.load %arg8[%c0_11, %c0_12] : memref<32x32xf32, #tpu.memory_space<vmem>>, vector<32x32xf32>
    %c0_13 = arith.constant 0 : index
    %c0_14 = arith.constant 0 : index
    %7 = vector.load %arg9[%c0_13, %c0_14] : memref<1x32xf32, #tpu.memory_space<vmem>>, vector<1x32xf32>
    %c0_15 = arith.constant 0 : index
    %c0_16 = arith.constant 0 : index
    %8 = vector.load %arg10[%c0_15, %c0_16] : memref<32x32xf32, #tpu.memory_space<vmem>>, vector<32x32xf32>
    %c0_17 = arith.constant 0 : index
    %c0_18 = arith.constant 0 : index
    %9 = vector.load %arg11[%c0_17, %c0_18] : memref<1x32xf32, #tpu.memory_space<vmem>>, vector<1x32xf32>
    %c0_19 = arith.constant 0 : index
    %c0_20 = arith.constant 0 : index
    %10 = vector.load %arg12[%c0_19, %c0_20] : memref<1x32xf32, #tpu.memory_space<vmem>>, vector<1x32xf32>
    %c0_21 = arith.constant 0 : index
    %c0_22 = arith.constant 0 : index
    %11 = vector.load %arg13[%c0_21, %c0_22] : memref<32x128xf32, #tpu.memory_space<vmem>>, vector<32x128xf32>
    %c0_23 = arith.constant 0 : index
    %c0_24 = arith.constant 0 : index
    %12 = vector.load %arg14[%c0_23, %c0_24] : memref<32x96xf32, #tpu.memory_space<vmem>>, vector<32x96xf32>
    %c0_25 = arith.constant 0 : index
    %c0_26 = arith.constant 0 : index
    %13 = vector.load %arg15[%c0_25, %c0_26] : memref<32x96xf32, #tpu.memory_space<vmem>>, vector<32x96xf32>
    %c0_27 = arith.constant 0 : index
    %c0_28 = arith.constant 0 : index
    %14 = vector.load %arg16[%c0_27, %c0_28] : memref<1x96xf32, #tpu.memory_space<vmem>>, vector<1x96xf32>
    %c0_29 = arith.constant 0 : index
    %c0_30 = arith.constant 0 : index
    %15 = vector.load %arg17[%c0_29, %c0_30] : memref<1x96xf32, #tpu.memory_space<vmem>>, vector<1x96xf32>
    %c0_31 = arith.constant 0 : index
    %c0_32 = arith.constant 0 : index
    %16 = vector.load %arg18[%c0_31, %c0_32] : memref<128x32xf32, #tpu.memory_space<vmem>>, vector<128x32xf32>
    %c0_33 = arith.constant 0 : index
    %c0_34 = arith.constant 0 : index
    %17 = vector.load %arg19[%c0_33, %c0_34] : memref<32x128xf32, #tpu.memory_space<vmem>>, vector<32x128xf32>
    %c0_35 = arith.constant 0 : index
    %c0_36 = arith.constant 0 : index
    %18 = vector.load %arg20[%c0_35, %c0_36] : memref<1x128xf32, #tpu.memory_space<vmem>>, vector<1x128xf32>
    %c0_37 = arith.constant 0 : index
    %c0_38 = arith.constant 0 : index
    %c0_39 = arith.constant 0 : index
    %19 = vector.load %arg0[%c0_37, %c0_38, %c0_39] : memref<2x8x64xf32, #tpu.memory_space<vmem>>, vector<2x8x64xf32>
    %c0_40 = arith.constant 0 : index
    %c0_41 = arith.constant 0 : index
    %20 = vector.load %arg1[%c0_40, %c0_41] : memref<2x6xi32, #tpu.memory_space<vmem>>, vector<2x6xi32>
    "tpu.trace_start"() <{level = 10 : i32, message = "btk,kn->btn"}> : () -> ()
    %cst = arith.constant dense<0.000000e+00> : vector<2x8x32xf32>
    %21 = tpu.matmul %19, %0, %cst {dimension_numbers = #tpu.dot_dimension_numbers<[2], [0], [0, 1], [1], [0, 0, 0, 1, 1, 1], [], []>} : vector<2x8x64xf32>, vector<64x32xf32>, vector<2x8x32xf32> -> vector<2x8x32xf32>
    "tpu.trace_stop"() : () -> ()
    %22 = vector.shape_cast %1 : vector<1x32xf32> to vector<1x1x32xf32>
    %23 = vector.broadcast %22 : vector<1x1x32xf32> to vector<2x8x32xf32>
    %24 = arith.addf %21, %23 : vector<2x8x32xf32>
    "tpu.trace_start"() <{level = 10 : i32, message = "btk,kn->btn"}> : () -> ()
    %cst_42 = arith.constant dense<0.000000e+00> : vector<2x8x96xf32>
    %25 = tpu.matmul %24, %2, %cst_42 {dimension_numbers = #tpu.dot_dimension_numbers<[2], [0], [0, 1], [1], [0, 0, 0, 1, 1, 1], [], []>} : vector<2x8x32xf32>, vector<32x96xf32>, vector<2x8x96xf32> -> vector<2x8x96xf32>
    "tpu.trace_stop"() : () -> ()
    %26 = vector.shape_cast %4 : vector<1x96xf32> to vector<1x1x96xf32>
    %27 = vector.broadcast %26 : vector<1x1x96xf32> to vector<2x8x96xf32>
    %28 = arith.addf %25, %27 : vector<2x8x96xf32>
    %29 = vector.shape_cast %5 : vector<1x96xf32> to vector<1x96xf32>
    %30 = vector.broadcast %29 : vector<1x96xf32> to vector<2x96xf32>
    %cst_43 = arith.constant 0.000000e+00 : f32
    %31 = vector.broadcast %cst_43 : f32 to vector<2x32xf32>
    %cst_44 = arith.constant dense<0.000000e+00> : vector<2x96xf32>
    %32 = tpu.matmul %31, %3, %cst_44 {dimension_numbers = #tpu.dot_dimension_numbers<[1], [0], [0], [1], [0, 0, 1, 1], [], []>} : vector<2x32xf32>, vector<32x96xf32>, vector<2x96xf32> -> vector<2x96xf32>
    %33 = arith.addf %32, %30 : vector<2x96xf32>
    %34 = vector.extract_strided_slice %28 {offsets = [0, 0, 0], sizes = [2, 1, 96], strides = [1, 1, 1]} : vector<2x8x96xf32> to vector<2x1x96xf32>
    %35 = vector.shape_cast %34 : vector<2x1x96xf32> to vector<2x96xf32>
    %36 = vector.extract_strided_slice %35 {offsets = [0, 0], sizes = [2, 32], strides = [1, 1]} : vector<2x96xf32> to vector<2x32xf32>
    %37 = vector.extract_strided_slice %33 {offsets = [0, 0], sizes = [2, 32], strides = [1, 1]} : vector<2x96xf32> to vector<2x32xf32>
    %38 = arith.addf %36, %37 : vector<2x32xf32>
    %39 = arith.negf %38 : vector<2x32xf32>
    %40 = math.exp %39 : vector<2x32xf32>
    %cst_45 = arith.constant 1.000000e+00 : f32
    %41 = vector.broadcast %cst_45 : f32 to vector<2x32xf32>
    %42 = arith.addf %41, %40 : vector<2x32xf32>
    %43 = arith.divf %41, %42 : vector<2x32xf32>
    %44 = vector.extract_strided_slice %35 {offsets = [0, 32], sizes = [2, 32], strides = [1, 1]} : vector<2x96xf32> to vector<2x32xf32>
    %45 = vector.extract_strided_slice %33 {offsets = [0, 32], sizes = [2, 32], strides = [1, 1]} : vector<2x96xf32> to vector<2x32xf32>
    %46 = arith.addf %44, %45 : vector<2x32xf32>
    %47 = arith.negf %46 : vector<2x32xf32>
    %48 = math.exp %47 : vector<2x32xf32>
    %cst_46 = arith.constant 1.000000e+00 : f32
    %49 = vector.broadcast %cst_46 : f32 to vector<2x32xf32>
    %50 = arith.addf %49, %48 : vector<2x32xf32>
    %51 = arith.divf %49, %50 : vector<2x32xf32>
    %52 = vector.extract_strided_slice %35 {offsets = [0, 64], sizes = [2, 32], strides = [1, 1]} : vector<2x96xf32> to vector<2x32xf32>
    %53 = vector.extract_strided_slice %33 {offsets = [0, 64], sizes = [2, 32], strides = [1, 1]} : vector<2x96xf32> to vector<2x32xf32>
    %54 = arith.mulf %43, %53 : vector<2x32xf32>
    %55 = arith.addf %52, %54 : vector<2x32xf32>
    %56 = math.tanh %55 : vector<2x32xf32>
    %cst_47 = arith.constant 1.000000e+00 : f32
    %57 = vector.broadcast %cst_47 : f32 to vector<2x32xf32>
    %58 = arith.subf %57, %51 : vector<2x32xf32>
    %59 = arith.mulf %58, %56 : vector<2x32xf32>
    %60 = arith.mulf %51, %31 : vector<2x32xf32>
    %61 = arith.addf %59, %60 : vector<2x32xf32>
    %cst_48 = arith.constant dense<0.000000e+00> : vector<2x96xf32>
    %62 = tpu.matmul %61, %3, %cst_48 {dimension_numbers = #tpu.dot_dimension_numbers<[1], [0], [0], [1], [0, 0, 1, 1], [], []>} : vector<2x32xf32>, vector<32x96xf32>, vector<2x96xf32> -> vector<2x96xf32>
    %63 = arith.addf %62, %30 : vector<2x96xf32>
    %64 = vector.extract_strided_slice %28 {offsets = [0, 1, 0], sizes = [2, 1, 96], strides = [1, 1, 1]} : vector<2x8x96xf32> to vector<2x1x96xf32>
    %65 = vector.shape_cast %64 : vector<2x1x96xf32> to vector<2x96xf32>
    %66 = vector.extract_strided_slice %65 {offsets = [0, 0], sizes = [2, 32], strides = [1, 1]} : vector<2x96xf32> to vector<2x32xf32>
    %67 = vector.extract_strided_slice %63 {offsets = [0, 0], sizes = [2, 32], strides = [1, 1]} : vector<2x96xf32> to vector<2x32xf32>
    %68 = arith.addf %66, %67 : vector<2x32xf32>
    %69 = arith.negf %68 : vector<2x32xf32>
    %70 = math.exp %69 : vector<2x32xf32>
    %cst_49 = arith.constant 1.000000e+00 : f32
    %71 = vector.broadcast %cst_49 : f32 to vector<2x32xf32>
    %72 = arith.addf %71, %70 : vector<2x32xf32>
    %73 = arith.divf %71, %72 : vector<2x32xf32>
    %74 = vector.extract_strided_slice %65 {offsets = [0, 32], sizes = [2, 32], strides = [1, 1]} : vector<2x96xf32> to vector<2x32xf32>
    %75 = vector.extract_strided_slice %63 {offsets = [0, 32], sizes = [2, 32], strides = [1, 1]} : vector<2x96xf32> to vector<2x32xf32>
    %76 = arith.addf %74, %75 : vector<2x32xf32>
    %77 = arith.negf %76 : vector<2x32xf32>
    %78 = math.exp %77 : vector<2x32xf32>
    %cst_50 = arith.constant 1.000000e+00 : f32
    %79 = vector.broadcast %cst_50 : f32 to vector<2x32xf32>
    %80 = arith.addf %79, %78 : vector<2x32xf32>
    %81 = arith.divf %79, %80 : vector<2x32xf32>
    %82 = vector.extract_strided_slice %65 {offsets = [0, 64], sizes = [2, 32], strides = [1, 1]} : vector<2x96xf32> to vector<2x32xf32>
    %83 = vector.extract_strided_slice %63 {offsets = [0, 64], sizes = [2, 32], strides = [1, 1]} : vector<2x96xf32> to vector<2x32xf32>
    %84 = arith.mulf %73, %83 : vector<2x32xf32>
    %85 = arith.addf %82, %84 : vector<2x32xf32>
    %86 = math.tanh %85 : vector<2x32xf32>
    %cst_51 = arith.constant 1.000000e+00 : f32
    %87 = vector.broadcast %cst_51 : f32 to vector<2x32xf32>
    %88 = arith.subf %87, %81 : vector<2x32xf32>
    %89 = arith.mulf %88, %86 : vector<2x32xf32>
    %90 = arith.mulf %81, %61 : vector<2x32xf32>
    %91 = arith.addf %89, %90 : vector<2x32xf32>
    %cst_52 = arith.constant dense<0.000000e+00> : vector<2x96xf32>
    %92 = tpu.matmul %91, %3, %cst_52 {dimension_numbers = #tpu.dot_dimension_numbers<[1], [0], [0], [1], [0, 0, 1, 1], [], []>} : vector<2x32xf32>, vector<32x96xf32>, vector<2x96xf32> -> vector<2x96xf32>
    %93 = arith.addf %92, %30 : vector<2x96xf32>
    %94 = vector.extract_strided_slice %28 {offsets = [0, 2, 0], sizes = [2, 1, 96], strides = [1, 1, 1]} : vector<2x8x96xf32> to vector<2x1x96xf32>
    %95 = vector.shape_cast %94 : vector<2x1x96xf32> to vector<2x96xf32>
    %96 = vector.extract_strided_slice %95 {offsets = [0, 0], sizes = [2, 32], strides = [1, 1]} : vector<2x96xf32> to vector<2x32xf32>
    %97 = vector.extract_strided_slice %93 {offsets = [0, 0], sizes = [2, 32], strides = [1, 1]} : vector<2x96xf32> to vector<2x32xf32>
    %98 = arith.addf %96, %97 : vector<2x32xf32>
    %99 = arith.negf %98 : vector<2x32xf32>
    %100 = math.exp %99 : vector<2x32xf32>
    %cst_53 = arith.constant 1.000000e+00 : f32
    %101 = vector.broadcast %cst_53 : f32 to vector<2x32xf32>
    %102 = arith.addf %101, %100 : vector<2x32xf32>
    %103 = arith.divf %101, %102 : vector<2x32xf32>
    %104 = vector.extract_strided_slice %95 {offsets = [0, 32], sizes = [2, 32], strides = [1, 1]} : vector<2x96xf32> to vector<2x32xf32>
    %105 = vector.extract_strided_slice %93 {offsets = [0, 32], sizes = [2, 32], strides = [1, 1]} : vector<2x96xf32> to vector<2x32xf32>
    %106 = arith.addf %104, %105 : vector<2x32xf32>
    %107 = arith.negf %106 : vector<2x32xf32>
    %108 = math.exp %107 : vector<2x32xf32>
    %cst_54 = arith.constant 1.000000e+00 : f32
    %109 = vector.broadcast %cst_54 : f32 to vector<2x32xf32>
    %110 = arith.addf %109, %108 : vector<2x32xf32>
    %111 = arith.divf %109, %110 : vector<2x32xf32>
    %112 = vector.extract_strided_slice %95 {offsets = [0, 64], sizes = [2, 32], strides = [1, 1]} : vector<2x96xf32> to vector<2x32xf32>
    %113 = vector.extract_strided_slice %93 {offsets = [0, 64], sizes = [2, 32], strides = [1, 1]} : vector<2x96xf32> to vector<2x32xf32>
    %114 = arith.mulf %103, %113 : vector<2x32xf32>
    %115 = arith.addf %112, %114 : vector<2x32xf32>
    %116 = math.tanh %115 : vector<2x32xf32>
    %cst_55 = arith.constant 1.000000e+00 : f32
    %117 = vector.broadcast %cst_55 : f32 to vector<2x32xf32>
    %118 = arith.subf %117, %111 : vector<2x32xf32>
    %119 = arith.mulf %118, %116 : vector<2x32xf32>
    %120 = arith.mulf %111, %91 : vector<2x32xf32>
    %121 = arith.addf %119, %120 : vector<2x32xf32>
    %cst_56 = arith.constant dense<0.000000e+00> : vector<2x96xf32>
    %122 = tpu.matmul %121, %3, %cst_56 {dimension_numbers = #tpu.dot_dimension_numbers<[1], [0], [0], [1], [0, 0, 1, 1], [], []>} : vector<2x32xf32>, vector<32x96xf32>, vector<2x96xf32> -> vector<2x96xf32>
    %123 = arith.addf %122, %30 : vector<2x96xf32>
    %124 = vector.extract_strided_slice %28 {offsets = [0, 3, 0], sizes = [2, 1, 96], strides = [1, 1, 1]} : vector<2x8x96xf32> to vector<2x1x96xf32>
    %125 = vector.shape_cast %124 : vector<2x1x96xf32> to vector<2x96xf32>
    %126 = vector.extract_strided_slice %125 {offsets = [0, 0], sizes = [2, 32], strides = [1, 1]} : vector<2x96xf32> to vector<2x32xf32>
    %127 = vector.extract_strided_slice %123 {offsets = [0, 0], sizes = [2, 32], strides = [1, 1]} : vector<2x96xf32> to vector<2x32xf32>
    %128 = arith.addf %126, %127 : vector<2x32xf32>
    %129 = arith.negf %128 : vector<2x32xf32>
    %130 = math.exp %129 : vector<2x32xf32>
    %cst_57 = arith.constant 1.000000e+00 : f32
    %131 = vector.broadcast %cst_57 : f32 to vector<2x32xf32>
    %132 = arith.addf %131, %130 : vector<2x32xf32>
    %133 = arith.divf %131, %132 : vector<2x32xf32>
    %134 = vector.extract_strided_slice %125 {offsets = [0, 32], sizes = [2, 32], strides = [1, 1]} : vector<2x96xf32> to vector<2x32xf32>
    %135 = vector.extract_strided_slice %123 {offsets = [0, 32], sizes = [2, 32], strides = [1, 1]} : vector<2x96xf32> to vector<2x32xf32>
    %136 = arith.addf %134, %135 : vector<2x32xf32>
    %137 = arith.negf %136 : vector<2x32xf32>
    %138 = math.exp %137 : vector<2x32xf32>
    %cst_58 = arith.constant 1.000000e+00 : f32
    %139 = vector.broadcast %cst_58 : f32 to vector<2x32xf32>
    %140 = arith.addf %139, %138 : vector<2x32xf32>
    %141 = arith.divf %139, %140 : vector<2x32xf32>
    %142 = vector.extract_strided_slice %125 {offsets = [0, 64], sizes = [2, 32], strides = [1, 1]} : vector<2x96xf32> to vector<2x32xf32>
    %143 = vector.extract_strided_slice %123 {offsets = [0, 64], sizes = [2, 32], strides = [1, 1]} : vector<2x96xf32> to vector<2x32xf32>
    %144 = arith.mulf %133, %143 : vector<2x32xf32>
    %145 = arith.addf %142, %144 : vector<2x32xf32>
    %146 = math.tanh %145 : vector<2x32xf32>
    %cst_59 = arith.constant 1.000000e+00 : f32
    %147 = vector.broadcast %cst_59 : f32 to vector<2x32xf32>
    %148 = arith.subf %147, %141 : vector<2x32xf32>
    %149 = arith.mulf %148, %146 : vector<2x32xf32>
    %150 = arith.mulf %141, %121 : vector<2x32xf32>
    %151 = arith.addf %149, %150 : vector<2x32xf32>
    %cst_60 = arith.constant dense<0.000000e+00> : vector<2x96xf32>
    %152 = tpu.matmul %151, %3, %cst_60 {dimension_numbers = #tpu.dot_dimension_numbers<[1], [0], [0], [1], [0, 0, 1, 1], [], []>} : vector<2x32xf32>, vector<32x96xf32>, vector<2x96xf32> -> vector<2x96xf32>
    %153 = arith.addf %152, %30 : vector<2x96xf32>
    %154 = vector.extract_strided_slice %28 {offsets = [0, 4, 0], sizes = [2, 1, 96], strides = [1, 1, 1]} : vector<2x8x96xf32> to vector<2x1x96xf32>
    %155 = vector.shape_cast %154 : vector<2x1x96xf32> to vector<2x96xf32>
    %156 = vector.extract_strided_slice %155 {offsets = [0, 0], sizes = [2, 32], strides = [1, 1]} : vector<2x96xf32> to vector<2x32xf32>
    %157 = vector.extract_strided_slice %153 {offsets = [0, 0], sizes = [2, 32], strides = [1, 1]} : vector<2x96xf32> to vector<2x32xf32>
    %158 = arith.addf %156, %157 : vector<2x32xf32>
    %159 = arith.negf %158 : vector<2x32xf32>
    %160 = math.exp %159 : vector<2x32xf32>
    %cst_61 = arith.constant 1.000000e+00 : f32
    %161 = vector.broadcast %cst_61 : f32 to vector<2x32xf32>
    %162 = arith.addf %161, %160 : vector<2x32xf32>
    %163 = arith.divf %161, %162 : vector<2x32xf32>
    %164 = vector.extract_strided_slice %155 {offsets = [0, 32], sizes = [2, 32], strides = [1, 1]} : vector<2x96xf32> to vector<2x32xf32>
    %165 = vector.extract_strided_slice %153 {offsets = [0, 32], sizes = [2, 32], strides = [1, 1]} : vector<2x96xf32> to vector<2x32xf32>
    %166 = arith.addf %164, %165 : vector<2x32xf32>
    %167 = arith.negf %166 : vector<2x32xf32>
    %168 = math.exp %167 : vector<2x32xf32>
    %cst_62 = arith.constant 1.000000e+00 : f32
    %169 = vector.broadcast %cst_62 : f32 to vector<2x32xf32>
    %170 = arith.addf %169, %168 : vector<2x32xf32>
    %171 = arith.divf %169, %170 : vector<2x32xf32>
    %172 = vector.extract_strided_slice %155 {offsets = [0, 64], sizes = [2, 32], strides = [1, 1]} : vector<2x96xf32> to vector<2x32xf32>
    %173 = vector.extract_strided_slice %153 {offsets = [0, 64], sizes = [2, 32], strides = [1, 1]} : vector<2x96xf32> to vector<2x32xf32>
    %174 = arith.mulf %163, %173 : vector<2x32xf32>
    %175 = arith.addf %172, %174 : vector<2x32xf32>
    %176 = math.tanh %175 : vector<2x32xf32>
    %cst_63 = arith.constant 1.000000e+00 : f32
    %177 = vector.broadcast %cst_63 : f32 to vector<2x32xf32>
    %178 = arith.subf %177, %171 : vector<2x32xf32>
    %179 = arith.mulf %178, %176 : vector<2x32xf32>
    %180 = arith.mulf %171, %151 : vector<2x32xf32>
    %181 = arith.addf %179, %180 : vector<2x32xf32>
    %cst_64 = arith.constant dense<0.000000e+00> : vector<2x96xf32>
    %182 = tpu.matmul %181, %3, %cst_64 {dimension_numbers = #tpu.dot_dimension_numbers<[1], [0], [0], [1], [0, 0, 1, 1], [], []>} : vector<2x32xf32>, vector<32x96xf32>, vector<2x96xf32> -> vector<2x96xf32>
    %183 = arith.addf %182, %30 : vector<2x96xf32>
    %184 = vector.extract_strided_slice %28 {offsets = [0, 5, 0], sizes = [2, 1, 96], strides = [1, 1, 1]} : vector<2x8x96xf32> to vector<2x1x96xf32>
    %185 = vector.shape_cast %184 : vector<2x1x96xf32> to vector<2x96xf32>
    %186 = vector.extract_strided_slice %185 {offsets = [0, 0], sizes = [2, 32], strides = [1, 1]} : vector<2x96xf32> to vector<2x32xf32>
    %187 = vector.extract_strided_slice %183 {offsets = [0, 0], sizes = [2, 32], strides = [1, 1]} : vector<2x96xf32> to vector<2x32xf32>
    %188 = arith.addf %186, %187 : vector<2x32xf32>
    %189 = arith.negf %188 : vector<2x32xf32>
    %190 = math.exp %189 : vector<2x32xf32>
    %cst_65 = arith.constant 1.000000e+00 : f32
    %191 = vector.broadcast %cst_65 : f32 to vector<2x32xf32>
    %192 = arith.addf %191, %190 : vector<2x32xf32>
    %193 = arith.divf %191, %192 : vector<2x32xf32>
    %194 = vector.extract_strided_slice %185 {offsets = [0, 32], sizes = [2, 32], strides = [1, 1]} : vector<2x96xf32> to vector<2x32xf32>
    %195 = vector.extract_strided_slice %183 {offsets = [0, 32], sizes = [2, 32], strides = [1, 1]} : vector<2x96xf32> to vector<2x32xf32>
    %196 = arith.addf %194, %195 : vector<2x32xf32>
    %197 = arith.negf %196 : vector<2x32xf32>
    %198 = math.exp %197 : vector<2x32xf32>
    %cst_66 = arith.constant 1.000000e+00 : f32
    %199 = vector.broadcast %cst_66 : f32 to vector<2x32xf32>
    %200 = arith.addf %199, %198 : vector<2x32xf32>
    %201 = arith.divf %199, %200 : vector<2x32xf32>
    %202 = vector.extract_strided_slice %185 {offsets = [0, 64], sizes = [2, 32], strides = [1, 1]} : vector<2x96xf32> to vector<2x32xf32>
    %203 = vector.extract_strided_slice %183 {offsets = [0, 64], sizes = [2, 32], strides = [1, 1]} : vector<2x96xf32> to vector<2x32xf32>
    %204 = arith.mulf %193, %203 : vector<2x32xf32>
    %205 = arith.addf %202, %204 : vector<2x32xf32>
    %206 = math.tanh %205 : vector<2x32xf32>
    %cst_67 = arith.constant 1.000000e+00 : f32
    %207 = vector.broadcast %cst_67 : f32 to vector<2x32xf32>
    %208 = arith.subf %207, %201 : vector<2x32xf32>
    %209 = arith.mulf %208, %206 : vector<2x32xf32>
    %210 = arith.mulf %201, %181 : vector<2x32xf32>
    %211 = arith.addf %209, %210 : vector<2x32xf32>
    %cst_68 = arith.constant dense<0.000000e+00> : vector<2x96xf32>
    %212 = tpu.matmul %211, %3, %cst_68 {dimension_numbers = #tpu.dot_dimension_numbers<[1], [0], [0], [1], [0, 0, 1, 1], [], []>} : vector<2x32xf32>, vector<32x96xf32>, vector<2x96xf32> -> vector<2x96xf32>
    %213 = arith.addf %212, %30 : vector<2x96xf32>
    %214 = vector.extract_strided_slice %28 {offsets = [0, 6, 0], sizes = [2, 1, 96], strides = [1, 1, 1]} : vector<2x8x96xf32> to vector<2x1x96xf32>
    %215 = vector.shape_cast %214 : vector<2x1x96xf32> to vector<2x96xf32>
    %216 = vector.extract_strided_slice %215 {offsets = [0, 0], sizes = [2, 32], strides = [1, 1]} : vector<2x96xf32> to vector<2x32xf32>
    %217 = vector.extract_strided_slice %213 {offsets = [0, 0], sizes = [2, 32], strides = [1, 1]} : vector<2x96xf32> to vector<2x32xf32>
    %218 = arith.addf %216, %217 : vector<2x32xf32>
    %219 = arith.negf %218 : vector<2x32xf32>
    %220 = math.exp %219 : vector<2x32xf32>
    %cst_69 = arith.constant 1.000000e+00 : f32
    %221 = vector.broadcast %cst_69 : f32 to vector<2x32xf32>
    %222 = arith.addf %221, %220 : vector<2x32xf32>
    %223 = arith.divf %221, %222 : vector<2x32xf32>
    %224 = vector.extract_strided_slice %215 {offsets = [0, 32], sizes = [2, 32], strides = [1, 1]} : vector<2x96xf32> to vector<2x32xf32>
    %225 = vector.extract_strided_slice %213 {offsets = [0, 32], sizes = [2, 32], strides = [1, 1]} : vector<2x96xf32> to vector<2x32xf32>
    %226 = arith.addf %224, %225 : vector<2x32xf32>
    %227 = arith.negf %226 : vector<2x32xf32>
    %228 = math.exp %227 : vector<2x32xf32>
    %cst_70 = arith.constant 1.000000e+00 : f32
    %229 = vector.broadcast %cst_70 : f32 to vector<2x32xf32>
    %230 = arith.addf %229, %228 : vector<2x32xf32>
    %231 = arith.divf %229, %230 : vector<2x32xf32>
    %232 = vector.extract_strided_slice %215 {offsets = [0, 64], sizes = [2, 32], strides = [1, 1]} : vector<2x96xf32> to vector<2x32xf32>
    %233 = vector.extract_strided_slice %213 {offsets = [0, 64], sizes = [2, 32], strides = [1, 1]} : vector<2x96xf32> to vector<2x32xf32>
    %234 = arith.mulf %223, %233 : vector<2x32xf32>
    %235 = arith.addf %232, %234 : vector<2x32xf32>
    %236 = math.tanh %235 : vector<2x32xf32>
    %cst_71 = arith.constant 1.000000e+00 : f32
    %237 = vector.broadcast %cst_71 : f32 to vector<2x32xf32>
    %238 = arith.subf %237, %231 : vector<2x32xf32>
    %239 = arith.mulf %238, %236 : vector<2x32xf32>
    %240 = arith.mulf %231, %211 : vector<2x32xf32>
    %241 = arith.addf %239, %240 : vector<2x32xf32>
    %cst_72 = arith.constant dense<0.000000e+00> : vector<2x96xf32>
    %242 = tpu.matmul %241, %3, %cst_72 {dimension_numbers = #tpu.dot_dimension_numbers<[1], [0], [0], [1], [0, 0, 1, 1], [], []>} : vector<2x32xf32>, vector<32x96xf32>, vector<2x96xf32> -> vector<2x96xf32>
    %243 = arith.addf %242, %30 : vector<2x96xf32>
    %244 = vector.extract_strided_slice %28 {offsets = [0, 7, 0], sizes = [2, 1, 96], strides = [1, 1, 1]} : vector<2x8x96xf32> to vector<2x1x96xf32>
    %245 = vector.shape_cast %244 : vector<2x1x96xf32> to vector<2x96xf32>
    %246 = vector.extract_strided_slice %245 {offsets = [0, 0], sizes = [2, 32], strides = [1, 1]} : vector<2x96xf32> to vector<2x32xf32>
    %247 = vector.extract_strided_slice %243 {offsets = [0, 0], sizes = [2, 32], strides = [1, 1]} : vector<2x96xf32> to vector<2x32xf32>
    %248 = arith.addf %246, %247 : vector<2x32xf32>
    %249 = arith.negf %248 : vector<2x32xf32>
    %250 = math.exp %249 : vector<2x32xf32>
    %cst_73 = arith.constant 1.000000e+00 : f32
    %251 = vector.broadcast %cst_73 : f32 to vector<2x32xf32>
    %252 = arith.addf %251, %250 : vector<2x32xf32>
    %253 = arith.divf %251, %252 : vector<2x32xf32>
    %254 = vector.extract_strided_slice %245 {offsets = [0, 32], sizes = [2, 32], strides = [1, 1]} : vector<2x96xf32> to vector<2x32xf32>
    %255 = vector.extract_strided_slice %243 {offsets = [0, 32], sizes = [2, 32], strides = [1, 1]} : vector<2x96xf32> to vector<2x32xf32>
    %256 = arith.addf %254, %255 : vector<2x32xf32>
    %257 = arith.negf %256 : vector<2x32xf32>
    %258 = math.exp %257 : vector<2x32xf32>
    %cst_74 = arith.constant 1.000000e+00 : f32
    %259 = vector.broadcast %cst_74 : f32 to vector<2x32xf32>
    %260 = arith.addf %259, %258 : vector<2x32xf32>
    %261 = arith.divf %259, %260 : vector<2x32xf32>
    %262 = vector.extract_strided_slice %245 {offsets = [0, 64], sizes = [2, 32], strides = [1, 1]} : vector<2x96xf32> to vector<2x32xf32>
    %263 = vector.extract_strided_slice %243 {offsets = [0, 64], sizes = [2, 32], strides = [1, 1]} : vector<2x96xf32> to vector<2x32xf32>
    %264 = arith.mulf %253, %263 : vector<2x32xf32>
    %265 = arith.addf %262, %264 : vector<2x32xf32>
    %266 = math.tanh %265 : vector<2x32xf32>
    %cst_75 = arith.constant 1.000000e+00 : f32
    %267 = vector.broadcast %cst_75 : f32 to vector<2x32xf32>
    %268 = arith.subf %267, %261 : vector<2x32xf32>
    %269 = arith.mulf %268, %266 : vector<2x32xf32>
    %270 = arith.mulf %261, %241 : vector<2x32xf32>
    %271 = arith.addf %269, %270 : vector<2x32xf32>
    %272 = vector.shape_cast %61 : vector<2x32xf32> to vector<2x1x32xf32>
    %273 = vector.shape_cast %91 : vector<2x32xf32> to vector<2x1x32xf32>
    %274 = vector.shape_cast %121 : vector<2x32xf32> to vector<2x1x32xf32>
    %275 = vector.shape_cast %151 : vector<2x32xf32> to vector<2x1x32xf32>
    %276 = vector.shape_cast %181 : vector<2x32xf32> to vector<2x1x32xf32>
    %277 = vector.shape_cast %211 : vector<2x32xf32> to vector<2x1x32xf32>
    %278 = vector.shape_cast %241 : vector<2x32xf32> to vector<2x1x32xf32>
    %279 = vector.shape_cast %271 : vector<2x32xf32> to vector<2x1x32xf32>
    %280 = tpu.concatenate %272, %273, %274, %275, %276, %277, %278, %279 in 1 : vector<2x1x32xf32>, vector<2x1x32xf32>, vector<2x1x32xf32>, vector<2x1x32xf32>, vector<2x1x32xf32>, vector<2x1x32xf32>, vector<2x1x32xf32>, vector<2x1x32xf32> -> vector<2x8x32xf32>
    "tpu.trace_start"() <{level = 10 : i32, message = "btk,kn->btn"}> : () -> ()
    %cst_76 = arith.constant dense<0.000000e+00> : vector<2x8x32xf32>
    %281 = tpu.matmul %280, %6, %cst_76 {dimension_numbers = #tpu.dot_dimension_numbers<[2], [0], [0, 1], [1], [0, 0, 0, 1, 1, 1], [], []>} : vector<2x8x32xf32>, vector<32x32xf32>, vector<2x8x32xf32> -> vector<2x8x32xf32>
    "tpu.trace_stop"() : () -> ()
    %282 = vector.shape_cast %7 : vector<1x32xf32> to vector<1x1x32xf32>
    %283 = vector.broadcast %282 : vector<1x1x32xf32> to vector<2x8x32xf32>
    %284 = arith.addf %281, %283 : vector<2x8x32xf32>
    %285 = vector.shape_cast %9 : vector<1x32xf32> to vector<1x1x32xf32>
    %286 = vector.broadcast %285 : vector<1x1x32xf32> to vector<2x8x32xf32>
    %287 = vector.shape_cast %10 : vector<1x32xf32> to vector<1x1x32xf32>
    %288 = vector.broadcast %287 : vector<1x1x32xf32> to vector<2x8x32xf32>
    %289 = vector.shape_cast %15 : vector<1x96xf32> to vector<1x96xf32>
    %290 = vector.broadcast %289 : vector<1x96xf32> to vector<2x96xf32>
    %291 = vector.shape_cast %18 : vector<1x128xf32> to vector<1x128xf32>
    %292 = vector.broadcast %291 : vector<1x128xf32> to vector<2x128xf32>
    %293 = vector.extract_strided_slice %20 {offsets = [0, 0], sizes = [2, 5], strides = [1, 1]} : vector<2x6xi32> to vector<2x5xi32>
    %294 = tpu.iota {dimensions = array<i32: 2>} : vector<2x5x128xi32>
    %295 = vector.shape_cast %293 : vector<2x5xi32> to vector<2x5x1xi32>
    %296 = vector.broadcast %295 : vector<2x5x1xi32> to vector<2x5x128xi32>
    %297 = arith.cmpi eq, %294, %296 : vector<2x5x128xi32>
    %cst_77 = arith.constant 1.000000e+00 : f32
    %cst_78 = arith.constant 0.000000e+00 : f32
    %298 = vector.broadcast %cst_77 : f32 to vector<2x5x128xf32>
    %299 = vector.broadcast %cst_78 : f32 to vector<2x5x128xf32>
    %300 = arith.select %297, %298, %299 : vector<2x5x128xi1>, vector<2x5x128xf32>
    "tpu.trace_start"() <{level = 10 : i32, message = "blv,vw->blw"}> : () -> ()
    %cst_79 = arith.constant dense<0.000000e+00> : vector<2x5x32xf32>
    %301 = tpu.matmul %300, %16, %cst_79 {dimension_numbers = #tpu.dot_dimension_numbers<[2], [0], [0, 1], [1], [0, 0, 0, 1, 1, 1], [], []>} : vector<2x5x128xf32>, vector<128x32xf32>, vector<2x5x32xf32> -> vector<2x5x32xf32>
    "tpu.trace_stop"() : () -> ()
    "tpu.trace_start"() <{level = 10 : i32, message = "blw,wk->blk"}> : () -> ()
    %cst_80 = arith.constant dense<0.000000e+00> : vector<2x5x96xf32>
    %302 = tpu.matmul %301, %12, %cst_80 {dimension_numbers = #tpu.dot_dimension_numbers<[2], [0], [0, 1], [1], [0, 0, 0, 1, 1, 1], [], []>} : vector<2x5x32xf32>, vector<32x96xf32>, vector<2x5x96xf32> -> vector<2x5x96xf32>
    "tpu.trace_stop"() : () -> ()
    %303 = vector.shape_cast %14 : vector<1x96xf32> to vector<1x1x96xf32>
    %304 = vector.broadcast %303 : vector<1x1x96xf32> to vector<2x5x96xf32>
    %305 = arith.addf %302, %304 : vector<2x5x96xf32>
    %306 = vector.extract_strided_slice %305 {offsets = [0, 0, 0], sizes = [2, 1, 96], strides = [1, 1, 1]} : vector<2x5x96xf32> to vector<2x1x96xf32>
    %307 = vector.shape_cast %306 : vector<2x1x96xf32> to vector<2x96xf32>
    %cst_81 = arith.constant dense<0.000000e+00> : vector<2x128xf32>
    %308 = tpu.matmul %271, %11, %cst_81 {dimension_numbers = #tpu.dot_dimension_numbers<[1], [0], [0], [1], [0, 0, 1, 1], [], []>} : vector<2x32xf32>, vector<32x128xf32>, vector<2x128xf32> -> vector<2x128xf32>
    %309 = vector.extract_strided_slice %308 {offsets = [0, 0], sizes = [2, 32], strides = [1, 1]} : vector<2x128xf32> to vector<2x32xf32>
    %310 = vector.extract_strided_slice %308 {offsets = [0, 32], sizes = [2, 96], strides = [1, 1]} : vector<2x128xf32> to vector<2x96xf32>
    %311 = arith.addf %310, %290 : vector<2x96xf32>
    %312 = vector.shape_cast %309 : vector<2x32xf32> to vector<2x1x32xf32>
    %313 = vector.broadcast %312 : vector<2x1x32xf32> to vector<2x8x32xf32>
    %314 = arith.addf %284, %313 : vector<2x8x32xf32>
    %315 = math.tanh %314 : vector<2x8x32xf32>
    "tpu.trace_start"() <{level = 10 : i32, message = "btk,kn->btn"}> : () -> ()
    %cst_82 = arith.constant dense<0.000000e+00> : vector<2x8x32xf32>
    %316 = tpu.matmul %315, %8, %cst_82 {dimension_numbers = #tpu.dot_dimension_numbers<[2], [0], [0, 1], [1], [0, 0, 0, 1, 1, 1], [], []>} : vector<2x8x32xf32>, vector<32x32xf32>, vector<2x8x32xf32> -> vector<2x8x32xf32>
    "tpu.trace_stop"() : () -> ()
    %317 = arith.addf %316, %286 : vector<2x8x32xf32>
    %318 = math.tanh %317 : vector<2x8x32xf32>
    %319 = arith.mulf %318, %288 : vector<2x8x32xf32>
    %cst_83 = arith.constant dense<0.000000e+00> : vector<2x8xf32>
    %320 = vector.multi_reduction <add>, %319, %cst_83 [2] : vector<2x8x32xf32> to vector<2x8xf32>
    %cst_84 = arith.constant dense<0xFF800000> : vector<2xf32>
    %321 = vector.multi_reduction <maximumf>, %320, %cst_84 [1] : vector<2x8xf32> to vector<2xf32>
    %322 = vector.shape_cast %321 : vector<2xf32> to vector<2x1xf32>
    %323 = vector.broadcast %322 : vector<2x1xf32> to vector<2x8xf32>
    %324 = arith.subf %320, %323 : vector<2x8xf32>
    %325 = math.exp %324 : vector<2x8xf32>
    %cst_85 = arith.constant dense<0.000000e+00> : vector<2xf32>
    %326 = vector.multi_reduction <add>, %325, %cst_85 [1] : vector<2x8xf32> to vector<2xf32>
    %327 = vector.shape_cast %326 : vector<2xf32> to vector<2x1xf32>
    %328 = vector.broadcast %327 : vector<2x1xf32> to vector<2x8xf32>
    %329 = arith.divf %325, %328 : vector<2x8xf32>
    %330 = vector.shape_cast %329 : vector<2x8xf32> to vector<2x8x1xf32>
    %331 = vector.broadcast %330 : vector<2x8x1xf32> to vector<2x8x32xf32>
    %332 = arith.mulf %331, %280 : vector<2x8x32xf32>
    %cst_86 = arith.constant dense<0.000000e+00> : vector<2x32xf32>
    %333 = vector.multi_reduction <add>, %332, %cst_86 [1] : vector<2x8x32xf32> to vector<2x32xf32>
    %cst_87 = arith.constant dense<0.000000e+00> : vector<2x96xf32>
    %334 = tpu.matmul %333, %13, %cst_87 {dimension_numbers = #tpu.dot_dimension_numbers<[1], [0], [0], [1], [0, 0, 1, 1], [], []>} : vector<2x32xf32>, vector<32x96xf32>, vector<2x96xf32> -> vector<2x96xf32>
    %335 = arith.addf %307, %334 : vector<2x96xf32>
    %336 = vector.extract_strided_slice %335 {offsets = [0, 0], sizes = [2, 32], strides = [1, 1]} : vector<2x96xf32> to vector<2x32xf32>
    %337 = vector.extract_strided_slice %311 {offsets = [0, 0], sizes = [2, 32], strides = [1, 1]} : vector<2x96xf32> to vector<2x32xf32>
    %338 = arith.addf %336, %337 : vector<2x32xf32>
    %339 = arith.negf %338 : vector<2x32xf32>
    %340 = math.exp %339 : vector<2x32xf32>
    %cst_88 = arith.constant 1.000000e+00 : f32
    %341 = vector.broadcast %cst_88 : f32 to vector<2x32xf32>
    %342 = arith.addf %341, %340 : vector<2x32xf32>
    %343 = arith.divf %341, %342 : vector<2x32xf32>
    %344 = vector.extract_strided_slice %335 {offsets = [0, 32], sizes = [2, 32], strides = [1, 1]} : vector<2x96xf32> to vector<2x32xf32>
    %345 = vector.extract_strided_slice %311 {offsets = [0, 32], sizes = [2, 32], strides = [1, 1]} : vector<2x96xf32> to vector<2x32xf32>
    %346 = arith.addf %344, %345 : vector<2x32xf32>
    %347 = arith.negf %346 : vector<2x32xf32>
    %348 = math.exp %347 : vector<2x32xf32>
    %cst_89 = arith.constant 1.000000e+00 : f32
    %349 = vector.broadcast %cst_89 : f32 to vector<2x32xf32>
    %350 = arith.addf %349, %348 : vector<2x32xf32>
    %351 = arith.divf %349, %350 : vector<2x32xf32>
    %352 = vector.extract_strided_slice %335 {offsets = [0, 64], sizes = [2, 32], strides = [1, 1]} : vector<2x96xf32> to vector<2x32xf32>
    %353 = vector.extract_strided_slice %311 {offsets = [0, 64], sizes = [2, 32], strides = [1, 1]} : vector<2x96xf32> to vector<2x32xf32>
    %354 = arith.mulf %343, %353 : vector<2x32xf32>
    %355 = arith.addf %352, %354 : vector<2x32xf32>
    %356 = math.tanh %355 : vector<2x32xf32>
    %cst_90 = arith.constant 1.000000e+00 : f32
    %357 = vector.broadcast %cst_90 : f32 to vector<2x32xf32>
    %358 = arith.subf %357, %351 : vector<2x32xf32>
    %359 = arith.mulf %358, %356 : vector<2x32xf32>
    %360 = arith.mulf %351, %271 : vector<2x32xf32>
    %361 = arith.addf %359, %360 : vector<2x32xf32>
    %cst_91 = arith.constant dense<0.000000e+00> : vector<2x128xf32>
    %362 = tpu.matmul %361, %17, %cst_91 {dimension_numbers = #tpu.dot_dimension_numbers<[1], [0], [0], [1], [0, 0, 1, 1], [], []>} : vector<2x32xf32>, vector<32x128xf32>, vector<2x128xf32> -> vector<2x128xf32>
    %363 = arith.addf %362, %292 : vector<2x128xf32>
    %cst_92 = arith.constant dense<0xFF800000> : vector<2xf32>
    %364 = vector.multi_reduction <maximumf>, %363, %cst_92 [1] : vector<2x128xf32> to vector<2xf32>
    %365 = vector.shape_cast %364 : vector<2xf32> to vector<2x1xf32>
    %366 = vector.broadcast %365 : vector<2x1xf32> to vector<2x128xf32>
    %367 = arith.subf %363, %366 : vector<2x128xf32>
    %368 = math.exp %367 : vector<2x128xf32>
    %cst_93 = arith.constant dense<0.000000e+00> : vector<2xf32>
    %369 = vector.multi_reduction <add>, %368, %cst_93 [1] : vector<2x128xf32> to vector<2xf32>
    %370 = vector.shape_cast %369 : vector<2xf32> to vector<2x1xf32>
    %371 = math.log %370 : vector<2x1xf32>
    %372 = vector.broadcast %371 : vector<2x1xf32> to vector<2x128xf32>
    %373 = arith.subf %367, %372 : vector<2x128xf32>
    %374 = tpu.iota {dimensions = array<i32: 1>} : vector<2x128xi32>
    %375 = vector.broadcast %365 : vector<2x1xf32> to vector<2x128xf32>
    %376 = arith.cmpf oge, %363, %375 : vector<2x128xf32>
    %c128_i32 = arith.constant 128 : i32
    %377 = vector.broadcast %c128_i32 : i32 to vector<2x128xi32>
    %378 = arith.select %376, %374, %377 : vector<2x128xi1>, vector<2x128xi32>
    %cst_94 = arith.constant dense<2147483647> : vector<2xi32>
    %379 = vector.multi_reduction <minsi>, %378, %cst_94 [1] : vector<2x128xi32> to vector<2xi32>
    %380 = vector.shape_cast %379 : vector<2xi32> to vector<2x1xi32>
    %381 = vector.extract_strided_slice %305 {offsets = [0, 1, 0], sizes = [2, 1, 96], strides = [1, 1, 1]} : vector<2x5x96xf32> to vector<2x1x96xf32>
    %382 = vector.shape_cast %381 : vector<2x1x96xf32> to vector<2x96xf32>
    %cst_95 = arith.constant dense<0.000000e+00> : vector<2x128xf32>
    %383 = tpu.matmul %361, %11, %cst_95 {dimension_numbers = #tpu.dot_dimension_numbers<[1], [0], [0], [1], [0, 0, 1, 1], [], []>} : vector<2x32xf32>, vector<32x128xf32>, vector<2x128xf32> -> vector<2x128xf32>
    %384 = vector.extract_strided_slice %383 {offsets = [0, 0], sizes = [2, 32], strides = [1, 1]} : vector<2x128xf32> to vector<2x32xf32>
    %385 = vector.extract_strided_slice %383 {offsets = [0, 32], sizes = [2, 96], strides = [1, 1]} : vector<2x128xf32> to vector<2x96xf32>
    %386 = arith.addf %385, %290 : vector<2x96xf32>
    %387 = vector.shape_cast %384 : vector<2x32xf32> to vector<2x1x32xf32>
    %388 = vector.broadcast %387 : vector<2x1x32xf32> to vector<2x8x32xf32>
    %389 = arith.addf %284, %388 : vector<2x8x32xf32>
    %390 = math.tanh %389 : vector<2x8x32xf32>
    "tpu.trace_start"() <{level = 10 : i32, message = "btk,kn->btn"}> : () -> ()
    %cst_96 = arith.constant dense<0.000000e+00> : vector<2x8x32xf32>
    %391 = tpu.matmul %390, %8, %cst_96 {dimension_numbers = #tpu.dot_dimension_numbers<[2], [0], [0, 1], [1], [0, 0, 0, 1, 1, 1], [], []>} : vector<2x8x32xf32>, vector<32x32xf32>, vector<2x8x32xf32> -> vector<2x8x32xf32>
    "tpu.trace_stop"() : () -> ()
    %392 = arith.addf %391, %286 : vector<2x8x32xf32>
    %393 = math.tanh %392 : vector<2x8x32xf32>
    %394 = arith.mulf %393, %288 : vector<2x8x32xf32>
    %cst_97 = arith.constant dense<0.000000e+00> : vector<2x8xf32>
    %395 = vector.multi_reduction <add>, %394, %cst_97 [2] : vector<2x8x32xf32> to vector<2x8xf32>
    %cst_98 = arith.constant dense<0xFF800000> : vector<2xf32>
    %396 = vector.multi_reduction <maximumf>, %395, %cst_98 [1] : vector<2x8xf32> to vector<2xf32>
    %397 = vector.shape_cast %396 : vector<2xf32> to vector<2x1xf32>
    %398 = vector.broadcast %397 : vector<2x1xf32> to vector<2x8xf32>
    %399 = arith.subf %395, %398 : vector<2x8xf32>
    %400 = math.exp %399 : vector<2x8xf32>
    %cst_99 = arith.constant dense<0.000000e+00> : vector<2xf32>
    %401 = vector.multi_reduction <add>, %400, %cst_99 [1] : vector<2x8xf32> to vector<2xf32>
    %402 = vector.shape_cast %401 : vector<2xf32> to vector<2x1xf32>
    %403 = vector.broadcast %402 : vector<2x1xf32> to vector<2x8xf32>
    %404 = arith.divf %400, %403 : vector<2x8xf32>
    %405 = vector.shape_cast %404 : vector<2x8xf32> to vector<2x8x1xf32>
    %406 = vector.broadcast %405 : vector<2x8x1xf32> to vector<2x8x32xf32>
    %407 = arith.mulf %406, %280 : vector<2x8x32xf32>
    %cst_100 = arith.constant dense<0.000000e+00> : vector<2x32xf32>
    %408 = vector.multi_reduction <add>, %407, %cst_100 [1] : vector<2x8x32xf32> to vector<2x32xf32>
    %cst_101 = arith.constant dense<0.000000e+00> : vector<2x96xf32>
    %409 = tpu.matmul %408, %13, %cst_101 {dimension_numbers = #tpu.dot_dimension_numbers<[1], [0], [0], [1], [0, 0, 1, 1], [], []>} : vector<2x32xf32>, vector<32x96xf32>, vector<2x96xf32> -> vector<2x96xf32>
    %410 = arith.addf %382, %409 : vector<2x96xf32>
    %411 = vector.extract_strided_slice %410 {offsets = [0, 0], sizes = [2, 32], strides = [1, 1]} : vector<2x96xf32> to vector<2x32xf32>
    %412 = vector.extract_strided_slice %386 {offsets = [0, 0], sizes = [2, 32], strides = [1, 1]} : vector<2x96xf32> to vector<2x32xf32>
    %413 = arith.addf %411, %412 : vector<2x32xf32>
    %414 = arith.negf %413 : vector<2x32xf32>
    %415 = math.exp %414 : vector<2x32xf32>
    %cst_102 = arith.constant 1.000000e+00 : f32
    %416 = vector.broadcast %cst_102 : f32 to vector<2x32xf32>
    %417 = arith.addf %416, %415 : vector<2x32xf32>
    %418 = arith.divf %416, %417 : vector<2x32xf32>
    %419 = vector.extract_strided_slice %410 {offsets = [0, 32], sizes = [2, 32], strides = [1, 1]} : vector<2x96xf32> to vector<2x32xf32>
    %420 = vector.extract_strided_slice %386 {offsets = [0, 32], sizes = [2, 32], strides = [1, 1]} : vector<2x96xf32> to vector<2x32xf32>
    %421 = arith.addf %419, %420 : vector<2x32xf32>
    %422 = arith.negf %421 : vector<2x32xf32>
    %423 = math.exp %422 : vector<2x32xf32>
    %cst_103 = arith.constant 1.000000e+00 : f32
    %424 = vector.broadcast %cst_103 : f32 to vector<2x32xf32>
    %425 = arith.addf %424, %423 : vector<2x32xf32>
    %426 = arith.divf %424, %425 : vector<2x32xf32>
    %427 = vector.extract_strided_slice %410 {offsets = [0, 64], sizes = [2, 32], strides = [1, 1]} : vector<2x96xf32> to vector<2x32xf32>
    %428 = vector.extract_strided_slice %386 {offsets = [0, 64], sizes = [2, 32], strides = [1, 1]} : vector<2x96xf32> to vector<2x32xf32>
    %429 = arith.mulf %418, %428 : vector<2x32xf32>
    %430 = arith.addf %427, %429 : vector<2x32xf32>
    %431 = math.tanh %430 : vector<2x32xf32>
    %cst_104 = arith.constant 1.000000e+00 : f32
    %432 = vector.broadcast %cst_104 : f32 to vector<2x32xf32>
    %433 = arith.subf %432, %426 : vector<2x32xf32>
    %434 = arith.mulf %433, %431 : vector<2x32xf32>
    %435 = arith.mulf %426, %361 : vector<2x32xf32>
    %436 = arith.addf %434, %435 : vector<2x32xf32>
    %cst_105 = arith.constant dense<0.000000e+00> : vector<2x128xf32>
    %437 = tpu.matmul %436, %17, %cst_105 {dimension_numbers = #tpu.dot_dimension_numbers<[1], [0], [0], [1], [0, 0, 1, 1], [], []>} : vector<2x32xf32>, vector<32x128xf32>, vector<2x128xf32> -> vector<2x128xf32>
    %438 = arith.addf %437, %292 : vector<2x128xf32>
    %cst_106 = arith.constant dense<0xFF800000> : vector<2xf32>
    %439 = vector.multi_reduction <maximumf>, %438, %cst_106 [1] : vector<2x128xf32> to vector<2xf32>
    %440 = vector.shape_cast %439 : vector<2xf32> to vector<2x1xf32>
    %441 = vector.broadcast %440 : vector<2x1xf32> to vector<2x128xf32>
    %442 = arith.subf %438, %441 : vector<2x128xf32>
    %443 = math.exp %442 : vector<2x128xf32>
    %cst_107 = arith.constant dense<0.000000e+00> : vector<2xf32>
    %444 = vector.multi_reduction <add>, %443, %cst_107 [1] : vector<2x128xf32> to vector<2xf32>
    %445 = vector.shape_cast %444 : vector<2xf32> to vector<2x1xf32>
    %446 = math.log %445 : vector<2x1xf32>
    %447 = vector.broadcast %446 : vector<2x1xf32> to vector<2x128xf32>
    %448 = arith.subf %442, %447 : vector<2x128xf32>
    %449 = tpu.iota {dimensions = array<i32: 1>} : vector<2x128xi32>
    %450 = vector.broadcast %440 : vector<2x1xf32> to vector<2x128xf32>
    %451 = arith.cmpf oge, %438, %450 : vector<2x128xf32>
    %c128_i32_108 = arith.constant 128 : i32
    %452 = vector.broadcast %c128_i32_108 : i32 to vector<2x128xi32>
    %453 = arith.select %451, %449, %452 : vector<2x128xi1>, vector<2x128xi32>
    %cst_109 = arith.constant dense<2147483647> : vector<2xi32>
    %454 = vector.multi_reduction <minsi>, %453, %cst_109 [1] : vector<2x128xi32> to vector<2xi32>
    %455 = vector.shape_cast %454 : vector<2xi32> to vector<2x1xi32>
    %456 = vector.extract_strided_slice %305 {offsets = [0, 2, 0], sizes = [2, 1, 96], strides = [1, 1, 1]} : vector<2x5x96xf32> to vector<2x1x96xf32>
    %457 = vector.shape_cast %456 : vector<2x1x96xf32> to vector<2x96xf32>
    %cst_110 = arith.constant dense<0.000000e+00> : vector<2x128xf32>
    %458 = tpu.matmul %436, %11, %cst_110 {dimension_numbers = #tpu.dot_dimension_numbers<[1], [0], [0], [1], [0, 0, 1, 1], [], []>} : vector<2x32xf32>, vector<32x128xf32>, vector<2x128xf32> -> vector<2x128xf32>
    %459 = vector.extract_strided_slice %458 {offsets = [0, 0], sizes = [2, 32], strides = [1, 1]} : vector<2x128xf32> to vector<2x32xf32>
    %460 = vector.extract_strided_slice %458 {offsets = [0, 32], sizes = [2, 96], strides = [1, 1]} : vector<2x128xf32> to vector<2x96xf32>
    %461 = arith.addf %460, %290 : vector<2x96xf32>
    %462 = vector.shape_cast %459 : vector<2x32xf32> to vector<2x1x32xf32>
    %463 = vector.broadcast %462 : vector<2x1x32xf32> to vector<2x8x32xf32>
    %464 = arith.addf %284, %463 : vector<2x8x32xf32>
    %465 = math.tanh %464 : vector<2x8x32xf32>
    "tpu.trace_start"() <{level = 10 : i32, message = "btk,kn->btn"}> : () -> ()
    %cst_111 = arith.constant dense<0.000000e+00> : vector<2x8x32xf32>
    %466 = tpu.matmul %465, %8, %cst_111 {dimension_numbers = #tpu.dot_dimension_numbers<[2], [0], [0, 1], [1], [0, 0, 0, 1, 1, 1], [], []>} : vector<2x8x32xf32>, vector<32x32xf32>, vector<2x8x32xf32> -> vector<2x8x32xf32>
    "tpu.trace_stop"() : () -> ()
    %467 = arith.addf %466, %286 : vector<2x8x32xf32>
    %468 = math.tanh %467 : vector<2x8x32xf32>
    %469 = arith.mulf %468, %288 : vector<2x8x32xf32>
    %cst_112 = arith.constant dense<0.000000e+00> : vector<2x8xf32>
    %470 = vector.multi_reduction <add>, %469, %cst_112 [2] : vector<2x8x32xf32> to vector<2x8xf32>
    %cst_113 = arith.constant dense<0xFF800000> : vector<2xf32>
    %471 = vector.multi_reduction <maximumf>, %470, %cst_113 [1] : vector<2x8xf32> to vector<2xf32>
    %472 = vector.shape_cast %471 : vector<2xf32> to vector<2x1xf32>
    %473 = vector.broadcast %472 : vector<2x1xf32> to vector<2x8xf32>
    %474 = arith.subf %470, %473 : vector<2x8xf32>
    %475 = math.exp %474 : vector<2x8xf32>
    %cst_114 = arith.constant dense<0.000000e+00> : vector<2xf32>
    %476 = vector.multi_reduction <add>, %475, %cst_114 [1] : vector<2x8xf32> to vector<2xf32>
    %477 = vector.shape_cast %476 : vector<2xf32> to vector<2x1xf32>
    %478 = vector.broadcast %477 : vector<2x1xf32> to vector<2x8xf32>
    %479 = arith.divf %475, %478 : vector<2x8xf32>
    %480 = vector.shape_cast %479 : vector<2x8xf32> to vector<2x8x1xf32>
    %481 = vector.broadcast %480 : vector<2x8x1xf32> to vector<2x8x32xf32>
    %482 = arith.mulf %481, %280 : vector<2x8x32xf32>
    %cst_115 = arith.constant dense<0.000000e+00> : vector<2x32xf32>
    %483 = vector.multi_reduction <add>, %482, %cst_115 [1] : vector<2x8x32xf32> to vector<2x32xf32>
    %cst_116 = arith.constant dense<0.000000e+00> : vector<2x96xf32>
    %484 = tpu.matmul %483, %13, %cst_116 {dimension_numbers = #tpu.dot_dimension_numbers<[1], [0], [0], [1], [0, 0, 1, 1], [], []>} : vector<2x32xf32>, vector<32x96xf32>, vector<2x96xf32> -> vector<2x96xf32>
    %485 = arith.addf %457, %484 : vector<2x96xf32>
    %486 = vector.extract_strided_slice %485 {offsets = [0, 0], sizes = [2, 32], strides = [1, 1]} : vector<2x96xf32> to vector<2x32xf32>
    %487 = vector.extract_strided_slice %461 {offsets = [0, 0], sizes = [2, 32], strides = [1, 1]} : vector<2x96xf32> to vector<2x32xf32>
    %488 = arith.addf %486, %487 : vector<2x32xf32>
    %489 = arith.negf %488 : vector<2x32xf32>
    %490 = math.exp %489 : vector<2x32xf32>
    %cst_117 = arith.constant 1.000000e+00 : f32
    %491 = vector.broadcast %cst_117 : f32 to vector<2x32xf32>
    %492 = arith.addf %491, %490 : vector<2x32xf32>
    %493 = arith.divf %491, %492 : vector<2x32xf32>
    %494 = vector.extract_strided_slice %485 {offsets = [0, 32], sizes = [2, 32], strides = [1, 1]} : vector<2x96xf32> to vector<2x32xf32>
    %495 = vector.extract_strided_slice %461 {offsets = [0, 32], sizes = [2, 32], strides = [1, 1]} : vector<2x96xf32> to vector<2x32xf32>
    %496 = arith.addf %494, %495 : vector<2x32xf32>
    %497 = arith.negf %496 : vector<2x32xf32>
    %498 = math.exp %497 : vector<2x32xf32>
    %cst_118 = arith.constant 1.000000e+00 : f32
    %499 = vector.broadcast %cst_118 : f32 to vector<2x32xf32>
    %500 = arith.addf %499, %498 : vector<2x32xf32>
    %501 = arith.divf %499, %500 : vector<2x32xf32>
    %502 = vector.extract_strided_slice %485 {offsets = [0, 64], sizes = [2, 32], strides = [1, 1]} : vector<2x96xf32> to vector<2x32xf32>
    %503 = vector.extract_strided_slice %461 {offsets = [0, 64], sizes = [2, 32], strides = [1, 1]} : vector<2x96xf32> to vector<2x32xf32>
    %504 = arith.mulf %493, %503 : vector<2x32xf32>
    %505 = arith.addf %502, %504 : vector<2x32xf32>
    %506 = math.tanh %505 : vector<2x32xf32>
    %cst_119 = arith.constant 1.000000e+00 : f32
    %507 = vector.broadcast %cst_119 : f32 to vector<2x32xf32>
    %508 = arith.subf %507, %501 : vector<2x32xf32>
    %509 = arith.mulf %508, %506 : vector<2x32xf32>
    %510 = arith.mulf %501, %436 : vector<2x32xf32>
    %511 = arith.addf %509, %510 : vector<2x32xf32>
    %cst_120 = arith.constant dense<0.000000e+00> : vector<2x128xf32>
    %512 = tpu.matmul %511, %17, %cst_120 {dimension_numbers = #tpu.dot_dimension_numbers<[1], [0], [0], [1], [0, 0, 1, 1], [], []>} : vector<2x32xf32>, vector<32x128xf32>, vector<2x128xf32> -> vector<2x128xf32>
    %513 = arith.addf %512, %292 : vector<2x128xf32>
    %cst_121 = arith.constant dense<0xFF800000> : vector<2xf32>
    %514 = vector.multi_reduction <maximumf>, %513, %cst_121 [1] : vector<2x128xf32> to vector<2xf32>
    %515 = vector.shape_cast %514 : vector<2xf32> to vector<2x1xf32>
    %516 = vector.broadcast %515 : vector<2x1xf32> to vector<2x128xf32>
    %517 = arith.subf %513, %516 : vector<2x128xf32>
    %518 = math.exp %517 : vector<2x128xf32>
    %cst_122 = arith.constant dense<0.000000e+00> : vector<2xf32>
    %519 = vector.multi_reduction <add>, %518, %cst_122 [1] : vector<2x128xf32> to vector<2xf32>
    %520 = vector.shape_cast %519 : vector<2xf32> to vector<2x1xf32>
    %521 = math.log %520 : vector<2x1xf32>
    %522 = vector.broadcast %521 : vector<2x1xf32> to vector<2x128xf32>
    %523 = arith.subf %517, %522 : vector<2x128xf32>
    %524 = tpu.iota {dimensions = array<i32: 1>} : vector<2x128xi32>
    %525 = vector.broadcast %515 : vector<2x1xf32> to vector<2x128xf32>
    %526 = arith.cmpf oge, %513, %525 : vector<2x128xf32>
    %c128_i32_123 = arith.constant 128 : i32
    %527 = vector.broadcast %c128_i32_123 : i32 to vector<2x128xi32>
    %528 = arith.select %526, %524, %527 : vector<2x128xi1>, vector<2x128xi32>
    %cst_124 = arith.constant dense<2147483647> : vector<2xi32>
    %529 = vector.multi_reduction <minsi>, %528, %cst_124 [1] : vector<2x128xi32> to vector<2xi32>
    %530 = vector.shape_cast %529 : vector<2xi32> to vector<2x1xi32>
    %531 = vector.extract_strided_slice %305 {offsets = [0, 3, 0], sizes = [2, 1, 96], strides = [1, 1, 1]} : vector<2x5x96xf32> to vector<2x1x96xf32>
    %532 = vector.shape_cast %531 : vector<2x1x96xf32> to vector<2x96xf32>
    %cst_125 = arith.constant dense<0.000000e+00> : vector<2x128xf32>
    %533 = tpu.matmul %511, %11, %cst_125 {dimension_numbers = #tpu.dot_dimension_numbers<[1], [0], [0], [1], [0, 0, 1, 1], [], []>} : vector<2x32xf32>, vector<32x128xf32>, vector<2x128xf32> -> vector<2x128xf32>
    %534 = vector.extract_strided_slice %533 {offsets = [0, 0], sizes = [2, 32], strides = [1, 1]} : vector<2x128xf32> to vector<2x32xf32>
    %535 = vector.extract_strided_slice %533 {offsets = [0, 32], sizes = [2, 96], strides = [1, 1]} : vector<2x128xf32> to vector<2x96xf32>
    %536 = arith.addf %535, %290 : vector<2x96xf32>
    %537 = vector.shape_cast %534 : vector<2x32xf32> to vector<2x1x32xf32>
    %538 = vector.broadcast %537 : vector<2x1x32xf32> to vector<2x8x32xf32>
    %539 = arith.addf %284, %538 : vector<2x8x32xf32>
    %540 = math.tanh %539 : vector<2x8x32xf32>
    "tpu.trace_start"() <{level = 10 : i32, message = "btk,kn->btn"}> : () -> ()
    %cst_126 = arith.constant dense<0.000000e+00> : vector<2x8x32xf32>
    %541 = tpu.matmul %540, %8, %cst_126 {dimension_numbers = #tpu.dot_dimension_numbers<[2], [0], [0, 1], [1], [0, 0, 0, 1, 1, 1], [], []>} : vector<2x8x32xf32>, vector<32x32xf32>, vector<2x8x32xf32> -> vector<2x8x32xf32>
    "tpu.trace_stop"() : () -> ()
    %542 = arith.addf %541, %286 : vector<2x8x32xf32>
    %543 = math.tanh %542 : vector<2x8x32xf32>
    %544 = arith.mulf %543, %288 : vector<2x8x32xf32>
    %cst_127 = arith.constant dense<0.000000e+00> : vector<2x8xf32>
    %545 = vector.multi_reduction <add>, %544, %cst_127 [2] : vector<2x8x32xf32> to vector<2x8xf32>
    %cst_128 = arith.constant dense<0xFF800000> : vector<2xf32>
    %546 = vector.multi_reduction <maximumf>, %545, %cst_128 [1] : vector<2x8xf32> to vector<2xf32>
    %547 = vector.shape_cast %546 : vector<2xf32> to vector<2x1xf32>
    %548 = vector.broadcast %547 : vector<2x1xf32> to vector<2x8xf32>
    %549 = arith.subf %545, %548 : vector<2x8xf32>
    %550 = math.exp %549 : vector<2x8xf32>
    %cst_129 = arith.constant dense<0.000000e+00> : vector<2xf32>
    %551 = vector.multi_reduction <add>, %550, %cst_129 [1] : vector<2x8xf32> to vector<2xf32>
    %552 = vector.shape_cast %551 : vector<2xf32> to vector<2x1xf32>
    %553 = vector.broadcast %552 : vector<2x1xf32> to vector<2x8xf32>
    %554 = arith.divf %550, %553 : vector<2x8xf32>
    %555 = vector.shape_cast %554 : vector<2x8xf32> to vector<2x8x1xf32>
    %556 = vector.broadcast %555 : vector<2x8x1xf32> to vector<2x8x32xf32>
    %557 = arith.mulf %556, %280 : vector<2x8x32xf32>
    %cst_130 = arith.constant dense<0.000000e+00> : vector<2x32xf32>
    %558 = vector.multi_reduction <add>, %557, %cst_130 [1] : vector<2x8x32xf32> to vector<2x32xf32>
    %cst_131 = arith.constant dense<0.000000e+00> : vector<2x96xf32>
    %559 = tpu.matmul %558, %13, %cst_131 {dimension_numbers = #tpu.dot_dimension_numbers<[1], [0], [0], [1], [0, 0, 1, 1], [], []>} : vector<2x32xf32>, vector<32x96xf32>, vector<2x96xf32> -> vector<2x96xf32>
    %560 = arith.addf %532, %559 : vector<2x96xf32>
    %561 = vector.extract_strided_slice %560 {offsets = [0, 0], sizes = [2, 32], strides = [1, 1]} : vector<2x96xf32> to vector<2x32xf32>
    %562 = vector.extract_strided_slice %536 {offsets = [0, 0], sizes = [2, 32], strides = [1, 1]} : vector<2x96xf32> to vector<2x32xf32>
    %563 = arith.addf %561, %562 : vector<2x32xf32>
    %564 = arith.negf %563 : vector<2x32xf32>
    %565 = math.exp %564 : vector<2x32xf32>
    %cst_132 = arith.constant 1.000000e+00 : f32
    %566 = vector.broadcast %cst_132 : f32 to vector<2x32xf32>
    %567 = arith.addf %566, %565 : vector<2x32xf32>
    %568 = arith.divf %566, %567 : vector<2x32xf32>
    %569 = vector.extract_strided_slice %560 {offsets = [0, 32], sizes = [2, 32], strides = [1, 1]} : vector<2x96xf32> to vector<2x32xf32>
    %570 = vector.extract_strided_slice %536 {offsets = [0, 32], sizes = [2, 32], strides = [1, 1]} : vector<2x96xf32> to vector<2x32xf32>
    %571 = arith.addf %569, %570 : vector<2x32xf32>
    %572 = arith.negf %571 : vector<2x32xf32>
    %573 = math.exp %572 : vector<2x32xf32>
    %cst_133 = arith.constant 1.000000e+00 : f32
    %574 = vector.broadcast %cst_133 : f32 to vector<2x32xf32>
    %575 = arith.addf %574, %573 : vector<2x32xf32>
    %576 = arith.divf %574, %575 : vector<2x32xf32>
    %577 = vector.extract_strided_slice %560 {offsets = [0, 64], sizes = [2, 32], strides = [1, 1]} : vector<2x96xf32> to vector<2x32xf32>
    %578 = vector.extract_strided_slice %536 {offsets = [0, 64], sizes = [2, 32], strides = [1, 1]} : vector<2x96xf32> to vector<2x32xf32>
    %579 = arith.mulf %568, %578 : vector<2x32xf32>
    %580 = arith.addf %577, %579 : vector<2x32xf32>
    %581 = math.tanh %580 : vector<2x32xf32>
    %cst_134 = arith.constant 1.000000e+00 : f32
    %582 = vector.broadcast %cst_134 : f32 to vector<2x32xf32>
    %583 = arith.subf %582, %576 : vector<2x32xf32>
    %584 = arith.mulf %583, %581 : vector<2x32xf32>
    %585 = arith.mulf %576, %511 : vector<2x32xf32>
    %586 = arith.addf %584, %585 : vector<2x32xf32>
    %cst_135 = arith.constant dense<0.000000e+00> : vector<2x128xf32>
    %587 = tpu.matmul %586, %17, %cst_135 {dimension_numbers = #tpu.dot_dimension_numbers<[1], [0], [0], [1], [0, 0, 1, 1], [], []>} : vector<2x32xf32>, vector<32x128xf32>, vector<2x128xf32> -> vector<2x128xf32>
    %588 = arith.addf %587, %292 : vector<2x128xf32>
    %cst_136 = arith.constant dense<0xFF800000> : vector<2xf32>
    %589 = vector.multi_reduction <maximumf>, %588, %cst_136 [1] : vector<2x128xf32> to vector<2xf32>
    %590 = vector.shape_cast %589 : vector<2xf32> to vector<2x1xf32>
    %591 = vector.broadcast %590 : vector<2x1xf32> to vector<2x128xf32>
    %592 = arith.subf %588, %591 : vector<2x128xf32>
    %593 = math.exp %592 : vector<2x128xf32>
    %cst_137 = arith.constant dense<0.000000e+00> : vector<2xf32>
    %594 = vector.multi_reduction <add>, %593, %cst_137 [1] : vector<2x128xf32> to vector<2xf32>
    %595 = vector.shape_cast %594 : vector<2xf32> to vector<2x1xf32>
    %596 = math.log %595 : vector<2x1xf32>
    %597 = vector.broadcast %596 : vector<2x1xf32> to vector<2x128xf32>
    %598 = arith.subf %592, %597 : vector<2x128xf32>
    %599 = tpu.iota {dimensions = array<i32: 1>} : vector<2x128xi32>
    %600 = vector.broadcast %590 : vector<2x1xf32> to vector<2x128xf32>
    %601 = arith.cmpf oge, %588, %600 : vector<2x128xf32>
    %c128_i32_138 = arith.constant 128 : i32
    %602 = vector.broadcast %c128_i32_138 : i32 to vector<2x128xi32>
    %603 = arith.select %601, %599, %602 : vector<2x128xi1>, vector<2x128xi32>
    %cst_139 = arith.constant dense<2147483647> : vector<2xi32>
    %604 = vector.multi_reduction <minsi>, %603, %cst_139 [1] : vector<2x128xi32> to vector<2xi32>
    %605 = vector.shape_cast %604 : vector<2xi32> to vector<2x1xi32>
    %606 = vector.extract_strided_slice %305 {offsets = [0, 4, 0], sizes = [2, 1, 96], strides = [1, 1, 1]} : vector<2x5x96xf32> to vector<2x1x96xf32>
    %607 = vector.shape_cast %606 : vector<2x1x96xf32> to vector<2x96xf32>
    %cst_140 = arith.constant dense<0.000000e+00> : vector<2x128xf32>
    %608 = tpu.matmul %586, %11, %cst_140 {dimension_numbers = #tpu.dot_dimension_numbers<[1], [0], [0], [1], [0, 0, 1, 1], [], []>} : vector<2x32xf32>, vector<32x128xf32>, vector<2x128xf32> -> vector<2x128xf32>
    %609 = vector.extract_strided_slice %608 {offsets = [0, 0], sizes = [2, 32], strides = [1, 1]} : vector<2x128xf32> to vector<2x32xf32>
    %610 = vector.extract_strided_slice %608 {offsets = [0, 32], sizes = [2, 96], strides = [1, 1]} : vector<2x128xf32> to vector<2x96xf32>
    %611 = arith.addf %610, %290 : vector<2x96xf32>
    %612 = vector.shape_cast %609 : vector<2x32xf32> to vector<2x1x32xf32>
    %613 = vector.broadcast %612 : vector<2x1x32xf32> to vector<2x8x32xf32>
    %614 = arith.addf %284, %613 : vector<2x8x32xf32>
    %615 = math.tanh %614 : vector<2x8x32xf32>
    "tpu.trace_start"() <{level = 10 : i32, message = "btk,kn->btn"}> : () -> ()
    %cst_141 = arith.constant dense<0.000000e+00> : vector<2x8x32xf32>
    %616 = tpu.matmul %615, %8, %cst_141 {dimension_numbers = #tpu.dot_dimension_numbers<[2], [0], [0, 1], [1], [0, 0, 0, 1, 1, 1], [], []>} : vector<2x8x32xf32>, vector<32x32xf32>, vector<2x8x32xf32> -> vector<2x8x32xf32>
    "tpu.trace_stop"() : () -> ()
    %617 = arith.addf %616, %286 : vector<2x8x32xf32>
    %618 = math.tanh %617 : vector<2x8x32xf32>
    %619 = arith.mulf %618, %288 : vector<2x8x32xf32>
    %cst_142 = arith.constant dense<0.000000e+00> : vector<2x8xf32>
    %620 = vector.multi_reduction <add>, %619, %cst_142 [2] : vector<2x8x32xf32> to vector<2x8xf32>
    %cst_143 = arith.constant dense<0xFF800000> : vector<2xf32>
    %621 = vector.multi_reduction <maximumf>, %620, %cst_143 [1] : vector<2x8xf32> to vector<2xf32>
    %622 = vector.shape_cast %621 : vector<2xf32> to vector<2x1xf32>
    %623 = vector.broadcast %622 : vector<2x1xf32> to vector<2x8xf32>
    %624 = arith.subf %620, %623 : vector<2x8xf32>
    %625 = math.exp %624 : vector<2x8xf32>
    %cst_144 = arith.constant dense<0.000000e+00> : vector<2xf32>
    %626 = vector.multi_reduction <add>, %625, %cst_144 [1] : vector<2x8xf32> to vector<2xf32>
    %627 = vector.shape_cast %626 : vector<2xf32> to vector<2x1xf32>
    %628 = vector.broadcast %627 : vector<2x1xf32> to vector<2x8xf32>
    %629 = arith.divf %625, %628 : vector<2x8xf32>
    %630 = vector.shape_cast %629 : vector<2x8xf32> to vector<2x8x1xf32>
    %631 = vector.broadcast %630 : vector<2x8x1xf32> to vector<2x8x32xf32>
    %632 = arith.mulf %631, %280 : vector<2x8x32xf32>
    %cst_145 = arith.constant dense<0.000000e+00> : vector<2x32xf32>
    %633 = vector.multi_reduction <add>, %632, %cst_145 [1] : vector<2x8x32xf32> to vector<2x32xf32>
    %cst_146 = arith.constant dense<0.000000e+00> : vector<2x96xf32>
    %634 = tpu.matmul %633, %13, %cst_146 {dimension_numbers = #tpu.dot_dimension_numbers<[1], [0], [0], [1], [0, 0, 1, 1], [], []>} : vector<2x32xf32>, vector<32x96xf32>, vector<2x96xf32> -> vector<2x96xf32>
    %635 = arith.addf %607, %634 : vector<2x96xf32>
    %636 = vector.extract_strided_slice %635 {offsets = [0, 0], sizes = [2, 32], strides = [1, 1]} : vector<2x96xf32> to vector<2x32xf32>
    %637 = vector.extract_strided_slice %611 {offsets = [0, 0], sizes = [2, 32], strides = [1, 1]} : vector<2x96xf32> to vector<2x32xf32>
    %638 = arith.addf %636, %637 : vector<2x32xf32>
    %639 = arith.negf %638 : vector<2x32xf32>
    %640 = math.exp %639 : vector<2x32xf32>
    %cst_147 = arith.constant 1.000000e+00 : f32
    %641 = vector.broadcast %cst_147 : f32 to vector<2x32xf32>
    %642 = arith.addf %641, %640 : vector<2x32xf32>
    %643 = arith.divf %641, %642 : vector<2x32xf32>
    %644 = vector.extract_strided_slice %635 {offsets = [0, 32], sizes = [2, 32], strides = [1, 1]} : vector<2x96xf32> to vector<2x32xf32>
    %645 = vector.extract_strided_slice %611 {offsets = [0, 32], sizes = [2, 32], strides = [1, 1]} : vector<2x96xf32> to vector<2x32xf32>
    %646 = arith.addf %644, %645 : vector<2x32xf32>
    %647 = arith.negf %646 : vector<2x32xf32>
    %648 = math.exp %647 : vector<2x32xf32>
    %cst_148 = arith.constant 1.000000e+00 : f32
    %649 = vector.broadcast %cst_148 : f32 to vector<2x32xf32>
    %650 = arith.addf %649, %648 : vector<2x32xf32>
    %651 = arith.divf %649, %650 : vector<2x32xf32>
    %652 = vector.extract_strided_slice %635 {offsets = [0, 64], sizes = [2, 32], strides = [1, 1]} : vector<2x96xf32> to vector<2x32xf32>
    %653 = vector.extract_strided_slice %611 {offsets = [0, 64], sizes = [2, 32], strides = [1, 1]} : vector<2x96xf32> to vector<2x32xf32>
    %654 = arith.mulf %643, %653 : vector<2x32xf32>
    %655 = arith.addf %652, %654 : vector<2x32xf32>
    %656 = math.tanh %655 : vector<2x32xf32>
    %cst_149 = arith.constant 1.000000e+00 : f32
    %657 = vector.broadcast %cst_149 : f32 to vector<2x32xf32>
    %658 = arith.subf %657, %651 : vector<2x32xf32>
    %659 = arith.mulf %658, %656 : vector<2x32xf32>
    %660 = arith.mulf %651, %586 : vector<2x32xf32>
    %661 = arith.addf %659, %660 : vector<2x32xf32>
    %cst_150 = arith.constant dense<0.000000e+00> : vector<2x128xf32>
    %662 = tpu.matmul %661, %17, %cst_150 {dimension_numbers = #tpu.dot_dimension_numbers<[1], [0], [0], [1], [0, 0, 1, 1], [], []>} : vector<2x32xf32>, vector<32x128xf32>, vector<2x128xf32> -> vector<2x128xf32>
    %663 = arith.addf %662, %292 : vector<2x128xf32>
    %cst_151 = arith.constant dense<0xFF800000> : vector<2xf32>
    %664 = vector.multi_reduction <maximumf>, %663, %cst_151 [1] : vector<2x128xf32> to vector<2xf32>
    %665 = vector.shape_cast %664 : vector<2xf32> to vector<2x1xf32>
    %666 = vector.broadcast %665 : vector<2x1xf32> to vector<2x128xf32>
    %667 = arith.subf %663, %666 : vector<2x128xf32>
    %668 = math.exp %667 : vector<2x128xf32>
    %cst_152 = arith.constant dense<0.000000e+00> : vector<2xf32>
    %669 = vector.multi_reduction <add>, %668, %cst_152 [1] : vector<2x128xf32> to vector<2xf32>
    %670 = vector.shape_cast %669 : vector<2xf32> to vector<2x1xf32>
    %671 = math.log %670 : vector<2x1xf32>
    %672 = vector.broadcast %671 : vector<2x1xf32> to vector<2x128xf32>
    %673 = arith.subf %667, %672 : vector<2x128xf32>
    %674 = tpu.iota {dimensions = array<i32: 1>} : vector<2x128xi32>
    %675 = vector.broadcast %665 : vector<2x1xf32> to vector<2x128xf32>
    %676 = arith.cmpf oge, %663, %675 : vector<2x128xf32>
    %c128_i32_153 = arith.constant 128 : i32
    %677 = vector.broadcast %c128_i32_153 : i32 to vector<2x128xi32>
    %678 = arith.select %676, %674, %677 : vector<2x128xi1>, vector<2x128xi32>
    %cst_154 = arith.constant dense<2147483647> : vector<2xi32>
    %679 = vector.multi_reduction <minsi>, %678, %cst_154 [1] : vector<2x128xi32> to vector<2xi32>
    %680 = vector.shape_cast %679 : vector<2xi32> to vector<2x1xi32>
    %681 = vector.shape_cast %373 : vector<2x128xf32> to vector<2x1x128xf32>
    %682 = vector.shape_cast %448 : vector<2x128xf32> to vector<2x1x128xf32>
    %683 = vector.shape_cast %523 : vector<2x128xf32> to vector<2x1x128xf32>
    %684 = vector.shape_cast %598 : vector<2x128xf32> to vector<2x1x128xf32>
    %685 = vector.shape_cast %673 : vector<2x128xf32> to vector<2x1x128xf32>
    %686 = tpu.concatenate %681, %682, %683, %684, %685 in 1 : vector<2x1x128xf32>, vector<2x1x128xf32>, vector<2x1x128xf32>, vector<2x1x128xf32>, vector<2x1x128xf32> -> vector<2x5x128xf32>
    %c0_155 = arith.constant 0 : index
    %c0_156 = arith.constant 0 : index
    %c0_157 = arith.constant 0 : index
    %687 = vector.load %arg21[%c0_155, %c0_156, %c0_157] : memref<2x5x128xf32, #tpu.memory_space<vmem>>, vector<2x5x128xf32>
    tpu.vector_store %arg21[%c0_155, %c0_156, %c0_157], %686 {strides = array<i32>} : memref<2x5x128xf32, #tpu.memory_space<vmem>>, vector<2x5x128xf32>,
    %688 = tpu.concatenate %380, %455, %530, %605, %680 in 1 : vector<2x1xi32>, vector<2x1xi32>, vector<2x1xi32>, vector<2x1xi32>, vector<2x1xi32> -> vector<2x5xi32>
    %c0_158 = arith.constant 0 : index
    %c0_159 = arith.constant 0 : index
    %689 = vector.load %arg22[%c0_158, %c0_159] : memref<2x5xi32, #tpu.memory_space<vmem>>, vector<2x5xi32>
    tpu.vector_store %arg22[%c0_158, %c0_159], %688 {strides = array<i32>} : memref<2x5xi32, #tpu.memory_space<vmem>>, vector<2x5xi32>,
    return
  }
}

</mosaic_0001>

<llo_original>
// kernel: tpu_custom_call.1
$region0: #{tpu_custom_call.1}
  #allocation0 [shape = 'u32[]', space=smem, size = 0x4, offset = 0x4, fixed_abs, tag = 'smem constant byte address 0x4 - core index']
  #allocation1 [shape = 'u32[144,128]{1,0:T(1,128)}', space=vmem, size = 0x12000, scoped, tag = 'internal scratch']
  %s0 = inlined_call_operand.hbm [shape: f32[2,8,64], index: 0, kind: input, shape index: {}]
  %s1 = inlined_call_operand.hbm [shape: s32[2,6], index: 1, kind: input, shape index: {}]
  %s2 = inlined_call_operand.vmem [shape: f32[64,32], index: 2, kind: input, shape index: {}]
  %s3 = inlined_call_operand.hbm [shape: f32[1,32], index: 3, kind: input, shape index: {}]
  %s4 = inlined_call_operand.vmem [shape: f32[32,96], index: 4, kind: input, shape index: {}]
  %s5 = inlined_call_operand.vmem [shape: f32[32,96], index: 5, kind: input, shape index: {}]
  %s6 = inlined_call_operand.hbm [shape: f32[1,96], index: 6, kind: input, shape index: {}]
  %s7 = inlined_call_operand.hbm [shape: f32[1,96], index: 7, kind: input, shape index: {}]
  %s8 = inlined_call_operand.vmem [shape: f32[32,32], index: 8, kind: input, shape index: {}]
  %s9 = inlined_call_operand.hbm [shape: f32[1,32], index: 9, kind: input, shape index: {}]
  %s10 = inlined_call_operand.vmem [shape: f32[32,32], index: 10, kind: input, shape index: {}]
  %s11 = inlined_call_operand.hbm [shape: f32[1,32], index: 11, kind: input, shape index: {}]
  %s12 = inlined_call_operand.hbm [shape: f32[1,32], index: 12, kind: input, shape index: {}]
  %s13 = inlined_call_operand.vmem [shape: f32[32,128], index: 13, kind: input, shape index: {}]
  %s14 = inlined_call_operand.vmem [shape: f32[32,96], index: 14, kind: input, shape index: {}]
  %s15 = inlined_call_operand.vmem [shape: f32[32,96], index: 15, kind: input, shape index: {}]
  %s16 = inlined_call_operand.hbm [shape: f32[1,96], index: 16, kind: input, shape index: {}]
  %s17 = inlined_call_operand.hbm [shape: f32[1,96], index: 17, kind: input, shape index: {}]
  %s18 = inlined_call_operand.vmem [shape: f32[128,32], index: 18, kind: input, shape index: {}]
  %s19 = inlined_call_operand.vmem [shape: f32[32,128], index: 19, kind: input, shape index: {}]
  %s20 = inlined_call_operand.vmem [shape: f32[1,128], index: 20, kind: input, shape index: {}]
  %s21 = inlined_call_operand.vmem [shape: f32[2,5,128], index: 21, kind: output, shape index: {0}]
  %s22 = inlined_call_operand.hbm [shape: s32[2,5], index: 22, kind: output, shape index: {1}]
  %23 = xla_tuple %s21, %s22
  %s24 = sld [smem:[#allocation0]]
  $region142: #{tpu_custom_call.1} parent=0
    _
  %s26 = ssub.s32 1, %s24
  %s27 = scalar_select 0, %s26, %s24
  $region1: #{tpu_custom_call.1} parent=0
    #allocation2 [shape = 'u8[8192]{0}', space=vmem, size = 0x2000, scoped, tag = 'input window, operand 0, single buffered']
    #allocation3 [shape = 's32[1]{0}', space=sflag, size = 0x4, scoped, tag = 'scoped memory for tpu_custom_call.1']
    #allocation4 [shape = 's32[1]{0}', space=sflag, size = 0x4, scoped, tag = 'scoped memory for tpu_custom_call.1']
    #allocation5 [shape = 'u8[1024]{0}', space=vmem, size = 0x400, scoped, tag = 'input window, operand 1, single buffered']
    #allocation6 [shape = 's32[1]{0}', space=sflag, size = 0x4, scoped, tag = 'scoped memory for tpu_custom_call.1']
    #allocation7 [shape = 'u8[512]{0}', space=vmem, size = 0x400, scoped, tag = 'input window, operand 3, single buffered']
    #allocation8 [shape = 'u8[512]{0}', space=vmem, size = 0x400, scoped, tag = 'input window, operand 6, single buffered']
    #allocation9 [shape = 's32[1]{0}', space=sflag, size = 0x4, scoped, tag = 'scoped memory for tpu_custom_call.1']
    #allocation10 [shape = 'u8[512]{0}', space=vmem, size = 0x400, scoped, tag = 'input window, operand 7, single buffered']
    #allocation11 [shape = 'u8[512]{0}', space=vmem, size = 0x400, scoped, tag = 'input window, operand 9, single buffered']
    #allocation12 [shape = 's32[1]{0}', space=sflag, size = 0x4, scoped, tag = 'scoped memory for tpu_custom_call.1']
    #allocation13 [shape = 'u8[512]{0}', space=vmem, size = 0x400, scoped, tag = 'input window, operand 11, single buffered']
    #allocation14 [shape = 'u8[512]{0}', space=vmem, size = 0x400, scoped, tag = 'input window, operand 12, single buffered']
    #allocation15 [shape = 's32[1]{0}', space=sflag, size = 0x4, scoped, tag = 'scoped memory for tpu_custom_call.1']
    #allocation16 [shape = 'u8[512]{0}', space=vmem, size = 0x400, scoped, tag = 'input window, operand 16, single buffered']
    #allocation17 [shape = 'u8[512]{0}', space=vmem, size = 0x400, scoped, tag = 'input window, operand 17, single buffered']
    #allocation18 [shape = 's32[1]{0}', space=sflag, size = 0x4, scoped, tag = 'scoped memory for tpu_custom_call.1']
    #allocation19 [shape = 'u8[1024]{0}', space=vmem, size = 0x400, scoped, tag = 'output window, operand 1, single buffered']
    %28 = vsyncpa [#allocation3], 0
    %29 = vsyncpa [#allocation6], 0
    %30 = vsyncpa [#allocation9], 0
    %31 = vsyncpa [#allocation12], 0
    %32 = vsyncpa [#allocation15], 0
    %33 = vsyncpa [#allocation18], 0
    %34 = vsyncpa [#allocation4], 0
    // Predicated region
    $region2: #{tpu_custom_call.1} parent=1 // pred_check
      _
    $region3: #{tpu_custom_call.1} parent=1 // pred_check_branch
      %36 = sbr.rel (0) target = $region5
    $region4: #{tpu_custom_call.1} parent=1 // pred_region
      %s38 = ssub.s32 256, 256
      %39 = vsyncadd [#allocation3], %s38
      %s40 = sshll.u32 [#allocation2], 4
      %s41 = int_to_ptr.vmem [resolvable:$true] %s40
      %46 = dma.hbm_to_vmem [thread:$0]  %s0, 256, %s41, [#allocation3], 128, 128, 8
    $region5: #{tpu_custom_call.1} parent=1 // pred_fallthru
      _
    // Predicated region
    $region6: #{tpu_custom_call.1} parent=1 // pred_check
      _
    $region7: #{tpu_custom_call.1} parent=1 // pred_check_branch
      %48 = sbr.rel (0) target = $region9
    $region8: #{tpu_custom_call.1} parent=1 // pred_region
      %s50 = ssub.s32 32, 32
      %51 = vsyncadd [#allocation6], %s50
      %s53 = sshll.u32 [#allocation5], 4
      %s54 = int_to_ptr.vmem [resolvable:$true] %s53
      %56 = dma.hbm_to_vmem [thread:$0]  %s1, 32, %s54, [#allocation6]
    $region9: #{tpu_custom_call.1} parent=1 // pred_fallthru
      _
    // Predicated region
    $region10: #{tpu_custom_call.1} parent=1 // pred_check
      _
    $region11: #{tpu_custom_call.1} parent=1 // pred_check_branch
      %58 = sbr.rel (0) target = $region13
    $region12: #{tpu_custom_call.1} parent=1 // pred_region
      _
    $region13: #{tpu_custom_call.1} parent=1 // pred_fallthru
      _
    // Predicated region
    $region14: #{tpu_custom_call.1} parent=1 // pred_check
      _
    $region15: #{tpu_custom_call.1} parent=1 // pred_check_branch
      %60 = sbr.rel (0) target = $region17
    $region16: #{tpu_custom_call.1} parent=1 // pred_region
      %s62 = ssub.s32 16, 16
      %63 = vsyncadd [#allocation6], %s62
      %s65 = sshll.u32 [#allocation7], 4
      %s66 = int_to_ptr.vmem [resolvable:$true] %s65
      %68 = dma.hbm_to_vmem [thread:$0]  %s3, 16, %s66, [#allocation6]
    $region17: #{tpu_custom_call.1} parent=1 // pred_fallthru
      _
    // Predicated region
    $region18: #{tpu_custom_call.1} parent=1 // pred_check
      _
    $region19: #{tpu_custom_call.1} parent=1 // pred_check_branch
      %70 = sbr.rel (0) target = $region21
    $region20: #{tpu_custom_call.1} parent=1 // pred_region
      _
    $region21: #{tpu_custom_call.1} parent=1 // pred_fallthru
      _
    // Predicated region
    $region22: #{tpu_custom_call.1} parent=1 // pred_check
      _
    $region23: #{tpu_custom_call.1} parent=1 // pred_check_branch
      %72 = sbr.rel (0) target = $region25
    $region24: #{tpu_custom_call.1} parent=1 // pred_region
      _
    $region25: #{tpu_custom_call.1} parent=1 // pred_fallthru
      _
    // Predicated region
    $region26: #{tpu_custom_call.1} parent=1 // pred_check
      _
    $region27: #{tpu_custom_call.1} parent=1 // pred_check_branch
      %74 = sbr.rel (0) target = $region29
    $region28: #{tpu_custom_call.1} parent=1 // pred_region
      %s76 = ssub.s32 16, 16
      %77 = vsyncadd [#allocation9], %s76
      %s79 = sshll.u32 [#allocation8], 4
      %s80 = int_to_ptr.vmem [resolvable:$true] %s79
      %82 = dma.hbm_to_vmem [thread:$0]  %s6, 16, %s80, [#allocation9]
    $region29: #{tpu_custom_call.1} parent=1 // pred_fallthru
      _
    // Predicated region
    $region30: #{tpu_custom_call.1} parent=1 // pred_check
      _
    $region31: #{tpu_custom_call.1} parent=1 // pred_check_branch
      %84 = sbr.rel (0) target = $region33
    $region32: #{tpu_custom_call.1} parent=1 // pred_region
      %s86 = ssub.s32 16, 16
      %87 = vsyncadd [#allocation9], %s86
      %s89 = sshll.u32 [#allocation10], 4
      %s90 = int_to_ptr.vmem [resolvable:$true] %s89
      %92 = dma.hbm_to_vmem [thread:$0]  %s7, 16, %s90, [#allocation9]
    $region33: #{tpu_custom_call.1} parent=1 // pred_fallthru
      _
    // Predicated region
    $region34: #{tpu_custom_call.1} parent=1 // pred_check
      _
    $region35: #{tpu_custom_call.1} parent=1 // pred_check_branch
      %94 = sbr.rel (0) target = $region37
    $region36: #{tpu_custom_call.1} parent=1 // pred_region
      _
    $region37: #{tpu_custom_call.1} parent=1 // pred_fallthru
      _
    // Predicated region
    $region38: #{tpu_custom_call.1} parent=1 // pred_check
      _
    $region39: #{tpu_custom_call.1} parent=1 // pred_check_branch
      %96 = sbr.rel (0) target = $region41
    $region40: #{tpu_custom_call.1} parent=1 // pred_region
      %s98 = ssub.s32 16, 16
      %99 = vsyncadd [#allocation12], %s98
      %s101 = sshll.u32 [#allocation11], 4
      %s102 = int_to_ptr.vmem [resolvable:$true] %s101
      %104 = dma.hbm_to_vmem [thread:$0]  %s9, 16, %s102, [#allocation12]
    $region41: #{tpu_custom_call.1} parent=1 // pred_fallthru
      _
    // Predicated region
    $region42: #{tpu_custom_call.1} parent=1 // pred_check
      _
    $region43: #{tpu_custom_call.1} parent=1 // pred_check_branch
      %106 = sbr.rel (0) target = $region45
    $region44: #{tpu_custom_call.1} parent=1 // pred_region
      _
    $region45: #{tpu_custom_call.1} parent=1 // pred_fallthru
      _
    // Predicated region
    $region46: #{tpu_custom_call.1} parent=1 // pred_check
      _
    $region47: #{tpu_custom_call.1} parent=1 // pred_check_branch
      %108 = sbr.rel (0) target = $region49
    $region48: #{tpu_custom_call.1} parent=1 // pred_region
      %s110 = ssub.s32 16, 16
      %111 = vsyncadd [#allocation12], %s110
      %s113 = sshll.u32 [#allocation13], 4
      %s114 = int_to_ptr.vmem [resolvable:$true] %s113
      %116 = dma.hbm_to_vmem [thread:$0]  %s11, 16, %s114, [#allocation12]
    $region49: #{tpu_custom_call.1} parent=1 // pred_fallthru
      _
    // Predicated region
    $region50: #{tpu_custom_call.1} parent=1 // pred_check
      _
    $region51: #{tpu_custom_call.1} parent=1 // pred_check_branch
      %118 = sbr.rel (0) target = $region53
    $region52: #{tpu_custom_call.1} parent=1 // pred_region
      %s120 = ssub.s32 16, 16
      %121 = vsyncadd [#allocation15], %s120
      %s123 = sshll.u32 [#allocation14], 4
      %s124 = int_to_ptr.vmem [resolvable:$true] %s123
      %126 = dma.hbm_to_vmem [thread:$0]  %s12, 16, %s124, [#allocation15]
    $region53: #{tpu_custom_call.1} parent=1 // pred_fallthru
      _
    // Predicated region
    $region54: #{tpu_custom_call.1} parent=1 // pred_check
      _
    $region55: #{tpu_custom_call.1} parent=1 // pred_check_branch
      %128 = sbr.rel (0) target = $region57
    $region56: #{tpu_custom_call.1} parent=1 // pred_region
      _
    $region57: #{tpu_custom_call.1} parent=1 // pred_fallthru
      _
    // Predicated region
    $region58: #{tpu_custom_call.1} parent=1 // pred_check
      _
    $region59: #{tpu_custom_call.1} parent=1 // pred_check_branch
      %130 = sbr.rel (0) target = $region61
    $region60: #{tpu_custom_call.1} parent=1 // pred_region
      _
    $region61: #{tpu_custom_call.1} parent=1 // pred_fallthru
      _
    // Predicated region
    $region62: #{tpu_custom_call.1} parent=1 // pred_check
      _
    $region63: #{tpu_custom_call.1} parent=1 // pred_check_branch
      %132 = sbr.rel (0) target = $region65
    $region64: #{tpu_custom_call.1} parent=1 // pred_region
      _
    $region65: #{tpu_custom_call.1} parent=1 // pred_fallthru
      _
    // Predicated region
    $region66: #{tpu_custom_call.1} parent=1 // pred_check
      _
    $region67: #{tpu_custom_call.1} parent=1 // pred_check_branch
      %134 = sbr.rel (0) target = $region69
    $region68: #{tpu_custom_call.1} parent=1 // pred_region
      %s136 = ssub.s32 16, 16
      %137 = vsyncadd [#allocation15], %s136
      %s139 = sshll.u32 [#allocation16], 4
      %s140 = int_to_ptr.vmem [resolvable:$true] %s139
      %142 = dma.hbm_to_vmem [thread:$0]  %s16, 16, %s140, [#allocation15]
    $region69: #{tpu_custom_call.1} parent=1 // pred_fallthru
      _
    // Predicated region
    $region70: #{tpu_custom_call.1} parent=1 // pred_check
      _
    $region71: #{tpu_custom_call.1} parent=1 // pred_check_branch
      %144 = sbr.rel (0) target = $region73
    $region72: #{tpu_custom_call.1} parent=1 // pred_region
      %s146 = ssub.s32 16, 16
      %147 = vsyncadd [#allocation18], %s146
      %s149 = sshll.u32 [#allocation17], 4
      %s150 = int_to_ptr.vmem [resolvable:$true] %s149
      %152 = dma.hbm_to_vmem [thread:$0]  %s17, 16, %s150, [#allocation18]
    $region73: #{tpu_custom_call.1} parent=1 // pred_fallthru
      _
    // Predicated region
    $region74: #{tpu_custom_call.1} parent=1 // pred_check
      _
    $region75: #{tpu_custom_call.1} parent=1 // pred_check_branch
      %154 = sbr.rel (0) target = $region77
    $region76: #{tpu_custom_call.1} parent=1 // pred_region
      _
    $region77: #{tpu_custom_call.1} parent=1 // pred_fallthru
      _
    // Predicated region
    $region78: #{tpu_custom_call.1} parent=1 // pred_check
      _
    $region79: #{tpu_custom_call.1} parent=1 // pred_check_branch
      %156 = sbr.rel (0) target = $region81
    $region80: #{tpu_custom_call.1} parent=1 // pred_region
      _
    $region81: #{tpu_custom_call.1} parent=1 // pred_fallthru
      _
    // Predicated region
    $region82: #{tpu_custom_call.1} parent=1 // pred_check
      _
    $region83: #{tpu_custom_call.1} parent=1 // pred_check_branch
      %158 = sbr.rel (0) target = $region85
    $region84: #{tpu_custom_call.1} parent=1 // pred_region
      _
    $region85: #{tpu_custom_call.1} parent=1 // pred_fallthru
      _
    // Predicated region
    $region86: #{tpu_custom_call.1} parent=1 // pred_check
      _
    $region87: #{tpu_custom_call.1} parent=1 // pred_check_branch
      %160 = sbr.rel (0) target = $region89
    $region88: #{tpu_custom_call.1} parent=1 // pred_region
      %161 = dma.done [#allocation3], 256
    $region89: #{tpu_custom_call.1} parent=1 // pred_fallthru
      _
    // Predicated region
    $region90: #{tpu_custom_call.1} parent=1 // pred_check
      _
    $region91: #{tpu_custom_call.1} parent=1 // pred_check_branch
      %163 = sbr.rel (0) target = $region93
    $region92: #{tpu_custom_call.1} parent=1 // pred_region
      %164 = dma.done [#allocation6], 32
    $region93: #{tpu_custom_call.1} parent=1 // pred_fallthru
      _
    // Predicated region
    $region94: #{tpu_custom_call.1} parent=1 // pred_check
      _
    $region95: #{tpu_custom_call.1} parent=1 // pred_check_branch
      %166 = sbr.rel (0) target = $region97
    $region96: #{tpu_custom_call.1} parent=1 // pred_region
      %167 = dma.done [#allocation6], 16
    $region97: #{tpu_custom_call.1} parent=1 // pred_fallthru
      _
    // Predicated region
    $region98: #{tpu_custom_call.1} parent=1 // pred_check
      _
    $region99: #{tpu_custom_call.1} parent=1 // pred_check_branch
      %169 = sbr.rel (0) target = $region101
    $region100: #{tpu_custom_call.1} parent=1 // pred_region
      %170 = dma.done [#allocation9], 16
    $region101: #{tpu_custom_call.1} parent=1 // pred_fallthru
      _
    // Predicated region
    $region102: #{tpu_custom_call.1} parent=1 // pred_check
      _
    $region103: #{tpu_custom_call.1} parent=1 // pred_check_branch
      %172 = sbr.rel (0) target = $region105
    $region104: #{tpu_custom_call.1} parent=1 // pred_region
      %173 = dma.done [#allocation9], 16
    $region105: #{tpu_custom_call.1} parent=1 // pred_fallthru
      _
    // Predicated region
    $region106: #{tpu_custom_call.1} parent=1 // pred_check
      _
    $region107: #{tpu_custom_call.1} parent=1 // pred_check_branch
      %175 = sbr.rel (0) target = $region109
    $region108: #{tpu_custom_call.1} parent=1 // pred_region
      %176 = dma.done [#allocation12], 16
    $region109: #{tpu_custom_call.1} parent=1 // pred_fallthru
      _
    // Predicated region
    $region110: #{tpu_custom_call.1} parent=1 // pred_check
      _
    $region111: #{tpu_custom_call.1} parent=1 // pred_check_branch
      %178 = sbr.rel (0) target = $region113
    $region112: #{tpu_custom_call.1} parent=1 // pred_region
      %179 = dma.done [#allocation12], 16
    $region113: #{tpu_custom_call.1} parent=1 // pred_fallthru
      _
    // Predicated region
    $region114: #{tpu_custom_call.1} parent=1 // pred_check
      _
    $region115: #{tpu_custom_call.1} parent=1 // pred_check_branch
      %181 = sbr.rel (0) target = $region117
    $region116: #{tpu_custom_call.1} parent=1 // pred_region
      %182 = dma.done [#allocation15], 16
    $region117: #{tpu_custom_call.1} parent=1 // pred_fallthru
      _
    // Predicated region
    $region118: #{tpu_custom_call.1} parent=1 // pred_check
      _
    $region119: #{tpu_custom_call.1} parent=1 // pred_check_branch
      %184 = sbr.rel (0) target = $region121
    $region120: #{tpu_custom_call.1} parent=1 // pred_region
      %185 = dma.done [#allocation15], 16
    $region121: #{tpu_custom_call.1} parent=1 // pred_fallthru
      _
    // Predicated region
    $region122: #{tpu_custom_call.1} parent=1 // pred_check
      _
    $region123: #{tpu_custom_call.1} parent=1 // pred_check_branch
      %187 = sbr.rel (0) target = $region125
    $region124: #{tpu_custom_call.1} parent=1 // pred_region
      %188 = dma.done [#allocation18], 16
    $region125: #{tpu_custom_call.1} parent=1 // pred_fallthru
      _
    %v189 = vld [vmem:[%s2] sm:$0xff]
    %v190 = vld [vmem:[%s2 + $0x8] sm:$0xff]
    %v191 = vld [vmem:[%s2 + $0x10] sm:$0xff]
    %v192 = vld [vmem:[%s2 + $0x18] sm:$0xff]
    %v193 = vld [vmem:[%s2 + $0x20] sm:$0xff]
    %v194 = vld [vmem:[%s2 + $0x28] sm:$0xff]
    %v195 = vld [vmem:[%s2 + $0x30] sm:$0xff]
    %v196 = vld [vmem:[%s2 + $0x38] sm:$0xff]
    %v197 = vld [vmem:[#allocation7] sm:$0x1]
    %v198 = vld [vmem:[%s4] sm:$0xff]
    %v199 = vld [vmem:[%s4 + $0x8] sm:$0xff]
    %v200 = vld [vmem:[%s4 + $0x10] sm:$0xff]
    %v201 = vld [vmem:[%s4 + $0x18] sm:$0xff]
    %v202 = vld [vmem:[%s5] sm:$0xff]
    %v203 = vld [vmem:[%s5 + $0x8] sm:$0xff]
    %v204 = vld [vmem:[%s5 + $0x10] sm:$0xff]
    %v205 = vld [vmem:[%s5 + $0x18] sm:$0xff]
    %v206 = vld [vmem:[#allocation8] sm:$0x1]
    %v207 = vld [vmem:[#allocation10] sm:$0x1]
    %v208 = vld [vmem:[%s8] sm:$0xff]
    %v209 = vld [vmem:[%s8 + $0x8] sm:$0xff]
    %v210 = vld [vmem:[%s8 + $0x10] sm:$0xff]
    %v211 = vld [vmem:[%s8 + $0x18] sm:$0xff]
    %v212 = vld [vmem:[#allocation11] sm:$0x1]
    %v213 = vld [vmem:[%s10] sm:$0xff]
    %v214 = vld [vmem:[%s10 + $0x8] sm:$0xff]
    %v215 = vld [vmem:[%s10 + $0x10] sm:$0xff]
    %v216 = vld [vmem:[%s10 + $0x18] sm:$0xff]
    %v217 = vld [vmem:[#allocation13] sm:$0x1]
    %v218 = vld [vmem:[#allocation14] sm:$0x1]
    %v219 = vld [vmem:[%s13] sm:$0xff]
    %v220 = vld [vmem:[%s13 + $0x8] sm:$0xff]
    %v221 = vld [vmem:[%s13 + $0x10] sm:$0xff]
    %v222 = vld [vmem:[%s13 + $0x18] sm:$0xff]
    %v223 = vld [vmem:[%s14] sm:$0xff]
    %v224 = vld [vmem:[%s14 + $0x8] sm:$0xff]
    %v225 = vld [vmem:[%s14 + $0x10] sm:$0xff]
    %v226 = vld [vmem:[%s14 + $0x18] sm:$0xff]
    %v227 = vld [vmem:[%s15] sm:$0xff]
    %v228 = vld [vmem:[%s15 + $0x8] sm:$0xff]
    %v229 = vld [vmem:[%s15 + $0x10] sm:$0xff]
    %v230 = vld [vmem:[%s15 + $0x18] sm:$0xff]
    %v231 = vld [vmem:[#allocation16] sm:$0x1]
    %v232 = vld [vmem:[#allocation17] sm:$0x1]
    %v233 = vld [vmem:[%s18] sm:$0xff]
    %v234 = vld [vmem:[%s18 + $0x8] sm:$0xff]
    %v235 = vld [vmem:[%s18 + $0x10] sm:$0xff]
    %v236 = vld [vmem:[%s18 + $0x18] sm:$0xff]
    %v237 = vld [vmem:[%s18 + $0x20] sm:$0xff]
    %v238 = vld [vmem:[%s18 + $0x28] sm:$0xff]
    %v239 = vld [vmem:[%s18 + $0x30] sm:$0xff]
    %v240 = vld [vmem:[%s18 + $0x38] sm:$0xff]
    %v241 = vld [vmem:[%s18 + $0x40] sm:$0xff]
    %v242 = vld [vmem:[%s18 + $0x48] sm:$0xff]
    %v243 = vld [vmem:[%s18 + $0x50] sm:$0xff]
    %v244 = vld [vmem:[%s18 + $0x58] sm:$0xff]
    %v245 = vld [vmem:[%s18 + $0x60] sm:$0xff]
    %v246 = vld [vmem:[%s18 + $0x68] sm:$0xff]
    %v247 = vld [vmem:[%s18 + $0x70] sm:$0xff]
    %v248 = vld [vmem:[%s18 + $0x78] sm:$0xff]
    %v249 = vld [vmem:[%s19] sm:$0xff]
    %v250 = vld [vmem:[%s19 + $0x8] sm:$0xff]
    %v251 = vld [vmem:[%s19 + $0x10] sm:$0xff]
    %v252 = vld [vmem:[%s19 + $0x18] sm:$0xff]
    %v253 = vld [vmem:[%s20] sm:$0x1]
    %v254 = vld [vmem:[#allocation2] sm:$0xff]
    %v255 = vld [vmem:[#allocation2 + $0x8] sm:$0xff]
    %v256 = vld [vmem:[#allocation5] sm:$0x3]
    %v258 = vlaneseq
    %v259 = vshrl.u32 %v258, 7
    %v260 = vsub.s32 0, %v259
    %v261 = vrot.slane %v197, %v260
    %vm263 = vcmask 523264
    %v265 = vsel %vm263, %v254, 0
    %v268 = vsel %vm263, %v255, 0
    %270 = vmatprep.subr.mxu0 0.0
    %271 = vmatpush1.msra.mxu0 0.0
    %272 = vmatprep.subr.mxu0 0.0
    %273 = vmatpush1.msra.mxu0 0.0
    %274 = vmatprep.subr.mxu0 0.0
    %275 = vmatpush1.msra.mxu0 0.0
    %276 = vmatprep.subr.mxu0 0.0
    %277 = vmatpush1.msra.mxu0 0.0
    %278 = vmatprep.subr.mxu0 0.0
    %279 = vmatpush1.msra.mxu0 0.0
    %280 = vmatprep.subr.mxu0 0.0
    %281 = vmatpush1.msra.mxu0 0.0
    %282 = vmatprep.subr.mxu0 0.0
    %283 = vmatpush1.msra.mxu0 0.0
    %284 = vmatprep.subr.mxu0 0.0
    %285 = vmatpush1.msra.mxu0 0.0
    %286 = vmatprep.subr.mxu0 0.0
    %287 = vmatpush1.msra.mxu0 %v196
    %288 = vmatprep.subr.mxu0 0.0
    %289 = vmatpush1.msra.mxu0 %v195
    %290 = vmatprep.subr.mxu0 0.0
    %291 = vmatpush1.msra.mxu0 %v194
    %292 = vmatprep.subr.mxu0 0.0
    %293 = vmatpush1.msra.mxu0 %v193
    %294 = vmatprep.subr.mxu0 0.0
    %295 = vmatpush1.msra.mxu0 %v192
    %296 = vmatprep.subr.mxu0 0.0
    %297 = vmatpush1.msra.mxu0 %v191
    %298 = vmatprep.subr.mxu0 0.0
    %299 = vmatpush1.msra.mxu0 %v190
    %300 = vmatprep.subr.mxu0 0.0
    %301 = vmatpush1.msra.mxu0 %v189
    %302 = vmatprep.subr.mxu0 0.0
    %303 = vmatpush2.msra.mxu0 0.0
    %304 = vmatprep.subr.mxu0 0.0
    %305 = vmatpush2.msra.mxu0 0.0
    %306 = vmatprep.subr.mxu0 0.0
    %307 = vmatpush2.msra.mxu0 0.0
    %308 = vmatprep.subr.mxu0 0.0
    %309 = vmatpush2.msra.mxu0 0.0
    %310 = vmatprep.subr.mxu0 0.0
    %311 = vmatpush2.msra.mxu0 0.0
    %312 = vmatprep.subr.mxu0 0.0
    %313 = vmatpush2.msra.mxu0 0.0
    %314 = vmatprep.subr.mxu0 0.0
    %315 = vmatpush2.msra.mxu0 0.0
    %316 = vmatprep.subr.mxu0 0.0
    %317 = vmatpush2.msra.mxu0 0.0
    %318 = vmatprep.subr.mxu0 0.0
    %319 = vmatpush2.msra.mxu0 0.0
    %320 = vmatprep.subr.mxu0 0.0
    %321 = vmatpush2.msra.mxu0 0.0
    %322 = vmatprep.subr.mxu0 0.0
    %323 = vmatpush2.msra.mxu0 0.0
    %324 = vmatprep.subr.mxu0 0.0
    %325 = vmatpush2.msra.mxu0 0.0
    %326 = vmatprep.subr.mxu0 0.0
    %327 = vmatpush2.msra.mxu0 0.0
    %328 = vmatprep.subr.mxu0 0.0
    %329 = vmatpush2.msra.mxu0 0.0
    %330 = vmatprep.subr.mxu0 0.0
    %331 = vmatpush2.msra.mxu0 0.0
    %332 = vmatprep.subr.mxu0 0.0
    %333 = vmatpush2.msra.mxu0 0.0
    %334 = vmatprep.mubr.f32.mxu0 0.0
    %335 = vmatmul.mubr.f32.gmra.mxu0 %v265
    %v336 = vpop.f32.mrf.mxu0
    %v337 = vadd.f32 %v261, %v336
    %v338 = vpop.f32.mrf.mxu0
    %339 = vmatprep.mubr.f32.mxu0 0.0
    %340 = vmatmul.mubr.f32.gmra.mxu0 %v268
    %v341 = vpop.f32.mrf.mxu0
    %v342 = vadd.f32 %v261, %v341
    %v343 = vpop.f32.mrf.mxu0
    %344 = vdwg.mxu0
    %v346 = vlaneseq
    %v347 = vshrl.u32 %v346, 7
    %v348 = vsub.s32 0, %v347
    %v349 = vrot.slane %v206, %v348
    %vm351 = vcmask 261120
    %v353 = vsel %vm351, %v337, 0
    %v356 = vsel %vm351, %v342, 0
    %358 = vmatprep.subr.mxu0 0.0
    %359 = vmatpush1.msra.mxu0 0.0
    %360 = vmatprep.subr.mxu0 0.0
    %361 = vmatpush1.msra.mxu0 0.0
    %362 = vmatprep.subr.mxu0 0.0
    %363 = vmatpush1.msra.mxu0 0.0
    %364 = vmatprep.subr.mxu0 0.0
    %365 = vmatpush1.msra.mxu0 0.0
    %366 = vmatprep.subr.mxu0 0.0
    %367 = vmatpush1.msra.mxu0 0.0
    %368 = vmatprep.subr.mxu0 0.0
    %369 = vmatpush1.msra.mxu0 0.0
    %370 = vmatprep.subr.mxu0 0.0
    %371 = vmatpush1.msra.mxu0 0.0
    %372 = vmatprep.subr.mxu0 0.0
    %373 = vmatpush1.msra.mxu0 0.0
    %374 = vmatprep.subr.mxu0 0.0
    %375 = vmatpush1.msra.mxu0 0.0
    %376 = vmatprep.subr.mxu0 0.0
    %377 = vmatpush1.msra.mxu0 0.0
    %378 = vmatprep.subr.mxu0 0.0
    %379 = vmatpush1.msra.mxu0 0.0
    %380 = vmatprep.subr.mxu0 0.0
    %381 = vmatpush1.msra.mxu0 0.0
    %382 = vmatprep.subr.mxu0 0.0
    %383 = vmatpush1.msra.mxu0 %v201
    %384 = vmatprep.subr.mxu0 0.0
    %385 = vmatpush1.msra.mxu0 %v200
    %386 = vmatprep.subr.mxu0 0.0
    %387 = vmatpush1.msra.mxu0 %v199
    %388 = vmatprep.subr.mxu0 0.0
    %389 = vmatpush1.msra.mxu0 %v198
    %390 = vmatprep.subr.mxu0 0.0
    %391 = vmatpush2.msra.mxu0 0.0
    %392 = vmatprep.subr.mxu0 0.0
    %393 = vmatpush2.msra.mxu0 0.0
    %394 = vmatprep.subr.mxu0 0.0
    %395 = vmatpush2.msra.mxu0 0.0
    %396 = vmatprep.subr.mxu0 0.0
    %397 = vmatpush2.msra.mxu0 0.0
    %398 = vmatprep.subr.mxu0 0.0
    %399 = vmatpush2.msra.mxu0 0.0
    %400 = vmatprep.subr.mxu0 0.0
    %401 = vmatpush2.msra.mxu0 0.0
    %402 = vmatprep.subr.mxu0 0.0
    %403 = vmatpush2.msra.mxu0 0.0
    %404 = vmatprep.subr.mxu0 0.0
    %405 = vmatpush2.msra.mxu0 0.0
    %406 = vmatprep.subr.mxu0 0.0
    %407 = vmatpush2.msra.mxu0 0.0
    %408 = vmatprep.subr.mxu0 0.0
    %409 = vmatpush2.msra.mxu0 0.0
    %410 = vmatprep.subr.mxu0 0.0
    %411 = vmatpush2.msra.mxu0 0.0
    %412 = vmatprep.subr.mxu0 0.0
    %413 = vmatpush2.msra.mxu0 0.0
    %414 = vmatprep.subr.mxu0 0.0
    %415 = vmatpush2.msra.mxu0 0.0
    %416 = vmatprep.subr.mxu0 0.0
    %417 = vmatpush2.msra.mxu0 0.0
    %418 = vmatprep.subr.mxu0 0.0
    %419 = vmatpush2.msra.mxu0 0.0
    %420 = vmatprep.subr.mxu0 0.0
    %421 = vmatpush2.msra.mxu0 0.0
    %422 = vmatprep.mubr.f32.mxu0 0.0
    %423 = vmatmul.mubr.f32.gmra.mxu0 %v353
    %v424 = vpop.f32.mrf.mxu0
    %v425 = vadd.f32 %v349, %v424
    %v426 = vpop.f32.mrf.mxu0
    %427 = vmatprep.mubr.f32.mxu0 0.0
    %428 = vmatmul.mubr.f32.gmra.mxu0 %v356
    %v429 = vpop.f32.mrf.mxu0
    %v430 = vadd.f32 %v349, %v429
    %v431 = vpop.f32.mrf.mxu0
    %432 = vdwg.mxu0
    %v434 = vlaneseq
    %v435 = vshrl.u32 %v434, 7
    %v436 = vsub.s32 0, %v435
    %v437 = vrot.slane %v207, %v436
    %v440 = vsel %vm351, 0.0, 0
    %442 = vmatprep.subr.mxu0 0.0
    %443 = vmatpush1.msra.mxu0 0.0
    %444 = vmatprep.subr.mxu0 0.0
    %445 = vmatpush1.msra.mxu0 0.0
    %446 = vmatprep.subr.mxu0 0.0
    %447 = vmatpush1.msra.mxu0 0.0
    %448 = vmatprep.subr.mxu0 0.0
    %449 = vmatpush1.msra.mxu0 0.0
    %450 = vmatprep.subr.mxu0 0.0
    %451 = vmatpush1.msra.mxu0 0.0
    %452 = vmatprep.subr.mxu0 0.0
    %453 = vmatpush1.msra.mxu0 0.0
    %454 = vmatprep.subr.mxu0 0.0
    %455 = vmatpush1.msra.mxu0 0.0
    %456 = vmatprep.subr.mxu0 0.0
    %457 = vmatpush1.msra.mxu0 0.0
    %458 = vmatprep.subr.mxu0 0.0
    %459 = vmatpush1.msra.mxu0 0.0
    %460 = vmatprep.subr.mxu0 0.0
    %461 = vmatpush1.msra.mxu0 0.0
    %462 = vmatprep.subr.mxu0 0.0
    %463 = vmatpush1.msra.mxu0 0.0
    %464 = vmatprep.subr.mxu0 0.0
    %465 = vmatpush1.msra.mxu0 0.0
    %466 = vmatprep.subr.mxu0 0.0
    %467 = vmatpush1.msra.mxu0 %v205
    %468 = vmatprep.subr.mxu0 0.0
    %469 = vmatpush1.msra.mxu0 %v204
    %470 = vmatprep.subr.mxu0 0.0
    %471 = vmatpush1.msra.mxu0 %v203
    %472 = vmatprep.subr.mxu0 0.0
    %473 = vmatpush1.msra.mxu0 %v202
    %474 = vmatprep.subr.mxu0 0.0
    %475 = vmatpush2.msra.mxu0 0.0
    %476 = vmatprep.subr.mxu0 0.0
    %477 = vmatpush2.msra.mxu0 0.0
    %478 = vmatprep.subr.mxu0 0.0
    %479 = vmatpush2.msra.mxu0 0.0
    %480 = vmatprep.subr.mxu0 0.0
    %481 = vmatpush2.msra.mxu0 0.0
    %482 = vmatprep.subr.mxu0 0.0
    %483 = vmatpush2.msra.mxu0 0.0
    %484 = vmatprep.subr.mxu0 0.0
    %485 = vmatpush2.msra.mxu0 0.0
    %486 = vmatprep.subr.mxu0 0.0
    %487 = vmatpush2.msra.mxu0 0.0
    %488 = vmatprep.subr.mxu0 0.0
    %489 = vmatpush2.msra.mxu0 0.0
    %490 = vmatprep.subr.mxu0 0.0
    %491 = vmatpush2.msra.mxu0 0.0
    %492 = vmatprep.subr.mxu0 0.0
    %493 = vmatpush2.msra.mxu0 0.0
    %494 = vmatprep.subr.mxu0 0.0
    %495 = vmatpush2.msra.mxu0 0.0
    %496 = vmatprep.subr.mxu0 0.0
    %497 = vmatpush2.msra.mxu0 0.0
    %498 = vmatprep.subr.mxu0 0.0
    %499 = vmatpush2.msra.mxu0 0.0
    %500 = vmatprep.subr.mxu0 0.0
    %501 = vmatpush2.msra.mxu0 0.0
    %502 = vmatprep.subr.mxu0 0.0
    %503 = vmatpush2.msra.mxu0 0.0
    %504 = vmatprep.subr.mxu0 0.0
    %505 = vmatpush2.msra.mxu0 0.0
    %506 = vmatprep.mubr.f32.mxu0 0.0
    %507 = vmatmul.mubr.f32.gmra.mxu0 %v440
    %v508 = vpop.f32.mrf.mxu0
    %v509 = vadd.f32 %v437, %v508
    %v510 = vpop.f32.mrf.mxu0
    %511 = vdwg.mxu0
    %v513 = vrot.slane %v509, 1
    %v516 = vadd.f32 %v425, %v509
    %v517 = vadd.f32 %v430, %v513
    %v518 = vxor.u32 %v516, 2147483648
    %v519 = vxor.u32 %v517, 2147483648
    %v520 = vmul.f32 %v518, 1.442695
    %v521 = vpow.pop %v520
    %v522 = vmul.f32 %v519, 1.442695
    %v523 = vpow.pop %v522
    %v524 = vadd.f32 %v521, 1.0
    %v525 = vadd.f32 %v523, 1.0
    %v526 = vrcp.pop %v524
    %v527 = vmul.f32 1.0, %v526
    %v528 = vrcp.pop %v525
    %v529 = vmul.f32 1.0, %v528
    %530 = vrot.lane.b32.xlu0 %v509, 64
    %v531 = vpop.permute.xlu0 %530
    %532 = vrot.lane.b32.xlu0 %v513, 64
    %v533 = vpop.permute.xlu0 %532
    %v536 = vmul.f32 %v527, %v531
    %v537 = vmul.f32 %v529, %v533
    %540 = vrot.lane.b32.xlu0 %v536, 64
    %v541 = vpop.permute.xlu0 %540
    %542 = vrot.lane.b32.xlu0 %v537, 64
    %v543 = vpop.permute.xlu0 %542
    %v546 = vadd.f32 %v425, %v541
    %v547 = vadd.f32 %v430, %v543
    %v548 = vtanh.pop %v546
    %v549 = vtanh.pop %v547
    %v550 = vsub.f32 1.0, %v527
    %v551 = vsub.f32 1.0, %v529
    %554 = vrot.lane.b32.xlu0 %v548, 96
    %v555 = vpop.permute.xlu0 %554
    %556 = vrot.lane.b32.xlu0 %v549, 96
    %v557 = vpop.permute.xlu0 %556
    %v560 = vmul.f32 %v550, %v555
    %v561 = vmul.f32 %v551, %v557
    %v562 = vmul.f32 %v527, 0.0
    %v563 = vmul.f32 %v529, 0.0
    %v564 = vadd.f32 %v560, %v562
    %v565 = vadd.f32 %v561, %v563
    %v568 = vrot.slane %v565, 7
    %vm569 = vcmask 1041409
    %v570 = vsel %vm569, %v568, %v564
    %571 = vrot.lane.b32.xlu0 %v570, 96
    %v572 = vpop.permute.xlu0 %571
    %v573 = vsel %vm351, %v572, 0
    %575 = vmatprep.subr.mxu0 0.0
    %576 = vmatpush1.msra.mxu0 0.0
    %577 = vmatprep.subr.mxu0 0.0
    %578 = vmatpush1.msra.mxu0 0.0
    %579 = vmatprep.subr.mxu0 0.0
    %580 = vmatpush1.msra.mxu0 0.0
    %581 = vmatprep.subr.mxu0 0.0
    %582 = vmatpush1.msra.mxu0 0.0
    %583 = vmatprep.subr.mxu0 0.0
    %584 = vmatpush1.msra.mxu0 0.0
    %585 = vmatprep.subr.mxu0 0.0
    %586 = vmatpush1.msra.mxu0 0.0
    %587 = vmatprep.subr.mxu0 0.0
    %588 = vmatpush1.msra.mxu0 0.0
    %589 = vmatprep.subr.mxu0 0.0
    %590 = vmatpush1.msra.mxu0 0.0
    %591 = vmatprep.subr.mxu0 0.0
    %592 = vmatpush1.msra.mxu0 0.0
    %593 = vmatprep.subr.mxu0 0.0
    %594 = vmatpush1.msra.mxu0 0.0
    %595 = vmatprep.subr.mxu0 0.0
    %596 = vmatpush1.msra.mxu0 0.0
    %597 = vmatprep.subr.mxu0 0.0
    %598 = vmatpush1.msra.mxu0 0.0
    %599 = vmatprep.subr.mxu0 0.0
    %600 = vmatpush1.msra.mxu0 %v205
    %601 = vmatprep.subr.mxu0 0.0
    %602 = vmatpush1.msra.mxu0 %v204
    %603 = vmatprep.subr.mxu0 0.0
    %604 = vmatpush1.msra.mxu0 %v203
    %605 = vmatprep.subr.mxu0 0.0
    %606 = vmatpush1.msra.mxu0 %v202
    %607 = vmatprep.subr.mxu0 0.0
    %608 = vmatpush2.msra.mxu0 0.0
    %609 = vmatprep.subr.mxu0 0.0
    %610 = vmatpush2.msra.mxu0 0.0
    %611 = vmatprep.subr.mxu0 0.0
    %612 = vmatpush2.msra.mxu0 0.0
    %613 = vmatprep.subr.mxu0 0.0
    %614 = vmatpush2.msra.mxu0 0.0
    %615 = vmatprep.subr.mxu0 0.0
    %616 = vmatpush2.msra.mxu0 0.0
    %617 = vmatprep.subr.mxu0 0.0
    %618 = vmatpush2.msra.mxu0 0.0
    %619 = vmatprep.subr.mxu0 0.0
    %620 = vmatpush2.msra.mxu0 0.0
    %621 = vmatprep.subr.mxu0 0.0
    %622 = vmatpush2.msra.mxu0 0.0
    %623 = vmatprep.subr.mxu0 0.0
    %624 = vmatpush2.msra.mxu0 0.0
    %625 = vmatprep.subr.mxu0 0.0
    %626 = vmatpush2.msra.mxu0 0.0
    %627 = vmatprep.subr.mxu0 0.0
    %628 = vmatpush2.msra.mxu0 0.0
    %629 = vmatprep.subr.mxu0 0.0
    %630 = vmatpush2.msra.mxu0 0.0
    %631 = vmatprep.subr.mxu0 0.0
    %632 = vmatpush2.msra.mxu0 0.0
    %633 = vmatprep.subr.mxu0 0.0
    %634 = vmatpush2.msra.mxu0 0.0
    %635 = vmatprep.subr.mxu0 0.0
    %636 = vmatpush2.msra.mxu0 0.0
    %637 = vmatprep.subr.mxu0 0.0
    %638 = vmatpush2.msra.mxu0 0.0
    %639 = vmatprep.mubr.f32.mxu0 0.0
    %640 = vmatmul.mubr.f32.gmra.mxu0 %v573
    %v641 = vpop.f32.mrf.mxu0
    %v642 = vadd.f32 %v437, %v641
    %v643 = vpop.f32.mrf.mxu0
    %644 = vdwg.mxu0
    %v646 = vrot.slane %v642, 7
    %v649 = vadd.f32 %v425, %v646
    %v650 = vadd.f32 %v430, %v642
    %v651 = vxor.u32 %v649, 2147483648
    %v652 = vxor.u32 %v650, 2147483648
    %v653 = vmul.f32 %v651, 1.442695
    %v654 = vpow.pop %v653
    %v655 = vmul.f32 %v652, 1.442695
    %v656 = vpow.pop %v655
    %v657 = vadd.f32 %v654, 1.0
    %v658 = vadd.f32 %v656, 1.0
    %v659 = vrcp.pop %v657
    %v660 = vmul.f32 1.0, %v659
    %v661 = vrcp.pop %v658
    %v662 = vmul.f32 1.0, %v661
    %663 = vrot.lane.b32.xlu0 %v646, 64
    %v664 = vpop.permute.xlu0 %663
    %665 = vrot.lane.b32.xlu0 %v642, 64
    %v666 = vpop.permute.xlu0 %665
    %v669 = vmul.f32 %v660, %v664
    %v670 = vmul.f32 %v662, %v666
    %673 = vrot.lane.b32.xlu0 %v669, 64
    %v674 = vpop.permute.xlu0 %673
    %675 = vrot.lane.b32.xlu0 %v670, 64
    %v676 = vpop.permute.xlu0 %675
    %v679 = vadd.f32 %v425, %v674
    %v680 = vadd.f32 %v430, %v676
    %v681 = vtanh.pop %v679
    %v682 = vtanh.pop %v680
    %v683 = vsub.f32 1.0, %v660
    %v684 = vsub.f32 1.0, %v662
    %687 = vrot.lane.b32.xlu0 %v681, 96
    %v688 = vpop.permute.xlu0 %687
    %689 = vrot.lane.b32.xlu0 %v682, 96
    %v690 = vpop.permute.xlu0 %689
    %v693 = vmul.f32 %v683, %v688
    %v694 = vmul.f32 %v684, %v690
    %v695 = vrot.slane %v564, 7
    %v698 = vmul.f32 %v660, %v695
    %v699 = vmul.f32 %v662, %v568
    %v700 = vadd.f32 %v693, %v698
    %v701 = vadd.f32 %v694, %v699
    %v704 = vrot.slane %v700, 1
    %v705 = vsel %vm569, %v701, %v704
    %706 = vrot.lane.b32.xlu0 %v705, 96
    %v707 = vpop.permute.xlu0 %706
    %v708 = vsel %vm351, %v707, 0
    %710 = vmatprep.subr.mxu0 0.0
    %711 = vmatpush1.msra.mxu0 0.0
    %712 = vmatprep.subr.mxu0 0.0
    %713 = vmatpush1.msra.mxu0 0.0
    %714 = vmatprep.subr.mxu0 0.0
    %715 = vmatpush1.msra.mxu0 0.0
    %716 = vmatprep.subr.mxu0 0.0
    %717 = vmatpush1.msra.mxu0 0.0
    %718 = vmatprep.subr.mxu0 0.0
    %719 = vmatpush1.msra.mxu0 0.0
    %720 = vmatprep.subr.mxu0 0.0
    %721 = vmatpush1.msra.mxu0 0.0
    %722 = vmatprep.subr.mxu0 0.0
    %723 = vmatpush1.msra.mxu0 0.0
    %724 = vmatprep.subr.mxu0 0.0
    %725 = vmatpush1.msra.mxu0 0.0
    %726 = vmatprep.subr.mxu0 0.0
    %727 = vmatpush1.msra.mxu0 0.0
    %728 = vmatprep.subr.mxu0 0.0
    %729 = vmatpush1.msra.mxu0 0.0
    %730 = vmatprep.subr.mxu0 0.0
    %731 = vmatpush1.msra.mxu0 0.0
    %732 = vmatprep.subr.mxu0 0.0
    %733 = vmatpush1.msra.mxu0 0.0
    %734 = vmatprep.subr.mxu0 0.0
    %735 = vmatpush1.msra.mxu0 %v205
    %736 = vmatprep.subr.mxu0 0.0
    %737 = vmatpush1.msra.mxu0 %v204
    %738 = vmatprep.subr.mxu0 0.0
    %739 = vmatpush1.msra.mxu0 %v203
    %740 = vmatprep.subr.mxu0 0.0
    %741 = vmatpush1.msra.mxu0 %v202
    %742 = vmatprep.subr.mxu0 0.0
    %743 = vmatpush2.msra.mxu0 0.0
    %744 = vmatprep.subr.mxu0 0.0
    %745 = vmatpush2.msra.mxu0 0.0
    %746 = vmatprep.subr.mxu0 0.0
    %747 = vmatpush2.msra.mxu0 0.0
    %748 = vmatprep.subr.mxu0 0.0
    %749 = vmatpush2.msra.mxu0 0.0
    %750 = vmatprep.subr.mxu0 0.0
    %751 = vmatpush2.msra.mxu0 0.0
    %752 = vmatprep.subr.mxu0 0.0
    %753 = vmatpush2.msra.mxu0 0.0
    %754 = vmatprep.subr.mxu0 0.0
    %755 = vmatpush2.msra.mxu0 0.0
    %756 = vmatprep.subr.mxu0 0.0
    %757 = vmatpush2.msra.mxu0 0.0
    %758 = vmatprep.subr.mxu0 0.0
    %759 = vmatpush2.msra.mxu0 0.0
    %760 = vmatprep.subr.mxu0 0.0
    %761 = vmatpush2.msra.mxu0 0.0
    %762 = vmatprep.subr.mxu0 0.0
    %763 = vmatpush2.msra.mxu0 0.0
    %764 = vmatprep.subr.mxu0 0.0
    %765 = vmatpush2.msra.mxu0 0.0
    %766 = vmatprep.subr.mxu0 0.0
    %767 = vmatpush2.msra.mxu0 0.0
    %768 = vmatprep.subr.mxu0 0.0
    %769 = vmatpush2.msra.mxu0 0.0
    %770 = vmatprep.subr.mxu0 0.0
    %771 = vmatpush2.msra.mxu0 0.0
    %772 = vmatprep.subr.mxu0 0.0
    %773 = vmatpush2.msra.mxu0 0.0
    %774 = vmatprep.mubr.f32.mxu0 0.0
    %775 = vmatmul.mubr.f32.gmra.mxu0 %v708
    %v776 = vpop.f32.mrf.mxu0
    %v777 = vadd.f32 %v437, %v776
    %v778 = vpop.f32.mrf.mxu0
    %779 = vdwg.mxu0
    %v781 = vrot.slane %v777, 6
    %v782 = vrot.slane %v777, 7
    %v785 = vadd.f32 %v425, %v781
    %v786 = vadd.f32 %v430, %v782
    %v787 = vxor.u32 %v785, 2147483648
    %v788 = vxor.u32 %v786, 2147483648
    %v789 = vmul.f32 %v787, 1.442695
    %v790 = vpow.pop %v789
    %v791 = vmul.f32 %v788, 1.442695
    %v792 = vpow.pop %v791
    %v793 = vadd.f32 %v790, 1.0
    %v794 = vadd.f32 %v792, 1.0
    %v795 = vrcp.pop %v793
    %v796 = vmul.f32 1.0, %v795
    %v797 = vrcp.pop %v794
    %v798 = vmul.f32 1.0, %v797
    %799 = vrot.lane.b32.xlu0 %v781, 64
    %v800 = vpop.permute.xlu0 %799
    %801 = vrot.lane.b32.xlu0 %v782, 64
    %v802 = vpop.permute.xlu0 %801
    %v805 = vmul.f32 %v796, %v800
    %v806 = vmul.f32 %v798, %v802
    %809 = vrot.lane.b32.xlu0 %v805, 64
    %v810 = vpop.permute.xlu0 %809
    %811 = vrot.lane.b32.xlu0 %v806, 64
    %v812 = vpop.permute.xlu0 %811
    %v815 = vadd.f32 %v425, %v810
    %v816 = vadd.f32 %v430, %v812
    %v817 = vtanh.pop %v815
    %v818 = vtanh.pop %v816
    %v819 = vsub.f32 1.0, %v796
    %v820 = vsub.f32 1.0, %v798
    %823 = vrot.lane.b32.xlu0 %v817, 96
    %v824 = vpop.permute.xlu0 %823
    %825 = vrot.lane.b32.xlu0 %v818, 96
    %v826 = vpop.permute.xlu0 %825
    %v829 = vmul.f32 %v819, %v824
    %v830 = vmul.f32 %v820, %v826
    %v831 = vrot.slane %v700, 7
    %v832 = vrot.slane %v701, 7
    %v835 = vmul.f32 %v796, %v831
    %v836 = vmul.f32 %v798, %v832
    %v837 = vadd.f32 %v829, %v835
    %v838 = vadd.f32 %v830, %v836
    %v841 = vrot.slane %v837, 2
    %v842 = vrot.slane %v838, 1
    %v843 = vsel %vm569, %v842, %v841
    %844 = vrot.lane.b32.xlu0 %v843, 96
    %v845 = vpop.permute.xlu0 %844
    %v846 = vsel %vm351, %v845, 0
    %848 = vmatprep.subr.mxu0 0.0
    %849 = vmatpush1.msra.mxu0 0.0
    %850 = vmatprep.subr.mxu0 0.0
    %851 = vmatpush1.msra.mxu0 0.0
    %852 = vmatprep.subr.mxu0 0.0
    %853 = vmatpush1.msra.mxu0 0.0
    %854 = vmatprep.subr.mxu0 0.0
    %855 = vmatpush1.msra.mxu0 0.0
    %856 = vmatprep.subr.mxu0 0.0
    %857 = vmatpush1.msra.mxu0 0.0
    %858 = vmatprep.subr.mxu0 0.0
    %859 = vmatpush1.msra.mxu0 0.0
    %860 = vmatprep.subr.mxu0 0.0
    %861 = vmatpush1.msra.mxu0 0.0
    %862 = vmatprep.subr.mxu0 0.0
    %863 = vmatpush1.msra.mxu0 0.0
    %864 = vmatprep.subr.mxu0 0.0
    %865 = vmatpush1.msra.mxu0 0.0
    %866 = vmatprep.subr.mxu0 0.0
    %867 = vmatpush1.msra.mxu0 0.0
    %868 = vmatprep.subr.mxu0 0.0
    %869 = vmatpush1.msra.mxu0 0.0
    %870 = vmatprep.subr.mxu0 0.0
    %871 = vmatpush1.msra.mxu0 0.0
    %872 = vmatprep.subr.mxu0 0.0
    %873 = vmatpush1.msra.mxu0 %v205
    %874 = vmatprep.subr.mxu0 0.0
    %875 = vmatpush1.msra.mxu0 %v204
    %876 = vmatprep.subr.mxu0 0.0
    %877 = vmatpush1.msra.mxu0 %v203
    %878 = vmatprep.subr.mxu0 0.0
    %879 = vmatpush1.msra.mxu0 %v202
    %880 = vmatprep.subr.mxu0 0.0
    %881 = vmatpush2.msra.mxu0 0.0
    %882 = vmatprep.subr.mxu0 0.0
    %883 = vmatpush2.msra.mxu0 0.0
    %884 = vmatprep.subr.mxu0 0.0
    %885 = vmatpush2.msra.mxu0 0.0
    %886 = vmatprep.subr.mxu0 0.0
    %887 = vmatpush2.msra.mxu0 0.0
    %888 = vmatprep.subr.mxu0 0.0
    %889 = vmatpush2.msra.mxu0 0.0
    %890 = vmatprep.subr.mxu0 0.0
    %891 = vmatpush2.msra.mxu0 0.0
    %892 = vmatprep.subr.mxu0 0.0
    %893 = vmatpush2.msra.mxu0 0.0
    %894 = vmatprep.subr.mxu0 0.0
    %895 = vmatpush2.msra.mxu0 0.0
    %896 = vmatprep.subr.mxu0 0.0
    %897 = vmatpush2.msra.mxu0 0.0
    %898 = vmatprep.subr.mxu0 0.0
    %899 = vmatpush2.msra.mxu0 0.0
    %900 = vmatprep.subr.mxu0 0.0
    %901 = vmatpush2.msra.mxu0 0.0
    %902 = vmatprep.subr.mxu0 0.0
    %903 = vmatpush2.msra.mxu0 0.0
    %904 = vmatprep.subr.mxu0 0.0
    %905 = vmatpush2.msra.mxu0 0.0
    %906 = vmatprep.subr.mxu0 0.0
    %907 = vmatpush2.msra.mxu0 0.0
    %908 = vmatprep.subr.mxu0 0.0
    %909 = vmatpush2.msra.mxu0 0.0
    %910 = vmatprep.subr.mxu0 0.0
    %911 = vmatpush2.msra.mxu0 0.0
    %912 = vmatprep.mubr.f32.mxu0 0.0
    %913 = vmatmul.mubr.f32.gmra.mxu0 %v846
    %v914 = vpop.f32.mrf.mxu0
    %v915 = vadd.f32 %v437, %v914
    %v916 = vpop.f32.mrf.mxu0
    %917 = vdwg.mxu0
    %v919 = vrot.slane %v915, 5
    %v920 = vrot.slane %v915, 6
    %v923 = vadd.f32 %v425, %v919
    %v924 = vadd.f32 %v430, %v920
    %v925 = vxor.u32 %v923, 2147483648
    %v926 = vxor.u32 %v924, 2147483648
    %v927 = vmul.f32 %v925, 1.442695
    %v928 = vpow.pop %v927
    %v929 = vmul.f32 %v926, 1.442695
    %v930 = vpow.pop %v929
    %v931 = vadd.f32 %v928, 1.0
    %v932 = vadd.f32 %v930, 1.0
    %v933 = vrcp.pop %v931
    %v934 = vmul.f32 1.0, %v933
    %v935 = vrcp.pop %v932
    %v936 = vmul.f32 1.0, %v935
    %937 = vrot.lane.b32.xlu0 %v919, 64
    %v938 = vpop.permute.xlu0 %937
    %939 = vrot.lane.b32.xlu0 %v920, 64
    %v940 = vpop.permute.xlu0 %939
    %v943 = vmul.f32 %v934, %v938
    %v944 = vmul.f32 %v936, %v940
    %947 = vrot.lane.b32.xlu0 %v943, 64
    %v948 = vpop.permute.xlu0 %947
    %949 = vrot.lane.b32.xlu0 %v944, 64
    %v950 = vpop.permute.xlu0 %949
    %v953 = vadd.f32 %v425, %v948
    %v954 = vadd.f32 %v430, %v950
    %v955 = vtanh.pop %v953
    %v956 = vtanh.pop %v954
    %v957 = vsub.f32 1.0, %v934
    %v958 = vsub.f32 1.0, %v936
    %961 = vrot.lane.b32.xlu0 %v955, 96
    %v962 = vpop.permute.xlu0 %961
    %963 = vrot.lane.b32.xlu0 %v956, 96
    %v964 = vpop.permute.xlu0 %963
    %v967 = vmul.f32 %v957, %v962
    %v968 = vmul.f32 %v958, %v964
    %v969 = vrot.slane %v837, 7
    %v970 = vrot.slane %v838, 7
    %v973 = vmul.f32 %v934, %v969
    %v974 = vmul.f32 %v936, %v970
    %v975 = vadd.f32 %v967, %v973
    %v976 = vadd.f32 %v968, %v974
    %v979 = vrot.slane %v975, 3
    %v980 = vrot.slane %v976, 2
    %v981 = vsel %vm569, %v980, %v979
    %982 = vrot.lane.b32.xlu0 %v981, 96
    %v983 = vpop.permute.xlu0 %982
    %v984 = vsel %vm351, %v983, 0
    %986 = vmatprep.subr.mxu0 0.0
    %987 = vmatpush1.msra.mxu0 0.0
    %988 = vmatprep.subr.mxu0 0.0
    %989 = vmatpush1.msra.mxu0 0.0
    %990 = vmatprep.subr.mxu0 0.0
    %991 = vmatpush1.msra.mxu0 0.0
    %992 = vmatprep.subr.mxu0 0.0
    %993 = vmatpush1.msra.mxu0 0.0
    %994 = vmatprep.subr.mxu0 0.0
    %995 = vmatpush1.msra.mxu0 0.0
    %996 = vmatprep.subr.mxu0 0.0
    %997 = vmatpush1.msra.mxu0 0.0
    %998 = vmatprep.subr.mxu0 0.0
    %999 = vmatpush1.msra.mxu0 0.0
    %1000 = vmatprep.subr.mxu0 0.0
    %1001 = vmatpush1.msra.mxu0 0.0
    %1002 = vmatprep.subr.mxu0 0.0
    %1003 = vmatpush1.msra.mxu0 0.0
    %1004 = vmatprep.subr.mxu0 0.0
    %1005 = vmatpush1.msra.mxu0 0.0
    %1006 = vmatprep.subr.mxu0 0.0
    %1007 = vmatpush1.msra.mxu0 0.0
    %1008 = vmatprep.subr.mxu0 0.0
    %1009 = vmatpush1.msra.mxu0 0.0
    %1010 = vmatprep.subr.mxu0 0.0
    %1011 = vmatpush1.msra.mxu0 %v205
    %1012 = vmatprep.subr.mxu0 0.0
    %1013 = vmatpush1.msra.mxu0 %v204
    %1014 = vmatprep.subr.mxu0 0.0
    %1015 = vmatpush1.msra.mxu0 %v203
    %1016 = vmatprep.subr.mxu0 0.0
    %1017 = vmatpush1.msra.mxu0 %v202
    %1018 = vmatprep.subr.mxu0 0.0
    %1019 = vmatpush2.msra.mxu0 0.0
    %1020 = vmatprep.subr.mxu0 0.0
    %1021 = vmatpush2.msra.mxu0 0.0
    %1022 = vmatprep.subr.mxu0 0.0
    %1023 = vmatpush2.msra.mxu0 0.0
    %1024 = vmatprep.subr.mxu0 0.0
    %1025 = vmatpush2.msra.mxu0 0.0
    %1026 = vmatprep.subr.mxu0 0.0
    %1027 = vmatpush2.msra.mxu0 0.0
    %1028 = vmatprep.subr.mxu0 0.0
    %1029 = vmatpush2.msra.mxu0 0.0
    %1030 = vmatprep.subr.mxu0 0.0
    %1031 = vmatpush2.msra.mxu0 0.0
    %1032 = vmatprep.subr.mxu0 0.0
    %1033 = vmatpush2.msra.mxu0 0.0
    %1034 = vmatprep.subr.mxu0 0.0
    %1035 = vmatpush2.msra.mxu0 0.0
    %1036 = vmatprep.subr.mxu0 0.0
    %1037 = vmatpush2.msra.mxu0 0.0
    %1038 = vmatprep.subr.mxu0 0.0
    %1039 = vmatpush2.msra.mxu0 0.0
    %1040 = vmatprep.subr.mxu0 0.0
    %1041 = vmatpush2.msra.mxu0 0.0
    %1042 = vmatprep.subr.mxu0 0.0
    %1043 = vmatpush2.msra.mxu0 0.0
    %1044 = vmatprep.subr.mxu0 0.0
    %1045 = vmatpush2.msra.mxu0 0.0
    %1046 = vmatprep.subr.mxu0 0.0
    %1047 = vmatpush2.msra.mxu0 0.0
    %1048 = vmatprep.subr.mxu0 0.0
    %1049 = vmatpush2.msra.mxu0 0.0
    %1050 = vmatprep.mubr.f32.mxu0 0.0
    %1051 = vmatmul.mubr.f32.gmra.mxu0 %v984
    %v1052 = vpop.f32.mrf.mxu0
    %v1053 = vadd.f32 %v437, %v1052
    %v1054 = vpop.f32.mrf.mxu0
    %1055 = vdwg.mxu0
    %v1057 = vrot.slane %v1053, 4
    %v1058 = vrot.slane %v1053, 5
    %v1061 = vadd.f32 %v425, %v1057
    %v1062 = vadd.f32 %v430, %v1058
    %v1063 = vxor.u32 %v1061, 2147483648
    %v1064 = vxor.u32 %v1062, 2147483648
    %v1065 = vmul.f32 %v1063, 1.442695
    %v1066 = vpow.pop %v1065
    %v1067 = vmul.f32 %v1064, 1.442695
    %v1068 = vpow.pop %v1067
    %v1069 = vadd.f32 %v1066, 1.0
    %v1070 = vadd.f32 %v1068, 1.0
    %v1071 = vrcp.pop %v1069
    %v1072 = vmul.f32 1.0, %v1071
    %v1073 = vrcp.pop %v1070
    %v1074 = vmul.f32 1.0, %v1073
    %1075 = vrot.lane.b32.xlu0 %v1057, 64
    %v1076 = vpop.permute.xlu0 %1075
    %1077 = vrot.lane.b32.xlu0 %v1058, 64
    %v1078 = vpop.permute.xlu0 %1077
    %v1081 = vmul.f32 %v1072, %v1076
    %v1082 = vmul.f32 %v1074, %v1078
    %1085 = vrot.lane.b32.xlu0 %v1081, 64
    %v1086 = vpop.permute.xlu0 %1085
    %1087 = vrot.lane.b32.xlu0 %v1082, 64
    %v1088 = vpop.permute.xlu0 %1087
    %v1091 = vadd.f32 %v425, %v1086
    %v1092 = vadd.f32 %v430, %v1088
    %v1093 = vtanh.pop %v1091
    %v1094 = vtanh.pop %v1092
    %v1095 = vsub.f32 1.0, %v1072
    %v1096 = vsub.f32 1.0, %v1074
    %1099 = vrot.lane.b32.xlu0 %v1093, 96
    %v1100 = vpop.permute.xlu0 %1099
    %1101 = vrot.lane.b32.xlu0 %v1094, 96
    %v1102 = vpop.permute.xlu0 %1101
    %v1105 = vmul.f32 %v1095, %v1100
    %v1106 = vmul.f32 %v1096, %v1102
    %v1107 = vrot.slane %v975, 7
    %v1108 = vrot.slane %v976, 7
    %v1111 = vmul.f32 %v1072, %v1107
    %v1112 = vmul.f32 %v1074, %v1108
    %v1113 = vadd.f32 %v1105, %v1111
    %v1114 = vadd.f32 %v1106, %v1112
    %v1117 = vrot.slane %v1113, 4
    %v1118 = vrot.slane %v1114, 3
    %v1119 = vsel %vm569, %v1118, %v1117
    %1120 = vrot.lane.b32.xlu0 %v1119, 96
    %v1121 = vpop.permute.xlu0 %1120
    %v1122 = vsel %vm351, %v1121, 0
    %1124 = vmatprep.subr.mxu0 0.0
    %1125 = vmatpush1.msra.mxu0 0.0
    %1126 = vmatprep.subr.mxu0 0.0
    %1127 = vmatpush1.msra.mxu0 0.0
    %1128 = vmatprep.subr.mxu0 0.0
    %1129 = vmatpush1.msra.mxu0 0.0
    %1130 = vmatprep.subr.mxu0 0.0
    %1131 = vmatpush1.msra.mxu0 0.0
    %1132 = vmatprep.subr.mxu0 0.0
    %1133 = vmatpush1.msra.mxu0 0.0
    %1134 = vmatprep.subr.mxu0 0.0
    %1135 = vmatpush1.msra.mxu0 0.0
    %1136 = vmatprep.subr.mxu0 0.0
    %1137 = vmatpush1.msra.mxu0 0.0
    %1138 = vmatprep.subr.mxu0 0.0
    %1139 = vmatpush1.msra.mxu0 0.0
    %1140 = vmatprep.subr.mxu0 0.0
    %1141 = vmatpush1.msra.mxu0 0.0
    %1142 = vmatprep.subr.mxu0 0.0
    %1143 = vmatpush1.msra.mxu0 0.0
    %1144 = vmatprep.subr.mxu0 0.0
    %1145 = vmatpush1.msra.mxu0 0.0
    %1146 = vmatprep.subr.mxu0 0.0
    %1147 = vmatpush1.msra.mxu0 0.0
    %1148 = vmatprep.subr.mxu0 0.0
    %1149 = vmatpush1.msra.mxu0 %v205
    %1150 = vmatprep.subr.mxu0 0.0
    %1151 = vmatpush1.msra.mxu0 %v204
    %1152 = vmatprep.subr.mxu0 0.0
    %1153 = vmatpush1.msra.mxu0 %v203
    %1154 = vmatprep.subr.mxu0 0.0
    %1155 = vmatpush1.msra.mxu0 %v202
    %1156 = vmatprep.subr.mxu0 0.0
    %1157 = vmatpush2.msra.mxu0 0.0
    %1158 = vmatprep.subr.mxu0 0.0
    %1159 = vmatpush2.msra.mxu0 0.0
    %1160 = vmatprep.subr.mxu0 0.0
    %1161 = vmatpush2.msra.mxu0 0.0
    %1162 = vmatprep.subr.mxu0 0.0
    %1163 = vmatpush2.msra.mxu0 0.0
    %1164 = vmatprep.subr.mxu0 0.0
    %1165 = vmatpush2.msra.mxu0 0.0
    %1166 = vmatprep.subr.mxu0 0.0
    %1167 = vmatpush2.msra.mxu0 0.0
    %1168 = vmatprep.subr.mxu0 0.0
    %1169 = vmatpush2.msra.mxu0 0.0
    %1170 = vmatprep.subr.mxu0 0.0
    %1171 = vmatpush2.msra.mxu0 0.0
    %1172 = vmatprep.subr.mxu0 0.0
    %1173 = vmatpush2.msra.mxu0 0.0
    %1174 = vmatprep.subr.mxu0 0.0
    %1175 = vmatpush2.msra.mxu0 0.0
    %1176 = vmatprep.subr.mxu0 0.0
    %1177 = vmatpush2.msra.mxu0 0.0
    %1178 = vmatprep.subr.mxu0 0.0
    %1179 = vmatpush2.msra.mxu0 0.0
    %1180 = vmatprep.subr.mxu0 0.0
    %1181 = vmatpush2.msra.mxu0 0.0
    %1182 = vmatprep.subr.mxu0 0.0
    %1183 = vmatpush2.msra.mxu0 0.0
    %1184 = vmatprep.subr.mxu0 0.0
    %1185 = vmatpush2.msra.mxu0 0.0
    %1186 = vmatprep.subr.mxu0 0.0
    %1187 = vmatpush2.msra.mxu0 0.0
    %1188 = vmatprep.mubr.f32.mxu0 0.0
    %1189 = vmatmul.mubr.f32.gmra.mxu0 %v1122
    %v1190 = vpop.f32.mrf.mxu0
    %v1191 = vadd.f32 %v437, %v1190
    %v1192 = vpop.f32.mrf.mxu0
    %1193 = vdwg.mxu0
    %v1195 = vrot.slane %v1191, 3
    %v1196 = vrot.slane %v1191, 4
    %v1199 = vadd.f32 %v425, %v1195
    %v1200 = vadd.f32 %v430, %v1196
    %v1201 = vxor.u32 %v1199, 2147483648
    %v1202 = vxor.u32 %v1200, 2147483648
    %v1203 = vmul.f32 %v1201, 1.442695
    %v1204 = vpow.pop %v1203
    %v1205 = vmul.f32 %v1202, 1.442695
    %v1206 = vpow.pop %v1205
    %v1207 = vadd.f32 %v1204, 1.0
    %v1208 = vadd.f32 %v1206, 1.0
    %v1209 = vrcp.pop %v1207
    %v1210 = vmul.f32 1.0, %v1209
    %v1211 = vrcp.pop %v1208
    %v1212 = vmul.f32 1.0, %v1211
    %1213 = vrot.lane.b32.xlu0 %v1195, 64
    %v1214 = vpop.permute.xlu0 %1213
    %1215 = vrot.lane.b32.xlu0 %v1196, 64
    %v1216 = vpop.permute.xlu0 %1215
    %v1219 = vmul.f32 %v1210, %v1214
    %v1220 = vmul.f32 %v1212, %v1216
    %1223 = vrot.lane.b32.xlu0 %v1219, 64
    %v1224 = vpop.permute.xlu0 %1223
    %1225 = vrot.lane.b32.xlu0 %v1220, 64
    %v1226 = vpop.permute.xlu0 %1225
    %v1229 = vadd.f32 %v425, %v1224
    %v1230 = vadd.f32 %v430, %v1226
    %v1231 = vtanh.pop %v1229
    %v1232 = vtanh.pop %v1230
    %v1233 = vsub.f32 1.0, %v1210
    %v1234 = vsub.f32 1.0, %v1212
    %1237 = vrot.lane.b32.xlu0 %v1231, 96
    %v1238 = vpop.permute.xlu0 %1237
    %1239 = vrot.lane.b32.xlu0 %v1232, 96
    %v1240 = vpop.permute.xlu0 %1239
    %v1243 = vmul.f32 %v1233, %v1238
    %v1244 = vmul.f32 %v1234, %v1240
    %v1245 = vrot.slane %v1113, 7
    %v1246 = vrot.slane %v1114, 7
    %v1249 = vmul.f32 %v1210, %v1245
    %v1250 = vmul.f32 %v1212, %v1246
    %v1251 = vadd.f32 %v1243, %v1249
    %v1252 = vadd.f32 %v1244, %v1250
    %v1255 = vrot.slane %v1251, 5
    %v1256 = vrot.slane %v1252, 4
    %v1257 = vsel %vm569, %v1256, %v1255
    %1258 = vrot.lane.b32.xlu0 %v1257, 96
    %v1259 = vpop.permute.xlu0 %1258
    %v1260 = vsel %vm351, %v1259, 0
    %1262 = vmatprep.subr.mxu0 0.0
    %1263 = vmatpush1.msra.mxu0 0.0
    %1264 = vmatprep.subr.mxu0 0.0
    %1265 = vmatpush1.msra.mxu0 0.0
    %1266 = vmatprep.subr.mxu0 0.0
    %1267 = vmatpush1.msra.mxu0 0.0
    %1268 = vmatprep.subr.mxu0 0.0
    %1269 = vmatpush1.msra.mxu0 0.0
    %1270 = vmatprep.subr.mxu0 0.0
    %1271 = vmatpush1.msra.mxu0 0.0
    %1272 = vmatprep.subr.mxu0 0.0
    %1273 = vmatpush1.msra.mxu0 0.0
    %1274 = vmatprep.subr.mxu0 0.0
    %1275 = vmatpush1.msra.mxu0 0.0
    %1276 = vmatprep.subr.mxu0 0.0
    %1277 = vmatpush1.msra.mxu0 0.0
    %1278 = vmatprep.subr.mxu0 0.0
    %1279 = vmatpush1.msra.mxu0 0.0
    %1280 = vmatprep.subr.mxu0 0.0
    %1281 = vmatpush1.msra.mxu0 0.0
    %1282 = vmatprep.subr.mxu0 0.0
    %1283 = vmatpush1.msra.mxu0 0.0
    %1284 = vmatprep.subr.mxu0 0.0
    %1285 = vmatpush1.msra.mxu0 0.0
    %1286 = vmatprep.subr.mxu0 0.0
    %1287 = vmatpush1.msra.mxu0 %v205
    %1288 = vmatprep.subr.mxu0 0.0
    %1289 = vmatpush1.msra.mxu0 %v204
    %1290 = vmatprep.subr.mxu0 0.0
    %1291 = vmatpush1.msra.mxu0 %v203
    %1292 = vmatprep.subr.mxu0 0.0
    %1293 = vmatpush1.msra.mxu0 %v202
    %1294 = vmatprep.subr.mxu0 0.0
    %1295 = vmatpush2.msra.mxu0 0.0
    %1296 = vmatprep.subr.mxu0 0.0
    %1297 = vmatpush2.msra.mxu0 0.0
    %1298 = vmatprep.subr.mxu0 0.0
    %1299 = vmatpush2.msra.mxu0 0.0
    %1300 = vmatprep.subr.mxu0 0.0
    %1301 = vmatpush2.msra.mxu0 0.0
    %1302 = vmatprep.subr.mxu0 0.0
    %1303 = vmatpush2.msra.mxu0 0.0
    %1304 = vmatprep.subr.mxu0 0.0
    %1305 = vmatpush2.msra.mxu0 0.0
    %1306 = vmatprep.subr.mxu0 0.0
    %1307 = vmatpush2.msra.mxu0 0.0
    %1308 = vmatprep.subr.mxu0 0.0
    %1309 = vmatpush2.msra.mxu0 0.0
    %1310 = vmatprep.subr.mxu0 0.0
    %1311 = vmatpush2.msra.mxu0 0.0
    %1312 = vmatprep.subr.mxu0 0.0
    %1313 = vmatpush2.msra.mxu0 0.0
    %1314 = vmatprep.subr.mxu0 0.0
    %1315 = vmatpush2.msra.mxu0 0.0
    %1316 = vmatprep.subr.mxu0 0.0
    %1317 = vmatpush2.msra.mxu0 0.0
    %1318 = vmatprep.subr.mxu0 0.0
    %1319 = vmatpush2.msra.mxu0 0.0
    %1320 = vmatprep.subr.mxu0 0.0
    %1321 = vmatpush2.msra.mxu0 0.0
    %1322 = vmatprep.subr.mxu0 0.0
    %1323 = vmatpush2.msra.mxu0 0.0
    %1324 = vmatprep.subr.mxu0 0.0
    %1325 = vmatpush2.msra.mxu0 0.0
    %1326 = vmatprep.mubr.f32.mxu0 0.0
    %1327 = vmatmul.mubr.f32.gmra.mxu0 %v1260
    %v1328 = vpop.f32.mrf.mxu0
    %v1329 = vadd.f32 %v437, %v1328
    %v1330 = vpop.f32.mrf.mxu0
    %1331 = vdwg.mxu0
    %v1333 = vrot.slane %v1329, 2
    %v1334 = vrot.slane %v1329, 3
    %v1337 = vadd.f32 %v425, %v1333
    %v1338 = vadd.f32 %v430, %v1334
    %v1339 = vxor.u32 %v1337, 2147483648
    %v1340 = vxor.u32 %v1338, 2147483648
    %v1341 = vmul.f32 %v1339, 1.442695
    %v1342 = vpow.pop %v1341
    %v1343 = vmul.f32 %v1340, 1.442695
    %v1344 = vpow.pop %v1343
    %v1345 = vadd.f32 %v1342, 1.0
    %v1346 = vadd.f32 %v1344, 1.0
    %v1347 = vrcp.pop %v1345
    %v1348 = vmul.f32 1.0, %v1347
    %v1349 = vrcp.pop %v1346
    %v1350 = vmul.f32 1.0, %v1349
    %1351 = vrot.lane.b32.xlu0 %v1333, 64
    %v1352 = vpop.permute.xlu0 %1351
    %1353 = vrot.lane.b32.xlu0 %v1334, 64
    %v1354 = vpop.permute.xlu0 %1353
    %v1357 = vmul.f32 %v1348, %v1352
    %v1358 = vmul.f32 %v1350, %v1354
    %1361 = vrot.lane.b32.xlu0 %v1357, 64
    %v1362 = vpop.permute.xlu0 %1361
    %1363 = vrot.lane.b32.xlu0 %v1358, 64
    %v1364 = vpop.permute.xlu0 %1363
    %v1367 = vadd.f32 %v425, %v1362
    %v1368 = vadd.f32 %v430, %v1364
    %v1369 = vtanh.pop %v1367
    %v1370 = vtanh.pop %v1368
    %v1371 = vsub.f32 1.0, %v1348
    %v1372 = vsub.f32 1.0, %v1350
    %1375 = vrot.lane.b32.xlu0 %v1369, 96
    %v1376 = vpop.permute.xlu0 %1375
    %1377 = vrot.lane.b32.xlu0 %v1370, 96
    %v1378 = vpop.permute.xlu0 %1377
    %v1381 = vmul.f32 %v1371, %v1376
    %v1382 = vmul.f32 %v1372, %v1378
    %v1383 = vrot.slane %v1251, 7
    %v1384 = vrot.slane %v1252, 7
    %v1387 = vmul.f32 %v1348, %v1383
    %v1388 = vmul.f32 %v1350, %v1384
    %v1389 = vadd.f32 %v1381, %v1387
    %v1390 = vadd.f32 %v1382, %v1388
    %v1393 = vrot.slane %v1389, 6
    %v1394 = vrot.slane %v1390, 5
    %v1395 = vsel %vm569, %v1394, %v1393
    %1396 = vrot.lane.b32.xlu0 %v1395, 96
    %v1397 = vpop.permute.xlu0 %1396
    %v1398 = vsel %vm351, %v1397, 0
    %1400 = vmatprep.subr.mxu0 0.0
    %1401 = vmatpush1.msra.mxu0 0.0
    %1402 = vmatprep.subr.mxu0 0.0
    %1403 = vmatpush1.msra.mxu0 0.0
    %1404 = vmatprep.subr.mxu0 0.0
    %1405 = vmatpush1.msra.mxu0 0.0
    %1406 = vmatprep.subr.mxu0 0.0
    %1407 = vmatpush1.msra.mxu0 0.0
    %1408 = vmatprep.subr.mxu0 0.0
    %1409 = vmatpush1.msra.mxu0 0.0
    %1410 = vmatprep.subr.mxu0 0.0
    %1411 = vmatpush1.msra.mxu0 0.0
    %1412 = vmatprep.subr.mxu0 0.0
    %1413 = vmatpush1.msra.mxu0 0.0
    %1414 = vmatprep.subr.mxu0 0.0
    %1415 = vmatpush1.msra.mxu0 0.0
    %1416 = vmatprep.subr.mxu0 0.0
    %1417 = vmatpush1.msra.mxu0 0.0
    %1418 = vmatprep.subr.mxu0 0.0
    %1419 = vmatpush1.msra.mxu0 0.0
    %1420 = vmatprep.subr.mxu0 0.0
    %1421 = vmatpush1.msra.mxu0 0.0
    %1422 = vmatprep.subr.mxu0 0.0
    %1423 = vmatpush1.msra.mxu0 0.0
    %1424 = vmatprep.subr.mxu0 0.0
    %1425 = vmatpush1.msra.mxu0 %v205
    %1426 = vmatprep.subr.mxu0 0.0
    %1427 = vmatpush1.msra.mxu0 %v204
    %1428 = vmatprep.subr.mxu0 0.0
    %1429 = vmatpush1.msra.mxu0 %v203
    %1430 = vmatprep.subr.mxu0 0.0
    %1431 = vmatpush1.msra.mxu0 %v202
    %1432 = vmatprep.subr.mxu0 0.0
    %1433 = vmatpush2.msra.mxu0 0.0
    %1434 = vmatprep.subr.mxu0 0.0
    %1435 = vmatpush2.msra.mxu0 0.0
    %1436 = vmatprep.subr.mxu0 0.0
    %1437 = vmatpush2.msra.mxu0 0.0
    %1438 = vmatprep.subr.mxu0 0.0
    %1439 = vmatpush2.msra.mxu0 0.0
    %1440 = vmatprep.subr.mxu0 0.0
    %1441 = vmatpush2.msra.mxu0 0.0
    %1442 = vmatprep.subr.mxu0 0.0
    %1443 = vmatpush2.msra.mxu0 0.0
    %1444 = vmatprep.subr.mxu0 0.0
    %1445 = vmatpush2.msra.mxu0 0.0
    %1446 = vmatprep.subr.mxu0 0.0
    %1447 = vmatpush2.msra.mxu0 0.0
    %1448 = vmatprep.subr.mxu0 0.0
    %1449 = vmatpush2.msra.mxu0 0.0
    %1450 = vmatprep.subr.mxu0 0.0
    %1451 = vmatpush2.msra.mxu0 0.0
    %1452 = vmatprep.subr.mxu0 0.0
    %1453 = vmatpush2.msra.mxu0 0.0
    %1454 = vmatprep.subr.mxu0 0.0
    %1455 = vmatpush2.msra.mxu0 0.0
    %1456 = vmatprep.subr.mxu0 0.0
    %1457 = vmatpush2.msra.mxu0 0.0
    %1458 = vmatprep.subr.mxu0 0.0
    %1459 = vmatpush2.msra.mxu0 0.0
    %1460 = vmatprep.subr.mxu0 0.0
    %1461 = vmatpush2.msra.mxu0 0.0
    %1462 = vmatprep.subr.mxu0 0.0
    %1463 = vmatpush2.msra.mxu0 0.0
    %1464 = vmatprep.mubr.f32.mxu0 0.0
    %1465 = vmatmul.mubr.f32.gmra.mxu0 %v1398
    %v1466 = vpop.f32.mrf.mxu0
    %v1467 = vadd.f32 %v437, %v1466
    %v1468 = vpop.f32.mrf.mxu0
    %1469 = vdwg.mxu0
    %v1471 = vrot.slane %v1467, 1
    %v1472 = vrot.slane %v1467, 2
    %v1475 = vadd.f32 %v425, %v1471
    %v1476 = vadd.f32 %v430, %v1472
    %v1477 = vxor.u32 %v1475, 2147483648
    %v1478 = vxor.u32 %v1476, 2147483648
    %v1479 = vmul.f32 %v1477, 1.442695
    %v1480 = vpow.pop %v1479
    %v1481 = vmul.f32 %v1478, 1.442695
    %v1482 = vpow.pop %v1481
    %v1483 = vadd.f32 %v1480, 1.0
    %v1484 = vadd.f32 %v1482, 1.0
    %v1485 = vrcp.pop %v1483
    %v1486 = vmul.f32 1.0, %v1485
    %v1487 = vrcp.pop %v1484
    %v1488 = vmul.f32 1.0, %v1487
    %1489 = vrot.lane.b32.xlu0 %v1471, 64
    %v1490 = vpop.permute.xlu0 %1489
    %1491 = vrot.lane.b32.xlu0 %v1472, 64
    %v1492 = vpop.permute.xlu0 %1491
    %v1495 = vmul.f32 %v1486, %v1490
    %v1496 = vmul.f32 %v1488, %v1492
    %1499 = vrot.lane.b32.xlu0 %v1495, 64
    %v1500 = vpop.permute.xlu0 %1499
    %1501 = vrot.lane.b32.xlu0 %v1496, 64
    %v1502 = vpop.permute.xlu0 %1501
    %v1505 = vadd.f32 %v425, %v1500
    %v1506 = vadd.f32 %v430, %v1502
    %v1507 = vtanh.pop %v1505
    %v1508 = vtanh.pop %v1506
    %v1509 = vsub.f32 1.0, %v1486
    %v1510 = vsub.f32 1.0, %v1488
    %1513 = vrot.lane.b32.xlu0 %v1507, 96
    %v1514 = vpop.permute.xlu0 %1513
    %1515 = vrot.lane.b32.xlu0 %v1508, 96
    %v1516 = vpop.permute.xlu0 %1515
    %v1519 = vmul.f32 %v1509, %v1514
    %v1520 = vmul.f32 %v1510, %v1516
    %v1521 = vrot.slane %v1389, 7
    %v1522 = vrot.slane %v1390, 7
    %v1525 = vmul.f32 %v1486, %v1521
    %v1526 = vmul.f32 %v1488, %v1522
    %v1527 = vadd.f32 %v1519, %v1525
    %v1528 = vadd.f32 %v1520, %v1526
    %vm1529 = vcmask 1040384
    %v1530 = vsel %vm1529, %v564, %v700
    %v1531 = vsel %vm1529, %v565, %v701
    %vm1532 = vcmask 1041408
    %v1533 = vsel %vm1532, %v1530, %v837
    %v1534 = vsel %vm1532, %v1531, %v838
    %vm1535 = vcmask 1042432
    %v1536 = vsel %vm1535, %v1533, %v975
    %v1537 = vsel %vm1535, %v1534, %v976
    %vm1538 = vcmask 1043456
    %v1539 = vsel %vm1538, %v1536, %v1113
    %v1540 = vsel %vm1538, %v1537, %v1114
    %vm1541 = vcmask 1044480
    %v1542 = vsel %vm1541, %v1539, %v1251
    %v1543 = vsel %vm1541, %v1540, %v1252
    %vm1544 = vcmask 1045504
    %v1545 = vsel %vm1544, %v1542, %v1389
    %v1546 = vsel %vm1544, %v1543, %v1390
    %vm1547 = vcmask 1046528
    %v1548 = vsel %vm1547, %v1545, %v1527
    %v1549 = vsel %vm1547, %v1546, %v1528
    %v1551 = vlaneseq
    %v1552 = vshrl.u32 %v1551, 7
    %v1553 = vsub.s32 0, %v1552
    %v1554 = vrot.slane %v212, %v1553
    %1558 = vrot.lane.b32.xlu0 %v1548, 96
    %v1559 = vpop.permute.xlu0 %1558
    %1560 = vrot.lane.b32.xlu0 %v1549, 96
    %v1561 = vpop.permute.xlu0 %1560
    %v1562 = vsel %vm351, %v1559, 0
    %v1564 = vsel %vm351, %v1561, 0
    %1566 = vmatprep.subr.mxu0 0.0
    %1567 = vmatpush1.msra.mxu0 0.0
    %1568 = vmatprep.subr.mxu0 0.0
    %1569 = vmatpush1.msra.mxu0 0.0
    %1570 = vmatprep.subr.mxu0 0.0
    %1571 = vmatpush1.msra.mxu0 0.0
    %1572 = vmatprep.subr.mxu0 0.0
    %1573 = vmatpush1.msra.mxu0 0.0
    %1574 = vmatprep.subr.mxu0 0.0
    %1575 = vmatpush1.msra.mxu0 0.0
    %1576 = vmatprep.subr.mxu0 0.0
    %1577 = vmatpush1.msra.mxu0 0.0
    %1578 = vmatprep.subr.mxu0 0.0
    %1579 = vmatpush1.msra.mxu0 0.0
    %1580 = vmatprep.subr.mxu0 0.0
    %1581 = vmatpush1.msra.mxu0 0.0
    %1582 = vmatprep.subr.mxu0 0.0
    %1583 = vmatpush1.msra.mxu0 0.0
    %1584 = vmatprep.subr.mxu0 0.0
    %1585 = vmatpush1.msra.mxu0 0.0
    %1586 = vmatprep.subr.mxu0 0.0
    %1587 = vmatpush1.msra.mxu0 0.0
    %1588 = vmatprep.subr.mxu0 0.0
    %1589 = vmatpush1.msra.mxu0 0.0
    %1590 = vmatprep.subr.mxu0 0.0
    %1591 = vmatpush1.msra.mxu0 %v211
    %1592 = vmatprep.subr.mxu0 0.0
    %1593 = vmatpush1.msra.mxu0 %v210
    %1594 = vmatprep.subr.mxu0 0.0
    %1595 = vmatpush1.msra.mxu0 %v209
    %1596 = vmatprep.subr.mxu0 0.0
    %1597 = vmatpush1.msra.mxu0 %v208
    %1598 = vmatprep.subr.mxu0 0.0
    %1599 = vmatpush2.msra.mxu0 0.0
    %1600 = vmatprep.subr.mxu0 0.0
    %1601 = vmatpush2.msra.mxu0 0.0
    %1602 = vmatprep.subr.mxu0 0.0
    %1603 = vmatpush2.msra.mxu0 0.0
    %1604 = vmatprep.subr.mxu0 0.0
    %1605 = vmatpush2.msra.mxu0 0.0
    %1606 = vmatprep.subr.mxu0 0.0
    %1607 = vmatpush2.msra.mxu0 0.0
    %1608 = vmatprep.subr.mxu0 0.0
    %1609 = vmatpush2.msra.mxu0 0.0
    %1610 = vmatprep.subr.mxu0 0.0
    %1611 = vmatpush2.msra.mxu0 0.0
    %1612 = vmatprep.subr.mxu0 0.0
    %1613 = vmatpush2.msra.mxu0 0.0
    %1614 = vmatprep.subr.mxu0 0.0
    %1615 = vmatpush2.msra.mxu0 0.0
    %1616 = vmatprep.subr.mxu0 0.0
    %1617 = vmatpush2.msra.mxu0 0.0
    %1618 = vmatprep.subr.mxu0 0.0
    %1619 = vmatpush2.msra.mxu0 0.0
    %1620 = vmatprep.subr.mxu0 0.0
    %1621 = vmatpush2.msra.mxu0 0.0
    %1622 = vmatprep.subr.mxu0 0.0
    %1623 = vmatpush2.msra.mxu0 0.0
    %1624 = vmatprep.subr.mxu0 0.0
    %1625 = vmatpush2.msra.mxu0 0.0
    %1626 = vmatprep.subr.mxu0 0.0
    %1627 = vmatpush2.msra.mxu0 0.0
    %1628 = vmatprep.subr.mxu0 0.0
    %1629 = vmatpush2.msra.mxu0 0.0
    %1630 = vmatprep.mubr.f32.mxu0 0.0
    %1631 = vmatmul.mubr.f32.gmra.mxu0 %v1562
    %v1632 = vpop.f32.mrf.mxu0
    %v1633 = vadd.f32 %v1554, %v1632
    %v1634 = vpop.f32.mrf.mxu0
    %1635 = vmatprep.mubr.f32.mxu0 0.0
    %1636 = vmatmul.mubr.f32.gmra.mxu0 %v1564
    %v1637 = vpop.f32.mrf.mxu0
    %v1638 = vadd.f32 %v1554, %v1637
    %v1639 = vpop.f32.mrf.mxu0
    %1640 = vdwg.mxu0
    %v1642 = vlaneseq
    %v1643 = vshrl.u32 %v1642, 7
    %v1644 = vsub.s32 0, %v1643
    %v1645 = vrot.slane %v217, %v1644
    %v1648 = vlaneseq
    %v1649 = vshrl.u32 %v1648, 7
    %v1650 = vsub.s32 0, %v1649
    %v1651 = vrot.slane %v218, %v1650
    %v1654 = vlaneseq
    %v1655 = vshrl.u32 %v1654, 7
    %v1656 = vsub.s32 0, %v1655
    %v1657 = vrot.slane %v232, %v1656
    %v1659 = vlaneseq
    %v1660 = vshrl.u32 %v1659, 7
    %v1661 = vsub.s32 0, %v1660
    %v1662 = vrot.slane %v253, %v1661
    %v1664 = vlaneseq
    %v1665 = vand.u32 %v1664, 127
    %v1666 = vlaneseq
    %v1667 = vshrl.u32 %v1666, 7
    %v1668 = vsub.s32 0, %v1667
    %v1669 = vrot.slane %v256, %v1668
    %1671 = vbcast.lane.b32.xlu0 %v1669, 256
    %v1672 = vpop.permute.xlu0 %1671
    %v1673 = vlaneseq
    %v1674 = vshrl.u32 %v1673, 7
    %v1675 = vsub.s32 1, %v1674
    %v1676 = vrot.slane %v256, %v1675
    %1678 = vbcast.lane.b32.xlu0 %v1676, 256
    %v1679 = vpop.permute.xlu0 %1678
    %vm1680 = vcmp.eq.s32.totalorder %v1665, %v1672
    %vm1681 = vcmp.eq.s32.totalorder %v1665, %v1679
    %v1682 = vsel %vm1680, 1.0, 0.0
    %v1683 = vsel %vm1681, 1.0, 0.0
    %v1686 = vcombine.high %v1682, %v1682
    %v1688 = vunpack.c.l.s4 1966171168
    %v1689 = vunpack.c.0.s8 %v1688
    %v1690 = vlaneseq
    %v1691 = vshrl.u32 %v1690, 7
    %v1692 = vsub.s32 %v1689, %v1691
    %v1693 = vrot.slane %v1682, %v1692
    %v1695 = vunpack.c.l.s4 1966171168
    %v1696 = vunpack.c.0.s8 %v1695
    %v1697 = vlaneseq
    %v1698 = vshrl.u32 %v1697, 7
    %v1699 = vsub.s32 %v1696, %v1698
    %v1700 = vrot.slane %v1686, %v1699
    %v1701 = vcombine.high %v1693, %v1693
    %v1703 = vunpack.c.l.s4 1966171168
    %v1704 = vunpack.c.0.s8 %v1703
    %v1705 = vlaneseq
    %v1706 = vshrl.u32 %v1705, 7
    %v1707 = vsub.s32 %v1704, %v1706
    %v1708 = vrot.slane %v1693, %v1707
    %v1710 = vunpack.c.l.s4 1966171168
    %v1711 = vunpack.c.0.s8 %v1710
    %v1712 = vlaneseq
    %v1713 = vshrl.u32 %v1712, 7
    %v1714 = vsub.s32 %v1711, %v1713
    %v1715 = vrot.slane %v1700, %v1714
    %v1717 = vunpack.c.l.s4 1966171168
    %v1718 = vunpack.c.0.s8 %v1717
    %v1719 = vlaneseq
    %v1720 = vshrl.u32 %v1719, 7
    %v1721 = vsub.s32 %v1718, %v1720
    %v1722 = vrot.slane %v1701, %v1721
    %v1723 = vcombine.high %v1708, %v1708
    %v1724 = vcombine.high %v1722, %v1722
    %v1725 = vcombine.high %v1683, %v1683
    %v1727 = vunpack.c.l.s4 1966171168
    %v1728 = vunpack.c.0.s8 %v1727
    %v1729 = vlaneseq
    %v1730 = vshrl.u32 %v1729, 7
    %v1731 = vsub.s32 %v1728, %v1730
    %v1732 = vrot.slane %v1683, %v1731
    %v1734 = vunpack.c.l.s4 1966171168
    %v1735 = vunpack.c.0.s8 %v1734
    %v1736 = vlaneseq
    %v1737 = vshrl.u32 %v1736, 7
    %v1738 = vsub.s32 %v1735, %v1737
    %v1739 = vrot.slane %v1725, %v1738
    %v1740 = vcombine.high %v1732, %v1732
    %v1742 = vunpack.c.l.s4 1966171168
    %v1743 = vunpack.c.0.s8 %v1742
    %v1744 = vlaneseq
    %v1745 = vshrl.u32 %v1744, 7
    %v1746 = vsub.s32 %v1743, %v1745
    %v1747 = vrot.slane %v1732, %v1746
    %v1749 = vunpack.c.l.s4 1966171168
    %v1750 = vunpack.c.0.s8 %v1749
    %v1751 = vlaneseq
    %v1752 = vshrl.u32 %v1751, 7
    %v1753 = vsub.s32 %v1750, %v1752
    %v1754 = vrot.slane %v1739, %v1753
    %v1756 = vunpack.c.l.s4 1966171168
    %v1757 = vunpack.c.0.s8 %v1756
    %v1758 = vlaneseq
    %v1759 = vshrl.u32 %v1758, 7
    %v1760 = vsub.s32 %v1757, %v1759
    %v1761 = vrot.slane %v1740, %v1760
    %v1762 = vcombine.high %v1747, %v1747
    %v1763 = vcombine.high %v1761, %v1761
    %v1764 = vcombine.low %v1708, %v1722
    %v1765 = vcombine.low %v1723, %v1724
    %v1766 = vcombine.low %v1715, %v1747
    %v1767 = vcombine.low %v1761, %v1762
    %v1769 = vunpack.c.l.s4 1966171168
    %v1770 = vunpack.c.0.s8 %v1769
    %v1771 = vlaneseq
    %v1772 = vshrl.u32 %v1771, 7
    %v1773 = vsub.s32 %v1770, %v1772
    %v1774 = vrot.slane %v1764, %v1773
    %v1776 = vunpack.c.l.s4 1966171168
    %v1777 = vunpack.c.0.s8 %v1776
    %v1778 = vlaneseq
    %v1779 = vshrl.u32 %v1778, 7
    %v1780 = vsub.s32 %v1777, %v1779
    %v1781 = vrot.slane %v1765, %v1780
    %v1783 = vunpack.c.l.s4 1966171168
    %v1784 = vunpack.c.0.s8 %v1783
    %v1785 = vlaneseq
    %v1786 = vshrl.u32 %v1785, 7
    %v1787 = vsub.s32 %v1784, %v1786
    %v1788 = vrot.slane %v1766, %v1787
    %v1790 = vunpack.c.l.s4 1966171168
    %v1791 = vunpack.c.0.s8 %v1790
    %v1792 = vlaneseq
    %v1793 = vshrl.u32 %v1792, 7
    %v1794 = vsub.s32 %v1791, %v1793
    %v1795 = vrot.slane %v1767, %v1794
    %v1796 = vcombine.low %v1774, %v1781
    %v1797 = vcombine.low %v1788, %v1795
    %v1799 = vunpack.c.l.s4 1966171168
    %v1800 = vunpack.c.0.s8 %v1799
    %v1801 = vlaneseq
    %v1802 = vshrl.u32 %v1801, 7
    %v1803 = vsub.s32 %v1800, %v1802
    %v1804 = vrot.slane %v1796, %v1803
    %v1806 = vunpack.c.l.s4 1966171168
    %v1807 = vunpack.c.0.s8 %v1806
    %v1808 = vlaneseq
    %v1809 = vshrl.u32 %v1808, 7
    %v1810 = vsub.s32 %v1807, %v1809
    %v1811 = vrot.slane %v1797, %v1810
    %v1812 = vcombine.low %v1804, %v1811
    %v1813 = vcombine.low %v1763, %v1754
    %v1815 = vunpack.c.l.s4 1966171168
    %v1816 = vunpack.c.0.s8 %v1815
    %v1817 = vlaneseq
    %v1818 = vshrl.u32 %v1817, 7
    %v1819 = vsub.s32 %v1816, %v1818
    %v1820 = vrot.slane %v1813, %v1819
    %v1822 = vunpack.c.l.s4 1966171168
    %v1823 = vunpack.c.0.s8 %v1822
    %v1824 = vlaneseq
    %v1825 = vshrl.u32 %v1824, 7
    %v1826 = vsub.s32 %v1823, %v1825
    %v1827 = vrot.slane %v1820, %v1826
    %1830 = vmatprep.subr.mxu0 0.0
    %1831 = vmatpush1.msra.mxu0 %v248
    %1832 = vmatprep.subr.mxu0 0.0
    %1833 = vmatpush1.msra.mxu0 %v247
    %1834 = vmatprep.subr.mxu0 0.0
    %1835 = vmatpush1.msra.mxu0 %v246
    %1836 = vmatprep.subr.mxu0 0.0
    %1837 = vmatpush1.msra.mxu0 %v245
    %1838 = vmatprep.subr.mxu0 0.0
    %1839 = vmatpush1.msra.mxu0 %v244
    %1840 = vmatprep.subr.mxu0 0.0
    %1841 = vmatpush1.msra.mxu0 %v243
    %1842 = vmatprep.subr.mxu0 0.0
    %1843 = vmatpush1.msra.mxu0 %v242
    %1844 = vmatprep.subr.mxu0 0.0
    %1845 = vmatpush1.msra.mxu0 %v241
    %1846 = vmatprep.subr.mxu0 0.0
    %1847 = vmatpush1.msra.mxu0 %v240
    %1848 = vmatprep.subr.mxu0 0.0
    %1849 = vmatpush1.msra.mxu0 %v239
    %1850 = vmatprep.subr.mxu0 0.0
    %1851 = vmatpush1.msra.mxu0 %v238
    %1852 = vmatprep.subr.mxu0 0.0
    %1853 = vmatpush1.msra.mxu0 %v237
    %1854 = vmatprep.subr.mxu0 0.0
    %1855 = vmatpush1.msra.mxu0 %v236
    %1856 = vmatprep.subr.mxu0 0.0
    %1857 = vmatpush1.msra.mxu0 %v235
    %1858 = vmatprep.subr.mxu0 0.0
    %1859 = vmatpush1.msra.mxu0 %v234
    %1860 = vmatprep.subr.mxu0 0.0
    %1861 = vmatpush1.msra.mxu0 %v233
    %1862 = vmatprep.subr.mxu0 0.0
    %1863 = vmatpush2.msra.mxu0 0.0
    %1864 = vmatprep.subr.mxu0 0.0
    %1865 = vmatpush2.msra.mxu0 0.0
    %1866 = vmatprep.subr.mxu0 0.0
    %1867 = vmatpush2.msra.mxu0 0.0
    %1868 = vmatprep.subr.mxu0 0.0
    %1869 = vmatpush2.msra.mxu0 0.0
    %1870 = vmatprep.subr.mxu0 0.0
    %1871 = vmatpush2.msra.mxu0 0.0
    %1872 = vmatprep.subr.mxu0 0.0
    %1873 = vmatpush2.msra.mxu0 0.0
    %1874 = vmatprep.subr.mxu0 0.0
    %1875 = vmatpush2.msra.mxu0 0.0
    %1876 = vmatprep.subr.mxu0 0.0
    %1877 = vmatpush2.msra.mxu0 0.0
    %1878 = vmatprep.subr.mxu0 0.0
    %1879 = vmatpush2.msra.mxu0 0.0
    %1880 = vmatprep.subr.mxu0 0.0
    %1881 = vmatpush2.msra.mxu0 0.0
    %1882 = vmatprep.subr.mxu0 0.0
    %1883 = vmatpush2.msra.mxu0 0.0
    %1884 = vmatprep.subr.mxu0 0.0
    %1885 = vmatpush2.msra.mxu0 0.0
    %1886 = vmatprep.subr.mxu0 0.0
    %1887 = vmatpush2.msra.mxu0 0.0
    %1888 = vmatprep.subr.mxu0 0.0
    %1889 = vmatpush2.msra.mxu0 0.0
    %1890 = vmatprep.subr.mxu0 0.0
    %1891 = vmatpush2.msra.mxu0 0.0
    %1892 = vmatprep.subr.mxu0 0.0
    %1893 = vmatpush2.msra.mxu0 0.0
    %1894 = vmatprep.mubr.f32.mxu0 0.0
    %1895 = vmatmul.mubr.f32.gmra.mxu0 %v1812
    %v1896 = vpop.f32.mrf.mxu0
    %v1897 = vadd.f32 0.0, %v1896
    %v1898 = vpop.f32.mrf.mxu0
    %1899 = vmatprep.mubr.f32.mxu0 0.0
    %1900 = vmatmul.mubr.f32.gmra.mxu0 %v1827
    %v1901 = vpop.f32.mrf.mxu0
    %v1902 = vadd.f32 0.0, %v1901
    %v1903 = vpop.f32.mrf.mxu0
    %1904 = vdwg.mxu0
    %v1906 = vlaneseq
    %v1907 = vshrl.u32 %v1906, 7
    %v1908 = vsub.s32 0, %v1907
    %v1909 = vrot.slane %v231, %v1908
    %v1910 = vcombine.high %v1909, %v1909
    %v1912 = vunpack.c.l.s4 1966171168
    %v1913 = vunpack.c.0.s8 %v1912
    %v1914 = vlaneseq
    %v1915 = vshrl.u32 %v1914, 7
    %v1916 = vsub.s32 %v1913, %v1915
    %v1917 = vrot.slane %v1909, %v1916
    %v1919 = vunpack.c.l.s4 1966171168
    %v1920 = vunpack.c.0.s8 %v1919
    %v1921 = vlaneseq
    %v1922 = vshrl.u32 %v1921, 7
    %v1923 = vsub.s32 %v1920, %v1922
    %v1924 = vrot.slane %v1910, %v1923
    %v1925 = vcombine.high %v1917, %v1917
    %v1927 = vunpack.c.l.s4 1966171168
    %v1928 = vunpack.c.0.s8 %v1927
    %v1929 = vlaneseq
    %v1930 = vshrl.u32 %v1929, 7
    %v1931 = vsub.s32 %v1928, %v1930
    %v1932 = vrot.slane %v1917, %v1931
    %v1934 = vunpack.c.l.s4 1966171168
    %v1935 = vunpack.c.0.s8 %v1934
    %v1936 = vlaneseq
    %v1937 = vshrl.u32 %v1936, 7
    %v1938 = vsub.s32 %v1935, %v1937
    %v1939 = vrot.slane %v1924, %v1938
    %v1941 = vunpack.c.l.s4 1966171168
    %v1942 = vunpack.c.0.s8 %v1941
    %v1943 = vlaneseq
    %v1944 = vshrl.u32 %v1943, 7
    %v1945 = vsub.s32 %v1942, %v1944
    %v1946 = vrot.slane %v1925, %v1945
    %v1947 = vcombine.high %v1932, %v1932
    %v1948 = vcombine.high %v1946, %v1946
    %v1949 = vcombine.low %v1932, %v1946
    %v1950 = vcombine.low %v1947, %v1948
    %v1951 = vcombine.low %v1939, %v1932
    %v1952 = vcombine.low %v1946, %v1947
    %v1954 = vunpack.c.l.s4 1966171168
    %v1955 = vunpack.c.0.s8 %v1954
    %v1956 = vlaneseq
    %v1957 = vshrl.u32 %v1956, 7
    %v1958 = vsub.s32 %v1955, %v1957
    %v1959 = vrot.slane %v1949, %v1958
    %v1961 = vunpack.c.l.s4 1966171168
    %v1962 = vunpack.c.0.s8 %v1961
    %v1963 = vlaneseq
    %v1964 = vshrl.u32 %v1963, 7
    %v1965 = vsub.s32 %v1962, %v1964
    %v1966 = vrot.slane %v1950, %v1965
    %v1968 = vunpack.c.l.s4 1966171168
    %v1969 = vunpack.c.0.s8 %v1968
    %v1970 = vlaneseq
    %v1971 = vshrl.u32 %v1970, 7
    %v1972 = vsub.s32 %v1969, %v1971
    %v1973 = vrot.slane %v1951, %v1972
    %v1975 = vunpack.c.l.s4 1966171168
    %v1976 = vunpack.c.0.s8 %v1975
    %v1977 = vlaneseq
    %v1978 = vshrl.u32 %v1977, 7
    %v1979 = vsub.s32 %v1976, %v1978
    %v1980 = vrot.slane %v1952, %v1979
    %v1981 = vcombine.low %v1959, %v1966
    %v1982 = vcombine.low %v1973, %v1980
    %v1984 = vunpack.c.l.s4 1966171168
    %v1985 = vunpack.c.0.s8 %v1984
    %v1986 = vlaneseq
    %v1987 = vshrl.u32 %v1986, 7
    %v1988 = vsub.s32 %v1985, %v1987
    %v1989 = vrot.slane %v1981, %v1988
    %v1991 = vunpack.c.l.s4 1966171168
    %v1992 = vunpack.c.0.s8 %v1991
    %v1993 = vlaneseq
    %v1994 = vshrl.u32 %v1993, 7
    %v1995 = vsub.s32 %v1992, %v1994
    %v1996 = vrot.slane %v1982, %v1995
    %v1997 = vcombine.low %v1989, %v1996
    %v1998 = vcombine.low %v1948, %v1939
    %v2000 = vunpack.c.l.s4 1966171168
    %v2001 = vunpack.c.0.s8 %v2000
    %v2002 = vlaneseq
    %v2003 = vshrl.u32 %v2002, 7
    %v2004 = vsub.s32 %v2001, %v2003
    %v2005 = vrot.slane %v1998, %v2004
    %v2007 = vunpack.c.l.s4 1966171168
    %v2008 = vunpack.c.0.s8 %v2007
    %v2009 = vlaneseq
    %v2010 = vshrl.u32 %v2009, 7
    %v2011 = vsub.s32 %v2008, %v2010
    %v2012 = vrot.slane %v2005, %v2011
    %v2016 = vsel %vm351, %v1897, 0
    %v2019 = vsel %vm351, %v1902, 0
    %2021 = vmatprep.subr.mxu0 0.0
    %2022 = vmatpush1.msra.mxu0 0.0
    %2023 = vmatprep.subr.mxu0 0.0
    %2024 = vmatpush1.msra.mxu0 0.0
    %2025 = vmatprep.subr.mxu0 0.0
    %2026 = vmatpush1.msra.mxu0 0.0
    %2027 = vmatprep.subr.mxu0 0.0
    %2028 = vmatpush1.msra.mxu0 0.0
    %2029 = vmatprep.subr.mxu0 0.0
    %2030 = vmatpush1.msra.mxu0 0.0
    %2031 = vmatprep.subr.mxu0 0.0
    %2032 = vmatpush1.msra.mxu0 0.0
    %2033 = vmatprep.subr.mxu0 0.0
    %2034 = vmatpush1.msra.mxu0 0.0
    %2035 = vmatprep.subr.mxu0 0.0
    %2036 = vmatpush1.msra.mxu0 0.0
    %2037 = vmatprep.subr.mxu0 0.0
    %2038 = vmatpush1.msra.mxu0 0.0
    %2039 = vmatprep.subr.mxu0 0.0
    %2040 = vmatpush1.msra.mxu0 0.0
    %2041 = vmatprep.subr.mxu0 0.0
    %2042 = vmatpush1.msra.mxu0 0.0
    %2043 = vmatprep.subr.mxu0 0.0
    %2044 = vmatpush1.msra.mxu0 0.0
    %2045 = vmatprep.subr.mxu0 0.0
    %2046 = vmatpush1.msra.mxu0 %v226
    %2047 = vmatprep.subr.mxu0 0.0
    %2048 = vmatpush1.msra.mxu0 %v225
    %2049 = vmatprep.subr.mxu0 0.0
    %2050 = vmatpush1.msra.mxu0 %v224
    %2051 = vmatprep.subr.mxu0 0.0
    %2052 = vmatpush1.msra.mxu0 %v223
    %2053 = vmatprep.subr.mxu0 0.0
    %2054 = vmatpush2.msra.mxu0 0.0
    %2055 = vmatprep.subr.mxu0 0.0
    %2056 = vmatpush2.msra.mxu0 0.0
    %2057 = vmatprep.subr.mxu0 0.0
    %2058 = vmatpush2.msra.mxu0 0.0
    %2059 = vmatprep.subr.mxu0 0.0
    %2060 = vmatpush2.msra.mxu0 0.0
    %2061 = vmatprep.subr.mxu0 0.0
    %2062 = vmatpush2.msra.mxu0 0.0
    %2063 = vmatprep.subr.mxu0 0.0
    %2064 = vmatpush2.msra.mxu0 0.0
    %2065 = vmatprep.subr.mxu0 0.0
    %2066 = vmatpush2.msra.mxu0 0.0
    %2067 = vmatprep.subr.mxu0 0.0
    %2068 = vmatpush2.msra.mxu0 0.0
    %2069 = vmatprep.subr.mxu0 0.0
    %2070 = vmatpush2.msra.mxu0 0.0
    %2071 = vmatprep.subr.mxu0 0.0
    %2072 = vmatpush2.msra.mxu0 0.0
    %2073 = vmatprep.subr.mxu0 0.0
    %2074 = vmatpush2.msra.mxu0 0.0
    %2075 = vmatprep.subr.mxu0 0.0
    %2076 = vmatpush2.msra.mxu0 0.0
    %2077 = vmatprep.subr.mxu0 0.0
    %2078 = vmatpush2.msra.mxu0 0.0
    %2079 = vmatprep.subr.mxu0 0.0
    %2080 = vmatpush2.msra.mxu0 0.0
    %2081 = vmatprep.subr.mxu0 0.0
    %2082 = vmatpush2.msra.mxu0 0.0
    %2083 = vmatprep.subr.mxu0 0.0
    %2084 = vmatpush2.msra.mxu0 0.0
    %2085 = vmatprep.mubr.f32.mxu0 0.0
    %2086 = vmatmul.mubr.f32.gmra.mxu0 %v2016
    %v2087 = vpop.f32.mrf.mxu0
    %v2088 = vadd.f32 %v1997, %v2087
    %v2089 = vpop.f32.mrf.mxu0
    %2090 = vmatprep.mubr.f32.mxu0 0.0
    %2091 = vmatmul.mubr.f32.gmra.mxu0 %v2019
    %v2092 = vpop.f32.mrf.mxu0
    %v2093 = vadd.f32 %v2012, %v2092
    %v2094 = vpop.f32.mrf.mxu0
    %2095 = vdwg.mxu0
    %v2098 = vcombine.high %v2088, %v2088
    %v2100 = vunpack.c.l.s4 1966171168
    %v2101 = vunpack.c.0.s8 %v2100
    %v2102 = vlaneseq
    %v2103 = vshrl.u32 %v2102, 7
    %v2104 = vsub.s32 %v2101, %v2103
    %v2105 = vrot.slane %v2088, %v2104
    %v2107 = vunpack.c.l.s4 1966171168
    %v2108 = vunpack.c.0.s8 %v2107
    %v2109 = vlaneseq
    %v2110 = vshrl.u32 %v2109, 7
    %v2111 = vsub.s32 %v2108, %v2110
    %v2112 = vrot.slane %v2098, %v2111
    %v2113 = vcombine.high %v2105, %v2105
    %v2114 = vcombine.high %v2112, %v2112
    %v2116 = vunpack.c.l.s4 1966171168
    %v2117 = vunpack.c.0.s8 %v2116
    %v2118 = vlaneseq
    %v2119 = vshrl.u32 %v2118, 7
    %v2120 = vsub.s32 %v2117, %v2119
    %v2121 = vrot.slane %v2105, %v2120
    %v2123 = vunpack.c.l.s4 1966171168
    %v2124 = vunpack.c.0.s8 %v2123
    %v2125 = vlaneseq
    %v2126 = vshrl.u32 %v2125, 7
    %v2127 = vsub.s32 %v2124, %v2126
    %v2128 = vrot.slane %v2112, %v2127
    %v2130 = vunpack.c.l.s4 1966171168
    %v2131 = vunpack.c.0.s8 %v2130
    %v2132 = vlaneseq
    %v2133 = vshrl.u32 %v2132, 7
    %v2134 = vsub.s32 %v2131, %v2133
    %v2135 = vrot.slane %v2113, %v2134
    %v2137 = vunpack.c.l.s4 1966171168
    %v2138 = vunpack.c.0.s8 %v2137
    %v2139 = vlaneseq
    %v2140 = vshrl.u32 %v2139, 7
    %v2141 = vsub.s32 %v2138, %v2140
    %v2142 = vrot.slane %v2114, %v2141
    %v2143 = vcombine.high %v2121, %v2121
    %v2144 = vcombine.high %v2128, %v2128
    %v2145 = vcombine.high %v2135, %v2135
    %v2146 = vcombine.high %v2142, %v2142
    %v2148 = vunpack.c.l.s4 1966171168
    %v2149 = vunpack.c.0.s8 %v2148
    %v2150 = vlaneseq
    %v2151 = vshrl.u32 %v2150, 7
    %v2152 = vsub.s32 %v2149, %v2151
    %v2153 = vrot.slane %v2093, %v2152
    %v2154 = vcombine.high %v2153, %v2153
    %v2156 = vunpack.c.l.s4 1966171168
    %v2157 = vunpack.c.0.s8 %v2156
    %v2158 = vlaneseq
    %v2159 = vshrl.u32 %v2158, 7
    %v2160 = vsub.s32 %v2157, %v2159
    %v2161 = vrot.slane %v2153, %v2160
    %v2163 = vunpack.c.l.s4 1966171168
    %v2164 = vunpack.c.0.s8 %v2163
    %v2165 = vlaneseq
    %v2166 = vshrl.u32 %v2165, 7
    %v2167 = vsub.s32 %v2164, %v2166
    %v2168 = vrot.slane %v2154, %v2167
    %v2181 = vrot.slane %v1527, 7
    %v2182 = vrot.slane %v1528, 6
    %v2183 = vsel %vm569, %v2182, %v2181
    %2184 = vrot.lane.b32.xlu0 %v2183, 96
    %v2185 = vpop.permute.xlu0 %2184
    %v2186 = vsel %vm351, %v2185, 0
    %2188 = vmatprep.subr.mxu0 0.0
    %2189 = vmatpush1.msra.mxu0 0.0
    %2190 = vmatprep.subr.mxu0 0.0
    %2191 = vmatpush1.msra.mxu0 0.0
    %2192 = vmatprep.subr.mxu0 0.0
    %2193 = vmatpush1.msra.mxu0 0.0
    %2194 = vmatprep.subr.mxu0 0.0
    %2195 = vmatpush1.msra.mxu0 0.0
    %2196 = vmatprep.subr.mxu0 0.0
    %2197 = vmatpush1.msra.mxu0 0.0
    %2198 = vmatprep.subr.mxu0 0.0
    %2199 = vmatpush1.msra.mxu0 0.0
    %2200 = vmatprep.subr.mxu0 0.0
    %2201 = vmatpush1.msra.mxu0 0.0
    %2202 = vmatprep.subr.mxu0 0.0
    %2203 = vmatpush1.msra.mxu0 0.0
    %2204 = vmatprep.subr.mxu0 0.0
    %2205 = vmatpush1.msra.mxu0 0.0
    %2206 = vmatprep.subr.mxu0 0.0
    %2207 = vmatpush1.msra.mxu0 0.0
    %2208 = vmatprep.subr.mxu0 0.0
    %2209 = vmatpush1.msra.mxu0 0.0
    %2210 = vmatprep.subr.mxu0 0.0
    %2211 = vmatpush1.msra.mxu0 0.0
    %2212 = vmatprep.subr.mxu0 0.0
    %2213 = vmatpush1.msra.mxu0 %v222
    %2214 = vmatprep.subr.mxu0 0.0
    %2215 = vmatpush1.msra.mxu0 %v221
    %2216 = vmatprep.subr.mxu0 0.0
    %2217 = vmatpush1.msra.mxu0 %v220
    %2218 = vmatprep.subr.mxu0 0.0
    %2219 = vmatpush1.msra.mxu0 %v219
    %2220 = vmatprep.subr.mxu0 0.0
    %2221 = vmatpush2.msra.mxu0 0.0
    %2222 = vmatprep.subr.mxu0 0.0
    %2223 = vmatpush2.msra.mxu0 0.0
    %2224 = vmatprep.subr.mxu0 0.0
    %2225 = vmatpush2.msra.mxu0 0.0
    %2226 = vmatprep.subr.mxu0 0.0
    %2227 = vmatpush2.msra.mxu0 0.0
    %2228 = vmatprep.subr.mxu0 0.0
    %2229 = vmatpush2.msra.mxu0 0.0
    %2230 = vmatprep.subr.mxu0 0.0
    %2231 = vmatpush2.msra.mxu0 0.0
    %2232 = vmatprep.subr.mxu0 0.0
    %2233 = vmatpush2.msra.mxu0 0.0
    %2234 = vmatprep.subr.mxu0 0.0
    %2235 = vmatpush2.msra.mxu0 0.0
    %2236 = vmatprep.subr.mxu0 0.0
    %2237 = vmatpush2.msra.mxu0 0.0
    %2238 = vmatprep.subr.mxu0 0.0
    %2239 = vmatpush2.msra.mxu0 0.0
    %2240 = vmatprep.subr.mxu0 0.0
    %2241 = vmatpush2.msra.mxu0 0.0
    %2242 = vmatprep.subr.mxu0 0.0
    %2243 = vmatpush2.msra.mxu0 0.0
    %2244 = vmatprep.subr.mxu0 0.0
    %2245 = vmatpush2.msra.mxu0 0.0
    %2246 = vmatprep.subr.mxu0 0.0
    %2247 = vmatpush2.msra.mxu0 0.0
    %2248 = vmatprep.subr.mxu0 0.0
    %2249 = vmatpush2.msra.mxu0 0.0
    %2250 = vmatprep.subr.mxu0 0.0
    %2251 = vmatpush2.msra.mxu0 0.0
    %2252 = vmatprep.mubr.f32.mxu0 0.0
    %2253 = vmatmul.mubr.f32.gmra.mxu0 %v2186
    %v2254 = vpop.f32.mrf.mxu0
    %v2255 = vadd.f32 0.0, %v2254
    %v2256 = vpop.f32.mrf.mxu0
    %2257 = vdwg.mxu0
    %2258 = vrot.lane.b32.xlu0 %v1657, 32
    %v2259 = vpop.permute.xlu0 %2258
    %v2261 = vadd.f32 %v2255, %v2259
    %v2264 = vunpack.c.l.s4 1966171168
    %v2265 = vunpack.c.0.s8 %v2264
    %v2266 = vlaneseq
    %v2267 = vshrl.u32 %v2266, 7
    %v2268 = vsub.s32 %v2265, %v2267
    %v2269 = vrot.slane %v2255, %v2268
    %v2270 = vcombine.high %v2269, %v2269
    %v2272 = vunpack.c.l.s4 1966171168
    %v2273 = vunpack.c.0.s8 %v2272
    %v2274 = vlaneseq
    %v2275 = vshrl.u32 %v2274, 7
    %v2276 = vsub.s32 %v2273, %v2275
    %v2277 = vrot.slane %v2269, %v2276
    %v2279 = vunpack.c.l.s4 1966171168
    %v2280 = vunpack.c.0.s8 %v2279
    %v2281 = vlaneseq
    %v2282 = vshrl.u32 %v2281, 7
    %v2283 = vsub.s32 %v2280, %v2282
    %v2284 = vrot.slane %v2270, %v2283
    %v2285 = vlaneseq
    %v2286 = vshrl.u32 %v2285, 7
    %v2287 = vsub.s32 0, %v2286
    %v2288 = vrot.slane %v2277, %v2287
    %v2289 = vlaneseq
    %v2290 = vshrl.u32 %v2289, 7
    %v2291 = vsub.s32 0, %v2290
    %v2292 = vrot.slane %v2284, %v2291
    %v2295 = vadd.f32 %v1633, %v2288
    %v2296 = vadd.f32 %v1638, %v2292
    %v2297 = vtanh.pop %v2295
    %v2298 = vtanh.pop %v2296
    %v2300 = vsel %vm351, %v2297, 0
    %v2303 = vsel %vm351, %v2298, 0
    %2305 = vmatprep.subr.mxu0 0.0
    %2306 = vmatpush1.msra.mxu0 0.0
    %2307 = vmatprep.subr.mxu0 0.0
    %2308 = vmatpush1.msra.mxu0 0.0
    %2309 = vmatprep.subr.mxu0 0.0
    %2310 = vmatpush1.msra.mxu0 0.0
    %2311 = vmatprep.subr.mxu0 0.0
    %2312 = vmatpush1.msra.mxu0 0.0
    %2313 = vmatprep.subr.mxu0 0.0
    %2314 = vmatpush1.msra.mxu0 0.0
    %2315 = vmatprep.subr.mxu0 0.0
    %2316 = vmatpush1.msra.mxu0 0.0
    %2317 = vmatprep.subr.mxu0 0.0
    %2318 = vmatpush1.msra.mxu0 0.0
    %2319 = vmatprep.subr.mxu0 0.0
    %2320 = vmatpush1.msra.mxu0 0.0
    %2321 = vmatprep.subr.mxu0 0.0
    %2322 = vmatpush1.msra.mxu0 0.0
    %2323 = vmatprep.subr.mxu0 0.0
    %2324 = vmatpush1.msra.mxu0 0.0
    %2325 = vmatprep.subr.mxu0 0.0
    %2326 = vmatpush1.msra.mxu0 0.0
    %2327 = vmatprep.subr.mxu0 0.0
    %2328 = vmatpush1.msra.mxu0 0.0
    %2329 = vmatprep.subr.mxu0 0.0
    %2330 = vmatpush1.msra.mxu0 %v216
    %2331 = vmatprep.subr.mxu0 0.0
    %2332 = vmatpush1.msra.mxu0 %v215
    %2333 = vmatprep.subr.mxu0 0.0
    %2334 = vmatpush1.msra.mxu0 %v214
    %2335 = vmatprep.subr.mxu0 0.0
    %2336 = vmatpush1.msra.mxu0 %v213
    %2337 = vmatprep.subr.mxu0 0.0
    %2338 = vmatpush2.msra.mxu0 0.0
    %2339 = vmatprep.subr.mxu0 0.0
    %2340 = vmatpush2.msra.mxu0 0.0
    %2341 = vmatprep.subr.mxu0 0.0
    %2342 = vmatpush2.msra.mxu0 0.0
    %2343 = vmatprep.subr.mxu0 0.0
    %2344 = vmatpush2.msra.mxu0 0.0
    %2345 = vmatprep.subr.mxu0 0.0
    %2346 = vmatpush2.msra.mxu0 0.0
    %2347 = vmatprep.subr.mxu0 0.0
    %2348 = vmatpush2.msra.mxu0 0.0
    %2349 = vmatprep.subr.mxu0 0.0
    %2350 = vmatpush2.msra.mxu0 0.0
    %2351 = vmatprep.subr.mxu0 0.0
    %2352 = vmatpush2.msra.mxu0 0.0
    %2353 = vmatprep.subr.mxu0 0.0
    %2354 = vmatpush2.msra.mxu0 0.0
    %2355 = vmatprep.subr.mxu0 0.0
    %2356 = vmatpush2.msra.mxu0 0.0
    %2357 = vmatprep.subr.mxu0 0.0
    %2358 = vmatpush2.msra.mxu0 0.0
    %2359 = vmatprep.subr.mxu0 0.0
    %2360 = vmatpush2.msra.mxu0 0.0
    %2361 = vmatprep.subr.mxu0 0.0
    %2362 = vmatpush2.msra.mxu0 0.0
    %2363 = vmatprep.subr.mxu0 0.0
    %2364 = vmatpush2.msra.mxu0 0.0
    %2365 = vmatprep.subr.mxu0 0.0
    %2366 = vmatpush2.msra.mxu0 0.0
    %2367 = vmatprep.subr.mxu0 0.0
    %2368 = vmatpush2.msra.mxu0 0.0
    %2369 = vmatprep.mubr.f32.mxu0 0.0
    %2370 = vmatmul.mubr.f32.gmra.mxu0 %v2300
    %v2371 = vpop.f32.mrf.mxu0
    %v2372 = vadd.f32 %v1645, %v2371
    %v2373 = vpop.f32.mrf.mxu0
    %2374 = vmatprep.mubr.f32.mxu0 0.0
    %2375 = vmatmul.mubr.f32.gmra.mxu0 %v2303
    %v2376 = vpop.f32.mrf.mxu0
    %v2377 = vadd.f32 %v1645, %v2376
    %v2378 = vpop.f32.mrf.mxu0
    %2379 = vdwg.mxu0
    %v2380 = vtanh.pop %v2372
    %v2381 = vtanh.pop %v2377
    %v2382 = vmul.f32 %v2380, %v1651
    %v2383 = vmul.f32 %v2381, %v1651
    %v2384 = vsel %vm351, %v2382, 0.0
    %2385 = vadd.xlane.f32.xlu0 %v2384
    %v2386 = vpop.xlane.xlu0 %2385
    %v2387 = vsel %vm351, %v2383, 0.0
    %2388 = vadd.xlane.f32.xlu0 %v2387
    %v2389 = vpop.xlane.xlu0 %2388
    %v2392 = vlaneseq
    %v2393 = vshrl.u32 %v2392, 7
    %v2394 = vsub.s32 %v1665, %v2393
    %v2395 = vrot.slane %v2386, %v2394
    %v2396 = vlaneseq
    %v2397 = vshrl.u32 %v2396, 7
    %v2398 = vsub.s32 %v1665, %v2397
    %v2399 = vrot.slane %v2389, %v2398
    %v2400 = vsel %vm569, %v2399, %v2395
    %vm2402 = vcmask 58368
    %v2403 = vsel %vm2402, %v2400, -inf
    %2404 = vmax.xlane.f32.xlu0 %v2403
    %v2405 = vpop.xlane.xlu0 %2404
    %v2407 = vlaneseq
    %v2408 = vshrl.u32 %v2407, 7
    %v2409 = vsub.s32 0, %v2408
    %v2410 = vrot.slane %v2405, %v2409
    %v2411 = vlaneseq
    %v2412 = vshrl.u32 %v2411, 7
    %v2413 = vsub.s32 1, %v2412
    %v2414 = vrot.slane %v2405, %v2413
    %v2417 = vsub.f32 %v2386, %v2410
    %v2418 = vsub.f32 %v2389, %v2414
    %v2419 = vmul.f32 %v2417, 1.442695
    %v2420 = vpow.pop %v2419
    %v2421 = vmul.f32 %v2418, 1.442695
    %v2422 = vpow.pop %v2421
    %2425 = vset.pattern.permute.xlu0 0
    %2426 = vperm.xlu0 %2425, %v2420
    %v2427 = vpop.permute.xlu0 %2426
    %2428 = vset.pattern.permute.xlu0 0
    %2429 = vperm.xlu0 %2428, %v2422
    %v2430 = vpop.permute.xlu0 %2429
    %v2431 = vlaneseq
    %v2432 = vshrl.u32 %v2431, 7
    %v2433 = vsub.s32 %v1665, %v2432
    %v2434 = vrot.slane %v2427, %v2433
    %v2435 = vlaneseq
    %v2436 = vshrl.u32 %v2435, 7
    %v2437 = vsub.s32 %v1665, %v2436
    %v2438 = vrot.slane %v2430, %v2437
    %v2439 = vsel %vm569, %v2438, %v2434
    %v2441 = vsel %vm2402, %v2439, 0.0
    %2442 = vadd.xlane.f32.xlu0 %v2441
    %v2443 = vpop.xlane.xlu0 %2442
    %v2445 = vlaneseq
    %v2446 = vshrl.u32 %v2445, 7
    %v2447 = vsub.s32 0, %v2446
    %v2448 = vrot.slane %v2443, %v2447
    %v2449 = vlaneseq
    %v2450 = vshrl.u32 %v2449, 7
    %v2451 = vsub.s32 1, %v2450
    %v2452 = vrot.slane %v2443, %v2451
    %v2455 = vrcp.pop %v2448
    %v2456 = vmul.f32 %v2420, %v2455
    %v2457 = vrcp.pop %v2452
    %v2458 = vmul.f32 %v2422, %v2457
    %2460 = vset.pattern.permute.xlu0 0
    %2461 = vperm.xlu0 %2460, %v2456
    %v2462 = vpop.permute.xlu0 %2461
    %2465 = vset.pattern.permute.xlu0 0
    %2466 = vperm.xlu0 %2465, %v2458
    %v2467 = vpop.permute.xlu0 %2466
    %v2469 = vmul.f32 %v2462, %v1548
    %v2470 = vmul.f32 %v2467, %v1549
    %vm2471 = vcmask 523520
    %v2472 = vsel %vm2471, %v2469, 0.0
    %v2473 = vrot.slane %v2472, 4
    %v2474 = vadd.f32 %v2472, %v2473
    %v2475 = vrot.slane %v2474, 2
    %v2476 = vadd.f32 %v2474, %v2475
    %v2477 = vrot.slane %v2476, 1
    %v2478 = vadd.f32 %v2476, %v2477
    %v2479 = vsel %vm2471, %v2470, 0.0
    %v2480 = vrot.slane %v2479, 4
    %v2481 = vadd.f32 %v2479, %v2480
    %v2482 = vrot.slane %v2481, 2
    %v2483 = vadd.f32 %v2481, %v2482
    %v2484 = vrot.slane %v2483, 1
    %v2485 = vadd.f32 %v2483, %v2484
    %v2488 = vsel %vm569, %v2485, %v2478
    %2489 = vrot.lane.b32.xlu0 %v2488, 96
    %v2490 = vpop.permute.xlu0 %2489
    %v2491 = vsel %vm351, %v2490, 0
    %2493 = vmatprep.subr.mxu0 0.0
    %2494 = vmatpush1.msra.mxu0 0.0
    %2495 = vmatprep.subr.mxu0 0.0
    %2496 = vmatpush1.msra.mxu0 0.0
    %2497 = vmatprep.subr.mxu0 0.0
    %2498 = vmatpush1.msra.mxu0 0.0
    %2499 = vmatprep.subr.mxu0 0.0
    %2500 = vmatpush1.msra.mxu0 0.0
    %2501 = vmatprep.subr.mxu0 0.0
    %2502 = vmatpush1.msra.mxu0 0.0
    %2503 = vmatprep.subr.mxu0 0.0
    %2504 = vmatpush1.msra.mxu0 0.0
    %2505 = vmatprep.subr.mxu0 0.0
    %2506 = vmatpush1.msra.mxu0 0.0
    %2507 = vmatprep.subr.mxu0 0.0
    %2508 = vmatpush1.msra.mxu0 0.0
    %2509 = vmatprep.subr.mxu0 0.0
    %2510 = vmatpush1.msra.mxu0 0.0
    %2511 = vmatprep.subr.mxu0 0.0
    %2512 = vmatpush1.msra.mxu0 0.0
    %2513 = vmatprep.subr.mxu0 0.0
    %2514 = vmatpush1.msra.mxu0 0.0
    %2515 = vmatprep.subr.mxu0 0.0
    %2516 = vmatpush1.msra.mxu0 0.0
    %2517 = vmatprep.subr.mxu0 0.0
    %2518 = vmatpush1.msra.mxu0 %v230
    %2519 = vmatprep.subr.mxu0 0.0
    %2520 = vmatpush1.msra.mxu0 %v229
    %2521 = vmatprep.subr.mxu0 0.0
    %2522 = vmatpush1.msra.mxu0 %v228
    %2523 = vmatprep.subr.mxu0 0.0
    %2524 = vmatpush1.msra.mxu0 %v227
    %2525 = vmatprep.subr.mxu0 0.0
    %2526 = vmatpush2.msra.mxu0 0.0
    %2527 = vmatprep.subr.mxu0 0.0
    %2528 = vmatpush2.msra.mxu0 0.0
    %2529 = vmatprep.subr.mxu0 0.0
    %2530 = vmatpush2.msra.mxu0 0.0
    %2531 = vmatprep.subr.mxu0 0.0
    %2532 = vmatpush2.msra.mxu0 0.0
    %2533 = vmatprep.subr.mxu0 0.0
    %2534 = vmatpush2.msra.mxu0 0.0
    %2535 = vmatprep.subr.mxu0 0.0
    %2536 = vmatpush2.msra.mxu0 0.0
    %2537 = vmatprep.subr.mxu0 0.0
    %2538 = vmatpush2.msra.mxu0 0.0
    %2539 = vmatprep.subr.mxu0 0.0
    %2540 = vmatpush2.msra.mxu0 0.0
    %2541 = vmatprep.subr.mxu0 0.0
    %2542 = vmatpush2.msra.mxu0 0.0
    %2543 = vmatprep.subr.mxu0 0.0
    %2544 = vmatpush2.msra.mxu0 0.0
    %2545 = vmatprep.subr.mxu0 0.0
    %2546 = vmatpush2.msra.mxu0 0.0
    %2547 = vmatprep.subr.mxu0 0.0
    %2548 = vmatpush2.msra.mxu0 0.0
    %2549 = vmatprep.subr.mxu0 0.0
    %2550 = vmatpush2.msra.mxu0 0.0
    %2551 = vmatprep.subr.mxu0 0.0
    %2552 = vmatpush2.msra.mxu0 0.0
    %2553 = vmatprep.subr.mxu0 0.0
    %2554 = vmatpush2.msra.mxu0 0.0
    %2555 = vmatprep.subr.mxu0 0.0
    %2556 = vmatpush2.msra.mxu0 0.0
    %2557 = vmatprep.mubr.f32.mxu0 0.0
    %2558 = vmatmul.mubr.f32.gmra.mxu0 %v2491
    %v2559 = vpop.f32.mrf.mxu0
    %v2560 = vadd.f32 0.0, %v2559
    %v2561 = vpop.f32.mrf.mxu0
    %2562 = vdwg.mxu0
    %v2565 = vunpack.c.l.s4 1966171168
    %v2566 = vunpack.c.0.s8 %v2565
    %v2567 = vlaneseq
    %v2568 = vshrl.u32 %v2567, 7
    %v2569 = vsub.s32 %v2566, %v2568
    %v2570 = vrot.slane %v2560, %v2569
    %v2571 = vcombine.high %v2570, %v2570
    %v2573 = vunpack.c.l.s4 1966171168
    %v2574 = vunpack.c.0.s8 %v2573
    %v2575 = vlaneseq
    %v2576 = vshrl.u32 %v2575, 7
    %v2577 = vsub.s32 %v2574, %v2576
    %v2578 = vrot.slane %v2570, %v2577
    %v2580 = vunpack.c.l.s4 1966171168
    %v2581 = vunpack.c.0.s8 %v2580
    %v2582 = vlaneseq
    %v2583 = vshrl.u32 %v2582, 7
    %v2584 = vsub.s32 %v2581, %v2583
    %v2585 = vrot.slane %v2571, %v2584
    %v2588 = vadd.f32 %v2121, %v2578
    %v2589 = vadd.f32 %v2142, %v2585
    %v2592 = vunpack.c.l.s4 1966171168
    %v2593 = vunpack.c.0.s8 %v2592
    %v2594 = vlaneseq
    %v2595 = vshrl.u32 %v2594, 7
    %v2596 = vsub.s32 %v2593, %v2595
    %v2597 = vrot.slane %v2261, %v2596
    %v2598 = vcombine.high %v2597, %v2597
    %v2600 = vunpack.c.l.s4 1966171168
    %v2601 = vunpack.c.0.s8 %v2600
    %v2602 = vlaneseq
    %v2603 = vshrl.u32 %v2602, 7
    %v2604 = vsub.s32 %v2601, %v2603
    %v2605 = vrot.slane %v2597, %v2604
    %v2607 = vunpack.c.l.s4 1966171168
    %v2608 = vunpack.c.0.s8 %v2607
    %v2609 = vlaneseq
    %v2610 = vshrl.u32 %v2609, 7
    %v2611 = vsub.s32 %v2608, %v2610
    %v2612 = vrot.slane %v2598, %v2611
    %2613 = vrot.lane.b32.xlu0 %v2605, 96
    %v2614 = vpop.permute.xlu0 %2613
    %2615 = vrot.lane.b32.xlu0 %v2612, 96
    %v2616 = vpop.permute.xlu0 %2615
    %v2619 = vadd.f32 %v2588, %v2614
    %v2620 = vadd.f32 %v2589, %v2616
    %v2621 = vxor.u32 %v2619, 2147483648
    %v2622 = vxor.u32 %v2620, 2147483648
    %v2623 = vmul.f32 %v2621, 1.442695
    %v2624 = vpow.pop %v2623
    %v2625 = vmul.f32 %v2622, 1.442695
    %v2626 = vpow.pop %v2625
    %v2627 = vadd.f32 %v2624, 1.0
    %v2628 = vadd.f32 %v2626, 1.0
    %v2629 = vrcp.pop %v2627
    %v2630 = vmul.f32 1.0, %v2629
    %v2631 = vrcp.pop %v2628
    %v2632 = vmul.f32 1.0, %v2631
    %2633 = vrot.lane.b32.xlu0 %v2605, 32
    %v2634 = vpop.permute.xlu0 %2633
    %2635 = vrot.lane.b32.xlu0 %v2612, 32
    %v2636 = vpop.permute.xlu0 %2635
    %v2639 = vmul.f32 %v2630, %v2634
    %v2640 = vmul.f32 %v2632, %v2636
    %2643 = vrot.lane.b32.xlu0 %v2639, 64
    %v2644 = vpop.permute.xlu0 %2643
    %2645 = vrot.lane.b32.xlu0 %v2640, 64
    %v2646 = vpop.permute.xlu0 %2645
    %v2649 = vadd.f32 %v2588, %v2644
    %v2650 = vadd.f32 %v2589, %v2646
    %v2651 = vtanh.pop %v2649
    %v2652 = vtanh.pop %v2650
    %v2653 = vsub.f32 1.0, %v2630
    %v2654 = vsub.f32 1.0, %v2632
    %2657 = vrot.lane.b32.xlu0 %v2651, 96
    %v2658 = vpop.permute.xlu0 %2657
    %2659 = vrot.lane.b32.xlu0 %v2652, 96
    %v2660 = vpop.permute.xlu0 %2659
    %v2663 = vmul.f32 %v2653, %v2658
    %v2664 = vmul.f32 %v2654, %v2660
    %v2665 = vcombine.high %v1527, %v1527
    %v2667 = vunpack.c.l.s4 1966171168
    %v2668 = vunpack.c.0.s8 %v2667
    %v2669 = vlaneseq
    %v2670 = vshrl.u32 %v2669, 7
    %v2671 = vsub.s32 %v2668, %v2670
    %v2672 = vrot.slane %v2665, %v2671
    %v2673 = vcombine.high %v2672, %v2672
    %v2675 = vunpack.c.l.s4 1966171168
    %v2676 = vunpack.c.0.s8 %v2675
    %v2677 = vlaneseq
    %v2678 = vshrl.u32 %v2677, 7
    %v2679 = vsub.s32 %v2676, %v2678
    %v2680 = vrot.slane %v2673, %v2679
    %v2681 = vcombine.high %v2680, %v2680
    %v2682 = vcombine.high %v1528, %v1528
    %v2684 = vunpack.c.l.s4 1966171168
    %v2685 = vunpack.c.0.s8 %v2684
    %v2686 = vlaneseq
    %v2687 = vshrl.u32 %v2686, 7
    %v2688 = vsub.s32 %v2685, %v2687
    %v2689 = vrot.slane %v2682, %v2688
    %v2690 = vcombine.high %v2689, %v2689
    %v2692 = vunpack.c.l.s4 1966171168
    %v2693 = vunpack.c.0.s8 %v2692
    %v2694 = vlaneseq
    %v2695 = vshrl.u32 %v2694, 7
    %v2696 = vsub.s32 %v2693, %v2695
    %v2697 = vrot.slane %v2690, %v2696
    %v2698 = vcombine.high %v2697, %v2697
    %v2701 = vmul.f32 %v2630, %v2681
    %v2702 = vmul.f32 %v2632, %v2698
    %v2703 = vadd.f32 %v2663, %v2701
    %v2704 = vadd.f32 %v2664, %v2702
    %v2707 = vcombine.low %v2703, %v2704
    %v2709 = vunpack.c.l.s4 1966171168
    %v2710 = vunpack.c.0.s8 %v2709
    %v2711 = vlaneseq
    %v2712 = vshrl.u32 %v2711, 7
    %v2713 = vsub.s32 %v2710, %v2712
    %v2714 = vrot.slane %v2707, %v2713
    %v2716 = vunpack.c.l.s4 1966171168
    %v2717 = vunpack.c.0.s8 %v2716
    %v2718 = vlaneseq
    %v2719 = vshrl.u32 %v2718, 7
    %v2720 = vsub.s32 %v2717, %v2719
    %v2721 = vrot.slane %v2714, %v2720
    %2722 = vrot.lane.b32.xlu0 %v2721, 96
    %v2723 = vpop.permute.xlu0 %2722
    %v2724 = vsel %vm351, %v2723, 0
    %2726 = vmatprep.subr.mxu0 0.0
    %2727 = vmatpush1.msra.mxu0 0.0
    %2728 = vmatprep.subr.mxu0 0.0
    %2729 = vmatpush1.msra.mxu0 0.0
    %2730 = vmatprep.subr.mxu0 0.0
    %2731 = vmatpush1.msra.mxu0 0.0
    %2732 = vmatprep.subr.mxu0 0.0
    %2733 = vmatpush1.msra.mxu0 0.0
    %2734 = vmatprep.subr.mxu0 0.0
    %2735 = vmatpush1.msra.mxu0 0.0
    %2736 = vmatprep.subr.mxu0 0.0
    %2737 = vmatpush1.msra.mxu0 0.0
    %2738 = vmatprep.subr.mxu0 0.0
    %2739 = vmatpush1.msra.mxu0 0.0
    %2740 = vmatprep.subr.mxu0 0.0
    %2741 = vmatpush1.msra.mxu0 0.0
    %2742 = vmatprep.subr.mxu0 0.0
    %2743 = vmatpush1.msra.mxu0 0.0
    %2744 = vmatprep.subr.mxu0 0.0
    %2745 = vmatpush1.msra.mxu0 0.0
    %2746 = vmatprep.subr.mxu0 0.0
    %2747 = vmatpush1.msra.mxu0 0.0
    %2748 = vmatprep.subr.mxu0 0.0
    %2749 = vmatpush1.msra.mxu0 0.0
    %2750 = vmatprep.subr.mxu0 0.0
    %2751 = vmatpush1.msra.mxu0 %v252
    %2752 = vmatprep.subr.mxu0 0.0
    %2753 = vmatpush1.msra.mxu0 %v251
    %2754 = vmatprep.subr.mxu0 0.0
    %2755 = vmatpush1.msra.mxu0 %v250
    %2756 = vmatprep.subr.mxu0 0.0
    %2757 = vmatpush1.msra.mxu0 %v249
    %2758 = vmatprep.subr.mxu0 0.0
    %2759 = vmatpush2.msra.mxu0 0.0
    %2760 = vmatprep.subr.mxu0 0.0
    %2761 = vmatpush2.msra.mxu0 0.0
    %2762 = vmatprep.subr.mxu0 0.0
    %2763 = vmatpush2.msra.mxu0 0.0
    %2764 = vmatprep.subr.mxu0 0.0
    %2765 = vmatpush2.msra.mxu0 0.0
    %2766 = vmatprep.subr.mxu0 0.0
    %2767 = vmatpush2.msra.mxu0 0.0
    %2768 = vmatprep.subr.mxu0 0.0
    %2769 = vmatpush2.msra.mxu0 0.0
    %2770 = vmatprep.subr.mxu0 0.0
    %2771 = vmatpush2.msra.mxu0 0.0
    %2772 = vmatprep.subr.mxu0 0.0
    %2773 = vmatpush2.msra.mxu0 0.0
    %2774 = vmatprep.subr.mxu0 0.0
    %2775 = vmatpush2.msra.mxu0 0.0
    %2776 = vmatprep.subr.mxu0 0.0
    %2777 = vmatpush2.msra.mxu0 0.0
    %2778 = vmatprep.subr.mxu0 0.0
    %2779 = vmatpush2.msra.mxu0 0.0
    %2780 = vmatprep.subr.mxu0 0.0
    %2781 = vmatpush2.msra.mxu0 0.0
    %2782 = vmatprep.subr.mxu0 0.0
    %2783 = vmatpush2.msra.mxu0 0.0
    %2784 = vmatprep.subr.mxu0 0.0
    %2785 = vmatpush2.msra.mxu0 0.0
    %2786 = vmatprep.subr.mxu0 0.0
    %2787 = vmatpush2.msra.mxu0 0.0
    %2788 = vmatprep.subr.mxu0 0.0
    %2789 = vmatpush2.msra.mxu0 0.0
    %2790 = vmatprep.mubr.f32.mxu0 0.0
    %2791 = vmatmul.mubr.f32.gmra.mxu0 %v2724
    %v2792 = vpop.f32.mrf.mxu0
    %v2793 = vadd.f32 %v1662, %v2792
    %v2794 = vpop.f32.mrf.mxu0
    %2795 = vdwg.mxu0
    %v2796 = vsel %vm1532, %v2793, -inf
    %2797 = vmax.xlane.f32.xlu0 %v2796
    %v2798 = vpop.xlane.xlu0 %2797
    %v2799 = vsub.f32 %v2793, %v2798
    %v2800 = vmul.f32 %v2799, 1.442695
    %v2801 = vpow.pop %v2800
    %v2802 = vsel %vm1532, %v2801, 0.0
    %2803 = vadd.xlane.f32.xlu0 %v2802
    %v2804 = vpop.xlane.xlu0 %2803
    %v2805 = vlog2.pop %v2804
    %v2806 = vmul.f32 %v2805, 0.6931472
    %v2807 = vsub.f32 %v2799, %v2806
    %vm2808 = vcmp.ge.f32.partialorder %v2793, %v2798
    %v2809 = vsel %vm2808, %v1665, 128
    %v2810 = vsel %vm1532, %v2809, 2147483647
    %v2811 = vand.u32 %v2810, 65535
    %v2812 = vshra.s32 %v2810, 16
    %v2813 = vcvt.s32.f32 %v2811
    %v2814 = vcvt.s32.f32 %v2812
    %2815 = vmin.xlane.f32.xlu0 %v2814
    %v2816 = vpop.xlane.xlu0 %2815
    %vm2817 = vcmp.eq.f32.partialorder %v2814, %v2816
    %v2818 = vsel %vm2817, %v2813, inf
    %2819 = vmin.xlane.f32.xlu0 %v2818
    %v2820 = vpop.xlane.xlu0 %2819
    %v2821 = vcvt.f32.s32 %v2820
    %v2822 = vcvt.f32.s32 %v2816
    %v2823 = vshll.u32 %v2822, 16
    %v2824 = vadd.s32 %v2823, %v2821
    %2825 = vmatprep.subr.mxu0 0.0
    %2826 = vmatpush1.msra.mxu0 0.0
    %2827 = vmatprep.subr.mxu0 0.0
    %2828 = vmatpush1.msra.mxu0 0.0
    %2829 = vmatprep.subr.mxu0 0.0
    %2830 = vmatpush1.msra.mxu0 0.0
    %2831 = vmatprep.subr.mxu0 0.0
    %2832 = vmatpush1.msra.mxu0 0.0
    %2833 = vmatprep.subr.mxu0 0.0
    %2834 = vmatpush1.msra.mxu0 0.0
    %2835 = vmatprep.subr.mxu0 0.0
    %2836 = vmatpush1.msra.mxu0 0.0
    %2837 = vmatprep.subr.mxu0 0.0
    %2838 = vmatpush1.msra.mxu0 0.0
    %2839 = vmatprep.subr.mxu0 0.0
    %2840 = vmatpush1.msra.mxu0 0.0
    %2841 = vmatprep.subr.mxu0 0.0
    %2842 = vmatpush1.msra.mxu0 0.0
    %2843 = vmatprep.subr.mxu0 0.0
    %2844 = vmatpush1.msra.mxu0 0.0
    %2845 = vmatprep.subr.mxu0 0.0
    %2846 = vmatpush1.msra.mxu0 0.0
    %2847 = vmatprep.subr.mxu0 0.0
    %2848 = vmatpush1.msra.mxu0 0.0
    %2849 = vmatprep.subr.mxu0 0.0
    %2850 = vmatpush1.msra.mxu0 %v222
    %2851 = vmatprep.subr.mxu0 0.0
    %2852 = vmatpush1.msra.mxu0 %v221
    %2853 = vmatprep.subr.mxu0 0.0
    %2854 = vmatpush1.msra.mxu0 %v220
    %2855 = vmatprep.subr.mxu0 0.0
    %2856 = vmatpush1.msra.mxu0 %v219
    %2857 = vmatprep.subr.mxu0 0.0
    %2858 = vmatpush2.msra.mxu0 0.0
    %2859 = vmatprep.subr.mxu0 0.0
    %2860 = vmatpush2.msra.mxu0 0.0
    %2861 = vmatprep.subr.mxu0 0.0
    %2862 = vmatpush2.msra.mxu0 0.0
    %2863 = vmatprep.subr.mxu0 0.0
    %2864 = vmatpush2.msra.mxu0 0.0
    %2865 = vmatprep.subr.mxu0 0.0
    %2866 = vmatpush2.msra.mxu0 0.0
    %2867 = vmatprep.subr.mxu0 0.0
    %2868 = vmatpush2.msra.mxu0 0.0
    %2869 = vmatprep.subr.mxu0 0.0
    %2870 = vmatpush2.msra.mxu0 0.0
    %2871 = vmatprep.subr.mxu0 0.0
    %2872 = vmatpush2.msra.mxu0 0.0
    %2873 = vmatprep.subr.mxu0 0.0
    %2874 = vmatpush2.msra.mxu0 0.0
    %2875 = vmatprep.subr.mxu0 0.0
    %2876 = vmatpush2.msra.mxu0 0.0
    %2877 = vmatprep.subr.mxu0 0.0
    %2878 = vmatpush2.msra.mxu0 0.0
    %2879 = vmatprep.subr.mxu0 0.0
    %2880 = vmatpush2.msra.mxu0 0.0
    %2881 = vmatprep.subr.mxu0 0.0
    %2882 = vmatpush2.msra.mxu0 0.0
    %2883 = vmatprep.subr.mxu0 0.0
    %2884 = vmatpush2.msra.mxu0 0.0
    %2885 = vmatprep.subr.mxu0 0.0
    %2886 = vmatpush2.msra.mxu0 0.0
    %2887 = vmatprep.subr.mxu0 0.0
    %2888 = vmatpush2.msra.mxu0 0.0
    %2889 = vmatprep.mubr.f32.mxu0 0.0
    %2890 = vmatmul.mubr.f32.gmra.mxu0 %v2724
    %v2891 = vpop.f32.mrf.mxu0
    %v2892 = vadd.f32 0.0, %v2891
    %v2893 = vpop.f32.mrf.mxu0
    %2894 = vdwg.mxu0
    %v2895 = vadd.f32 %v2892, %v2259
    %v2898 = vunpack.c.l.s4 1966171168
    %v2899 = vunpack.c.0.s8 %v2898
    %v2900 = vlaneseq
    %v2901 = vshrl.u32 %v2900, 7
    %v2902 = vsub.s32 %v2899, %v2901
    %v2903 = vrot.slane %v2892, %v2902
    %v2904 = vcombine.high %v2903, %v2903
    %v2906 = vunpack.c.l.s4 1966171168
    %v2907 = vunpack.c.0.s8 %v2906
    %v2908 = vlaneseq
    %v2909 = vshrl.u32 %v2908, 7
    %v2910 = vsub.s32 %v2907, %v2909
    %v2911 = vrot.slane %v2903, %v2910
    %v2913 = vunpack.c.l.s4 1966171168
    %v2914 = vunpack.c.0.s8 %v2913
    %v2915 = vlaneseq
    %v2916 = vshrl.u32 %v2915, 7
    %v2917 = vsub.s32 %v2914, %v2916
    %v2918 = vrot.slane %v2904, %v2917
    %v2919 = vlaneseq
    %v2920 = vshrl.u32 %v2919, 7
    %v2921 = vsub.s32 0, %v2920
    %v2922 = vrot.slane %v2911, %v2921
    %v2923 = vlaneseq
    %v2924 = vshrl.u32 %v2923, 7
    %v2925 = vsub.s32 0, %v2924
    %v2926 = vrot.slane %v2918, %v2925
    %v2929 = vadd.f32 %v1633, %v2922
    %v2930 = vadd.f32 %v1638, %v2926
    %v2931 = vtanh.pop %v2929
    %v2932 = vtanh.pop %v2930
    %v2934 = vsel %vm351, %v2931, 0
    %v2937 = vsel %vm351, %v2932, 0
    %2939 = vmatprep.subr.mxu0 0.0
    %2940 = vmatpush1.msra.mxu0 0.0
    %2941 = vmatprep.subr.mxu0 0.0
    %2942 = vmatpush1.msra.mxu0 0.0
    %2943 = vmatprep.subr.mxu0 0.0
    %2944 = vmatpush1.msra.mxu0 0.0
    %2945 = vmatprep.subr.mxu0 0.0
    %2946 = vmatpush1.msra.mxu0 0.0
    %2947 = vmatprep.subr.mxu0 0.0
    %2948 = vmatpush1.msra.mxu0 0.0
    %2949 = vmatprep.subr.mxu0 0.0
    %2950 = vmatpush1.msra.mxu0 0.0
    %2951 = vmatprep.subr.mxu0 0.0
    %2952 = vmatpush1.msra.mxu0 0.0
    %2953 = vmatprep.subr.mxu0 0.0
    %2954 = vmatpush1.msra.mxu0 0.0
    %2955 = vmatprep.subr.mxu0 0.0
    %2956 = vmatpush1.msra.mxu0 0.0
    %2957 = vmatprep.subr.mxu0 0.0
    %2958 = vmatpush1.msra.mxu0 0.0
    %2959 = vmatprep.subr.mxu0 0.0
    %2960 = vmatpush1.msra.mxu0 0.0
    %2961 = vmatprep.subr.mxu0 0.0
    %2962 = vmatpush1.msra.mxu0 0.0
    %2963 = vmatprep.subr.mxu0 0.0
    %2964 = vmatpush1.msra.mxu0 %v216
    %2965 = vmatprep.subr.mxu0 0.0
    %2966 = vmatpush1.msra.mxu0 %v215
    %2967 = vmatprep.subr.mxu0 0.0
    %2968 = vmatpush1.msra.mxu0 %v214
    %2969 = vmatprep.subr.mxu0 0.0
    %2970 = vmatpush1.msra.mxu0 %v213
    %2971 = vmatprep.subr.mxu0 0.0
    %2972 = vmatpush2.msra.mxu0 0.0
    %2973 = vmatprep.subr.mxu0 0.0
    %2974 = vmatpush2.msra.mxu0 0.0
    %2975 = vmatprep.subr.mxu0 0.0
    %2976 = vmatpush2.msra.mxu0 0.0
    %2977 = vmatprep.subr.mxu0 0.0
    %2978 = vmatpush2.msra.mxu0 0.0
    %2979 = vmatprep.subr.mxu0 0.0
    %2980 = vmatpush2.msra.mxu0 0.0
    %2981 = vmatprep.subr.mxu0 0.0
    %2982 = vmatpush2.msra.mxu0 0.0
    %2983 = vmatprep.subr.mxu0 0.0
    %2984 = vmatpush2.msra.mxu0 0.0
    %2985 = vmatprep.subr.mxu0 0.0
    %2986 = vmatpush2.msra.mxu0 0.0
    %2987 = vmatprep.subr.mxu0 0.0
    %2988 = vmatpush2.msra.mxu0 0.0
    %2989 = vmatprep.subr.mxu0 0.0
    %2990 = vmatpush2.msra.mxu0 0.0
    %2991 = vmatprep.subr.mxu0 0.0
    %2992 = vmatpush2.msra.mxu0 0.0
    %2993 = vmatprep.subr.mxu0 0.0
    %2994 = vmatpush2.msra.mxu0 0.0
    %2995 = vmatprep.subr.mxu0 0.0
    %2996 = vmatpush2.msra.mxu0 0.0
    %2997 = vmatprep.subr.mxu0 0.0
    %2998 = vmatpush2.msra.mxu0 0.0
    %2999 = vmatprep.subr.mxu0 0.0
    %3000 = vmatpush2.msra.mxu0 0.0
    %3001 = vmatprep.subr.mxu0 0.0
    %3002 = vmatpush2.msra.mxu0 0.0
    %3003 = vmatprep.mubr.f32.mxu0 0.0
    %3004 = vmatmul.mubr.f32.gmra.mxu0 %v2934
    %v3005 = vpop.f32.mrf.mxu0
    %v3006 = vadd.f32 %v1645, %v3005
    %v3007 = vpop.f32.mrf.mxu0
    %3008 = vmatprep.mubr.f32.mxu0 0.0
    %3009 = vmatmul.mubr.f32.gmra.mxu0 %v2937
    %v3010 = vpop.f32.mrf.mxu0
    %v3011 = vadd.f32 %v1645, %v3010
    %v3012 = vpop.f32.mrf.mxu0
    %3013 = vdwg.mxu0
    %v3014 = vtanh.pop %v3006
    %v3015 = vtanh.pop %v3011
    %v3016 = vmul.f32 %v3014, %v1651
    %v3017 = vmul.f32 %v3015, %v1651
    %v3018 = vsel %vm351, %v3016, 0.0
    %3019 = vadd.xlane.f32.xlu0 %v3018
    %v3020 = vpop.xlane.xlu0 %3019
    %v3021 = vsel %vm351, %v3017, 0.0
    %3022 = vadd.xlane.f32.xlu0 %v3021
    %v3023 = vpop.xlane.xlu0 %3022
    %v3026 = vlaneseq
    %v3027 = vshrl.u32 %v3026, 7
    %v3028 = vsub.s32 %v1665, %v3027
    %v3029 = vrot.slane %v3020, %v3028
    %v3030 = vlaneseq
    %v3031 = vshrl.u32 %v3030, 7
    %v3032 = vsub.s32 %v1665, %v3031
    %v3033 = vrot.slane %v3023, %v3032
    %v3034 = vsel %vm569, %v3033, %v3029
    %v3036 = vsel %vm2402, %v3034, -inf
    %3037 = vmax.xlane.f32.xlu0 %v3036
    %v3038 = vpop.xlane.xlu0 %3037
    %v3040 = vlaneseq
    %v3041 = vshrl.u32 %v3040, 7
    %v3042 = vsub.s32 0, %v3041
    %v3043 = vrot.slane %v3038, %v3042
    %v3044 = vlaneseq
    %v3045 = vshrl.u32 %v3044, 7
    %v3046 = vsub.s32 1, %v3045
    %v3047 = vrot.slane %v3038, %v3046
    %v3050 = vsub.f32 %v3020, %v3043
    %v3051 = vsub.f32 %v3023, %v3047
    %v3052 = vmul.f32 %v3050, 1.442695
    %v3053 = vpow.pop %v3052
    %v3054 = vmul.f32 %v3051, 1.442695
    %v3055 = vpow.pop %v3054
    %3058 = vset.pattern.permute.xlu0 0
    %3059 = vperm.xlu0 %3058, %v3053
    %v3060 = vpop.permute.xlu0 %3059
    %3061 = vset.pattern.permute.xlu0 0
    %3062 = vperm.xlu0 %3061, %v3055
    %v3063 = vpop.permute.xlu0 %3062
    %v3064 = vlaneseq
    %v3065 = vshrl.u32 %v3064, 7
    %v3066 = vsub.s32 %v1665, %v3065
    %v3067 = vrot.slane %v3060, %v3066
    %v3068 = vlaneseq
    %v3069 = vshrl.u32 %v3068, 7
    %v3070 = vsub.s32 %v1665, %v3069
    %v3071 = vrot.slane %v3063, %v3070
    %v3072 = vsel %vm569, %v3071, %v3067
    %v3074 = vsel %vm2402, %v3072, 0.0
    %3075 = vadd.xlane.f32.xlu0 %v3074
    %v3076 = vpop.xlane.xlu0 %3075
    %v3078 = vlaneseq
    %v3079 = vshrl.u32 %v3078, 7
    %v3080 = vsub.s32 0, %v3079
    %v3081 = vrot.slane %v3076, %v3080
    %v3082 = vlaneseq
    %v3083 = vshrl.u32 %v3082, 7
    %v3084 = vsub.s32 1, %v3083
    %v3085 = vrot.slane %v3076, %v3084
    %v3088 = vrcp.pop %v3081
    %v3089 = vmul.f32 %v3053, %v3088
    %v3090 = vrcp.pop %v3085
    %v3091 = vmul.f32 %v3055, %v3090
    %3093 = vset.pattern.permute.xlu0 0
    %3094 = vperm.xlu0 %3093, %v3089
    %v3095 = vpop.permute.xlu0 %3094
    %3098 = vset.pattern.permute.xlu0 0
    %3099 = vperm.xlu0 %3098, %v3091
    %v3100 = vpop.permute.xlu0 %3099
    %v3102 = vmul.f32 %v3095, %v1548
    %v3103 = vmul.f32 %v3100, %v1549
    %v3104 = vsel %vm2471, %v3102, 0.0
    %v3105 = vrot.slane %v3104, 4
    %v3106 = vadd.f32 %v3104, %v3105
    %v3107 = vrot.slane %v3106, 2
    %v3108 = vadd.f32 %v3106, %v3107
    %v3109 = vrot.slane %v3108, 1
    %v3110 = vadd.f32 %v3108, %v3109
    %v3111 = vsel %vm2471, %v3103, 0.0
    %v3112 = vrot.slane %v3111, 4
    %v3113 = vadd.f32 %v3111, %v3112
    %v3114 = vrot.slane %v3113, 2
    %v3115 = vadd.f32 %v3113, %v3114
    %v3116 = vrot.slane %v3115, 1
    %v3117 = vadd.f32 %v3115, %v3116
    %v3120 = vsel %vm569, %v3117, %v3110
    %3121 = vrot.lane.b32.xlu0 %v3120, 96
    %v3122 = vpop.permute.xlu0 %3121
    %v3123 = vsel %vm351, %v3122, 0
    %3125 = vmatprep.subr.mxu0 0.0
    %3126 = vmatpush1.msra.mxu0 0.0
    %3127 = vmatprep.subr.mxu0 0.0
    %3128 = vmatpush1.msra.mxu0 0.0
    %3129 = vmatprep.subr.mxu0 0.0
    %3130 = vmatpush1.msra.mxu0 0.0
    %3131 = vmatprep.subr.mxu0 0.0
    %3132 = vmatpush1.msra.mxu0 0.0
    %3133 = vmatprep.subr.mxu0 0.0
    %3134 = vmatpush1.msra.mxu0 0.0
    %3135 = vmatprep.subr.mxu0 0.0
    %3136 = vmatpush1.msra.mxu0 0.0
    %3137 = vmatprep.subr.mxu0 0.0
    %3138 = vmatpush1.msra.mxu0 0.0
    %3139 = vmatprep.subr.mxu0 0.0
    %3140 = vmatpush1.msra.mxu0 0.0
    %3141 = vmatprep.subr.mxu0 0.0
    %3142 = vmatpush1.msra.mxu0 0.0
    %3143 = vmatprep.subr.mxu0 0.0
    %3144 = vmatpush1.msra.mxu0 0.0
    %3145 = vmatprep.subr.mxu0 0.0
    %3146 = vmatpush1.msra.mxu0 0.0
    %3147 = vmatprep.subr.mxu0 0.0
    %3148 = vmatpush1.msra.mxu0 0.0
    %3149 = vmatprep.subr.mxu0 0.0
    %3150 = vmatpush1.msra.mxu0 %v230
    %3151 = vmatprep.subr.mxu0 0.0
    %3152 = vmatpush1.msra.mxu0 %v229
    %3153 = vmatprep.subr.mxu0 0.0
    %3154 = vmatpush1.msra.mxu0 %v228
    %3155 = vmatprep.subr.mxu0 0.0
    %3156 = vmatpush1.msra.mxu0 %v227
    %3157 = vmatprep.subr.mxu0 0.0
    %3158 = vmatpush2.msra.mxu0 0.0
    %3159 = vmatprep.subr.mxu0 0.0
    %3160 = vmatpush2.msra.mxu0 0.0
    %3161 = vmatprep.subr.mxu0 0.0
    %3162 = vmatpush2.msra.mxu0 0.0
    %3163 = vmatprep.subr.mxu0 0.0
    %3164 = vmatpush2.msra.mxu0 0.0
    %3165 = vmatprep.subr.mxu0 0.0
    %3166 = vmatpush2.msra.mxu0 0.0
    %3167 = vmatprep.subr.mxu0 0.0
    %3168 = vmatpush2.msra.mxu0 0.0
    %3169 = vmatprep.subr.mxu0 0.0
    %3170 = vmatpush2.msra.mxu0 0.0
    %3171 = vmatprep.subr.mxu0 0.0
    %3172 = vmatpush2.msra.mxu0 0.0
    %3173 = vmatprep.subr.mxu0 0.0
    %3174 = vmatpush2.msra.mxu0 0.0
    %3175 = vmatprep.subr.mxu0 0.0
    %3176 = vmatpush2.msra.mxu0 0.0
    %3177 = vmatprep.subr.mxu0 0.0
    %3178 = vmatpush2.msra.mxu0 0.0
    %3179 = vmatprep.subr.mxu0 0.0
    %3180 = vmatpush2.msra.mxu0 0.0
    %3181 = vmatprep.subr.mxu0 0.0
    %3182 = vmatpush2.msra.mxu0 0.0
    %3183 = vmatprep.subr.mxu0 0.0
    %3184 = vmatpush2.msra.mxu0 0.0
    %3185 = vmatprep.subr.mxu0 0.0
    %3186 = vmatpush2.msra.mxu0 0.0
    %3187 = vmatprep.subr.mxu0 0.0
    %3188 = vmatpush2.msra.mxu0 0.0
    %3189 = vmatprep.mubr.f32.mxu0 0.0
    %3190 = vmatmul.mubr.f32.gmra.mxu0 %v3123
    %v3191 = vpop.f32.mrf.mxu0
    %v3192 = vadd.f32 0.0, %v3191
    %v3193 = vpop.f32.mrf.mxu0
    %3194 = vdwg.mxu0
    %v3197 = vunpack.c.l.s4 1966171168
    %v3198 = vunpack.c.0.s8 %v3197
    %v3199 = vlaneseq
    %v3200 = vshrl.u32 %v3199, 7
    %v3201 = vsub.s32 %v3198, %v3200
    %v3202 = vrot.slane %v3192, %v3201
    %v3203 = vcombine.high %v3202, %v3202
    %v3205 = vunpack.c.l.s4 1966171168
    %v3206 = vunpack.c.0.s8 %v3205
    %v3207 = vlaneseq
    %v3208 = vshrl.u32 %v3207, 7
    %v3209 = vsub.s32 %v3206, %v3208
    %v3210 = vrot.slane %v3202, %v3209
    %v3212 = vunpack.c.l.s4 1966171168
    %v3213 = vunpack.c.0.s8 %v3212
    %v3214 = vlaneseq
    %v3215 = vshrl.u32 %v3214, 7
    %v3216 = vsub.s32 %v3213, %v3215
    %v3217 = vrot.slane %v3203, %v3216
    %v3220 = vadd.f32 %v2135, %v3210
    %v3221 = vadd.f32 %v2144, %v3217
    %v3224 = vunpack.c.l.s4 1966171168
    %v3225 = vunpack.c.0.s8 %v3224
    %v3226 = vlaneseq
    %v3227 = vshrl.u32 %v3226, 7
    %v3228 = vsub.s32 %v3225, %v3227
    %v3229 = vrot.slane %v2895, %v3228
    %v3230 = vcombine.high %v3229, %v3229
    %v3232 = vunpack.c.l.s4 1966171168
    %v3233 = vunpack.c.0.s8 %v3232
    %v3234 = vlaneseq
    %v3235 = vshrl.u32 %v3234, 7
    %v3236 = vsub.s32 %v3233, %v3235
    %v3237 = vrot.slane %v3229, %v3236
    %v3239 = vunpack.c.l.s4 1966171168
    %v3240 = vunpack.c.0.s8 %v3239
    %v3241 = vlaneseq
    %v3242 = vshrl.u32 %v3241, 7
    %v3243 = vsub.s32 %v3240, %v3242
    %v3244 = vrot.slane %v3230, %v3243
    %3245 = vrot.lane.b32.xlu0 %v3237, 96
    %v3246 = vpop.permute.xlu0 %3245
    %3247 = vrot.lane.b32.xlu0 %v3244, 96
    %v3248 = vpop.permute.xlu0 %3247
    %v3251 = vadd.f32 %v3220, %v3246
    %v3252 = vadd.f32 %v3221, %v3248
    %v3253 = vxor.u32 %v3251, 2147483648
    %v3254 = vxor.u32 %v3252, 2147483648
    %v3255 = vmul.f32 %v3253, 1.442695
    %v3256 = vpow.pop %v3255
    %v3257 = vmul.f32 %v3254, 1.442695
    %v3258 = vpow.pop %v3257
    %v3259 = vadd.f32 %v3256, 1.0
    %v3260 = vadd.f32 %v3258, 1.0
    %v3261 = vrcp.pop %v3259
    %v3262 = vmul.f32 1.0, %v3261
    %v3263 = vrcp.pop %v3260
    %v3264 = vmul.f32 1.0, %v3263
    %3265 = vrot.lane.b32.xlu0 %v3237, 32
    %v3266 = vpop.permute.xlu0 %3265
    %3267 = vrot.lane.b32.xlu0 %v3244, 32
    %v3268 = vpop.permute.xlu0 %3267
    %v3271 = vmul.f32 %v3262, %v3266
    %v3272 = vmul.f32 %v3264, %v3268
    %3275 = vrot.lane.b32.xlu0 %v3271, 64
    %v3276 = vpop.permute.xlu0 %3275
    %3277 = vrot.lane.b32.xlu0 %v3272, 64
    %v3278 = vpop.permute.xlu0 %3277
    %v3281 = vadd.f32 %v3220, %v3276
    %v3282 = vadd.f32 %v3221, %v3278
    %v3283 = vtanh.pop %v3281
    %v3284 = vtanh.pop %v3282
    %v3285 = vsub.f32 1.0, %v3262
    %v3286 = vsub.f32 1.0, %v3264
    %3289 = vrot.lane.b32.xlu0 %v3283, 96
    %v3290 = vpop.permute.xlu0 %3289
    %3291 = vrot.lane.b32.xlu0 %v3284, 96
    %v3292 = vpop.permute.xlu0 %3291
    %v3295 = vmul.f32 %v3285, %v3290
    %v3296 = vmul.f32 %v3286, %v3292
    %v3297 = vmul.f32 %v3262, %v2703
    %v3298 = vmul.f32 %v3264, %v2704
    %v3299 = vadd.f32 %v3295, %v3297
    %v3300 = vadd.f32 %v3296, %v3298
    %v3303 = vcombine.low %v3299, %v3300
    %v3305 = vunpack.c.l.s4 1966171168
    %v3306 = vunpack.c.0.s8 %v3305
    %v3307 = vlaneseq
    %v3308 = vshrl.u32 %v3307, 7
    %v3309 = vsub.s32 %v3306, %v3308
    %v3310 = vrot.slane %v3303, %v3309
    %v3312 = vunpack.c.l.s4 1966171168
    %v3313 = vunpack.c.0.s8 %v3312
    %v3314 = vlaneseq
    %v3315 = vshrl.u32 %v3314, 7
    %v3316 = vsub.s32 %v3313, %v3315
    %v3317 = vrot.slane %v3310, %v3316
    %3318 = vrot.lane.b32.xlu0 %v3317, 96
    %v3319 = vpop.permute.xlu0 %3318
    %v3320 = vsel %vm351, %v3319, 0
    %3322 = vmatprep.subr.mxu0 0.0
    %3323 = vmatpush1.msra.mxu0 0.0
    %3324 = vmatprep.subr.mxu0 0.0
    %3325 = vmatpush1.msra.mxu0 0.0
    %3326 = vmatprep.subr.mxu0 0.0
    %3327 = vmatpush1.msra.mxu0 0.0
    %3328 = vmatprep.subr.mxu0 0.0
    %3329 = vmatpush1.msra.mxu0 0.0
    %3330 = vmatprep.subr.mxu0 0.0
    %3331 = vmatpush1.msra.mxu0 0.0
    %3332 = vmatprep.subr.mxu0 0.0
    %3333 = vmatpush1.msra.mxu0 0.0
    %3334 = vmatprep.subr.mxu0 0.0
    %3335 = vmatpush1.msra.mxu0 0.0
    %3336 = vmatprep.subr.mxu0 0.0
    %3337 = vmatpush1.msra.mxu0 0.0
    %3338 = vmatprep.subr.mxu0 0.0
    %3339 = vmatpush1.msra.mxu0 0.0
    %3340 = vmatprep.subr.mxu0 0.0
    %3341 = vmatpush1.msra.mxu0 0.0
    %3342 = vmatprep.subr.mxu0 0.0
    %3343 = vmatpush1.msra.mxu0 0.0
    %3344 = vmatprep.subr.mxu0 0.0
    %3345 = vmatpush1.msra.mxu0 0.0
    %3346 = vmatprep.subr.mxu0 0.0
    %3347 = vmatpush1.msra.mxu0 %v252
    %3348 = vmatprep.subr.mxu0 0.0
    %3349 = vmatpush1.msra.mxu0 %v251
    %3350 = vmatprep.subr.mxu0 0.0
    %3351 = vmatpush1.msra.mxu0 %v250
    %3352 = vmatprep.subr.mxu0 0.0
    %3353 = vmatpush1.msra.mxu0 %v249
    %3354 = vmatprep.subr.mxu0 0.0
    %3355 = vmatpush2.msra.mxu0 0.0
    %3356 = vmatprep.subr.mxu0 0.0
    %3357 = vmatpush2.msra.mxu0 0.0
    %3358 = vmatprep.subr.mxu0 0.0
    %3359 = vmatpush2.msra.mxu0 0.0
    %3360 = vmatprep.subr.mxu0 0.0
    %3361 = vmatpush2.msra.mxu0 0.0
    %3362 = vmatprep.subr.mxu0 0.0
    %3363 = vmatpush2.msra.mxu0 0.0
    %3364 = vmatprep.subr.mxu0 0.0
    %3365 = vmatpush2.msra.mxu0 0.0
    %3366 = vmatprep.subr.mxu0 0.0
    %3367 = vmatpush2.msra.mxu0 0.0
    %3368 = vmatprep.subr.mxu0 0.0
    %3369 = vmatpush2.msra.mxu0 0.0
    %3370 = vmatprep.subr.mxu0 0.0
    %3371 = vmatpush2.msra.mxu0 0.0
    %3372 = vmatprep.subr.mxu0 0.0
    %3373 = vmatpush2.msra.mxu0 0.0
    %3374 = vmatprep.subr.mxu0 0.0
    %3375 = vmatpush2.msra.mxu0 0.0
    %3376 = vmatprep.subr.mxu0 0.0
    %3377 = vmatpush2.msra.mxu0 0.0
    %3378 = vmatprep.subr.mxu0 0.0
    %3379 = vmatpush2.msra.mxu0 0.0
    %3380 = vmatprep.subr.mxu0 0.0
    %3381 = vmatpush2.msra.mxu0 0.0
    %3382 = vmatprep.subr.mxu0 0.0
    %3383 = vmatpush2.msra.mxu0 0.0
    %3384 = vmatprep.subr.mxu0 0.0
    %3385 = vmatpush2.msra.mxu0 0.0
    %3386 = vmatprep.mubr.f32.mxu0 0.0
    %3387 = vmatmul.mubr.f32.gmra.mxu0 %v3320
    %v3388 = vpop.f32.mrf.mxu0
    %v3389 = vadd.f32 %v1662, %v3388
    %v3390 = vpop.f32.mrf.mxu0
    %3391 = vdwg.mxu0
    %v3392 = vsel %vm1532, %v3389, -inf
    %3393 = vmax.xlane.f32.xlu0 %v3392
    %v3394 = vpop.xlane.xlu0 %3393
    %v3395 = vsub.f32 %v3389, %v3394
    %v3396 = vmul.f32 %v3395, 1.442695
    %v3397 = vpow.pop %v3396
    %v3398 = vsel %vm1532, %v3397, 0.0
    %3399 = vadd.xlane.f32.xlu0 %v3398
    %v3400 = vpop.xlane.xlu0 %3399
    %v3401 = vlog2.pop %v3400
    %v3402 = vmul.f32 %v3401, 0.6931472
    %v3403 = vsub.f32 %v3395, %v3402
    %vm3404 = vcmp.ge.f32.partialorder %v3389, %v3394
    %v3405 = vsel %vm3404, %v1665, 128
    %v3406 = vsel %vm1532, %v3405, 2147483647
    %v3407 = vand.u32 %v3406, 65535
    %v3408 = vshra.s32 %v3406, 16
    %v3409 = vcvt.s32.f32 %v3407
    %v3410 = vcvt.s32.f32 %v3408
    %3411 = vmin.xlane.f32.xlu0 %v3410
    %v3412 = vpop.xlane.xlu0 %3411
    %vm3413 = vcmp.eq.f32.partialorder %v3410, %v3412
    %v3414 = vsel %vm3413, %v3409, inf
    %3415 = vmin.xlane.f32.xlu0 %v3414
    %v3416 = vpop.xlane.xlu0 %3415
    %v3417 = vcvt.f32.s32 %v3416
    %v3418 = vcvt.f32.s32 %v3412
    %v3419 = vshll.u32 %v3418, 16
    %v3420 = vadd.s32 %v3419, %v3417
    %3421 = vmatprep.subr.mxu0 0.0
    %3422 = vmatpush1.msra.mxu0 0.0
    %3423 = vmatprep.subr.mxu0 0.0
    %3424 = vmatpush1.msra.mxu0 0.0
    %3425 = vmatprep.subr.mxu0 0.0
    %3426 = vmatpush1.msra.mxu0 0.0
    %3427 = vmatprep.subr.mxu0 0.0
    %3428 = vmatpush1.msra.mxu0 0.0
    %3429 = vmatprep.subr.mxu0 0.0
    %3430 = vmatpush1.msra.mxu0 0.0
    %3431 = vmatprep.subr.mxu0 0.0
    %3432 = vmatpush1.msra.mxu0 0.0
    %3433 = vmatprep.subr.mxu0 0.0
    %3434 = vmatpush1.msra.mxu0 0.0
    %3435 = vmatprep.subr.mxu0 0.0
    %3436 = vmatpush1.msra.mxu0 0.0
    %3437 = vmatprep.subr.mxu0 0.0
    %3438 = vmatpush1.msra.mxu0 0.0
    %3439 = vmatprep.subr.mxu0 0.0
    %3440 = vmatpush1.msra.mxu0 0.0
    %3441 = vmatprep.subr.mxu0 0.0
    %3442 = vmatpush1.msra.mxu0 0.0
    %3443 = vmatprep.subr.mxu0 0.0
    %3444 = vmatpush1.msra.mxu0 0.0
    %3445 = vmatprep.subr.mxu0 0.0
    %3446 = vmatpush1.msra.mxu0 %v222
    %3447 = vmatprep.subr.mxu0 0.0
    %3448 = vmatpush1.msra.mxu0 %v221
    %3449 = vmatprep.subr.mxu0 0.0
    %3450 = vmatpush1.msra.mxu0 %v220
    %3451 = vmatprep.subr.mxu0 0.0
    %3452 = vmatpush1.msra.mxu0 %v219
    %3453 = vmatprep.subr.mxu0 0.0
    %3454 = vmatpush2.msra.mxu0 0.0
    %3455 = vmatprep.subr.mxu0 0.0
    %3456 = vmatpush2.msra.mxu0 0.0
    %3457 = vmatprep.subr.mxu0 0.0
    %3458 = vmatpush2.msra.mxu0 0.0
    %3459 = vmatprep.subr.mxu0 0.0
    %3460 = vmatpush2.msra.mxu0 0.0
    %3461 = vmatprep.subr.mxu0 0.0
    %3462 = vmatpush2.msra.mxu0 0.0
    %3463 = vmatprep.subr.mxu0 0.0
    %3464 = vmatpush2.msra.mxu0 0.0
    %3465 = vmatprep.subr.mxu0 0.0
    %3466 = vmatpush2.msra.mxu0 0.0
    %3467 = vmatprep.subr.mxu0 0.0
    %3468 = vmatpush2.msra.mxu0 0.0
    %3469 = vmatprep.subr.mxu0 0.0
    %3470 = vmatpush2.msra.mxu0 0.0
    %3471 = vmatprep.subr.mxu0 0.0
    %3472 = vmatpush2.msra.mxu0 0.0
    %3473 = vmatprep.subr.mxu0 0.0
    %3474 = vmatpush2.msra.mxu0 0.0
    %3475 = vmatprep.subr.mxu0 0.0
    %3476 = vmatpush2.msra.mxu0 0.0
    %3477 = vmatprep.subr.mxu0 0.0
    %3478 = vmatpush2.msra.mxu0 0.0
    %3479 = vmatprep.subr.mxu0 0.0
    %3480 = vmatpush2.msra.mxu0 0.0
    %3481 = vmatprep.subr.mxu0 0.0
    %3482 = vmatpush2.msra.mxu0 0.0
    %3483 = vmatprep.subr.mxu0 0.0
    %3484 = vmatpush2.msra.mxu0 0.0
    %3485 = vmatprep.mubr.f32.mxu0 0.0
    %3486 = vmatmul.mubr.f32.gmra.mxu0 %v3320
    %v3487 = vpop.f32.mrf.mxu0
    %v3488 = vadd.f32 0.0, %v3487
    %v3489 = vpop.f32.mrf.mxu0
    %3490 = vdwg.mxu0
    %v3491 = vadd.f32 %v3488, %v2259
    %v3494 = vunpack.c.l.s4 1966171168
    %v3495 = vunpack.c.0.s8 %v3494
    %v3496 = vlaneseq
    %v3497 = vshrl.u32 %v3496, 7
    %v3498 = vsub.s32 %v3495, %v3497
    %v3499 = vrot.slane %v3488, %v3498
    %v3500 = vcombine.high %v3499, %v3499
    %v3502 = vunpack.c.l.s4 1966171168
    %v3503 = vunpack.c.0.s8 %v3502
    %v3504 = vlaneseq
    %v3505 = vshrl.u32 %v3504, 7
    %v3506 = vsub.s32 %v3503, %v3505
    %v3507 = vrot.slane %v3499, %v3506
    %v3509 = vunpack.c.l.s4 1966171168
    %v3510 = vunpack.c.0.s8 %v3509
    %v3511 = vlaneseq
    %v3512 = vshrl.u32 %v3511, 7
    %v3513 = vsub.s32 %v3510, %v3512
    %v3514 = vrot.slane %v3500, %v3513
    %v3515 = vlaneseq
    %v3516 = vshrl.u32 %v3515, 7
    %v3517 = vsub.s32 0, %v3516
    %v3518 = vrot.slane %v3507, %v3517
    %v3519 = vlaneseq
    %v3520 = vshrl.u32 %v3519, 7
    %v3521 = vsub.s32 0, %v3520
    %v3522 = vrot.slane %v3514, %v3521
    %v3525 = vadd.f32 %v1633, %v3518
    %v3526 = vadd.f32 %v1638, %v3522
    %v3527 = vtanh.pop %v3525
    %v3528 = vtanh.pop %v3526
    %v3530 = vsel %vm351, %v3527, 0
    %v3533 = vsel %vm351, %v3528, 0
    %3535 = vmatprep.subr.mxu0 0.0
    %3536 = vmatpush1.msra.mxu0 0.0
    %3537 = vmatprep.subr.mxu0 0.0
    %3538 = vmatpush1.msra.mxu0 0.0
    %3539 = vmatprep.subr.mxu0 0.0
    %3540 = vmatpush1.msra.mxu0 0.0
    %3541 = vmatprep.subr.mxu0 0.0
    %3542 = vmatpush1.msra.mxu0 0.0
    %3543 = vmatprep.subr.mxu0 0.0
    %3544 = vmatpush1.msra.mxu0 0.0
    %3545 = vmatprep.subr.mxu0 0.0
    %3546 = vmatpush1.msra.mxu0 0.0
    %3547 = vmatprep.subr.mxu0 0.0
    %3548 = vmatpush1.msra.mxu0 0.0
    %3549 = vmatprep.subr.mxu0 0.0
    %3550 = vmatpush1.msra.mxu0 0.0
    %3551 = vmatprep.subr.mxu0 0.0
    %3552 = vmatpush1.msra.mxu0 0.0
    %3553 = vmatprep.subr.mxu0 0.0
    %3554 = vmatpush1.msra.mxu0 0.0
    %3555 = vmatprep.subr.mxu0 0.0
    %3556 = vmatpush1.msra.mxu0 0.0
    %3557 = vmatprep.subr.mxu0 0.0
    %3558 = vmatpush1.msra.mxu0 0.0
    %3559 = vmatprep.subr.mxu0 0.0
    %3560 = vmatpush1.msra.mxu0 %v216
    %3561 = vmatprep.subr.mxu0 0.0
    %3562 = vmatpush1.msra.mxu0 %v215
    %3563 = vmatprep.subr.mxu0 0.0
    %3564 = vmatpush1.msra.mxu0 %v214
    %3565 = vmatprep.subr.mxu0 0.0
    %3566 = vmatpush1.msra.mxu0 %v213
    %3567 = vmatprep.subr.mxu0 0.0
    %3568 = vmatpush2.msra.mxu0 0.0
    %3569 = vmatprep.subr.mxu0 0.0
    %3570 = vmatpush2.msra.mxu0 0.0
    %3571 = vmatprep.subr.mxu0 0.0
    %3572 = vmatpush2.msra.mxu0 0.0
    %3573 = vmatprep.subr.mxu0 0.0
    %3574 = vmatpush2.msra.mxu0 0.0
    %3575 = vmatprep.subr.mxu0 0.0
    %3576 = vmatpush2.msra.mxu0 0.0
    %3577 = vmatprep.subr.mxu0 0.0
    %3578 = vmatpush2.msra.mxu0 0.0
    %3579 = vmatprep.subr.mxu0 0.0
    %3580 = vmatpush2.msra.mxu0 0.0
    %3581 = vmatprep.subr.mxu0 0.0
    %3582 = vmatpush2.msra.mxu0 0.0
    %3583 = vmatprep.subr.mxu0 0.0
    %3584 = vmatpush2.msra.mxu0 0.0
    %3585 = vmatprep.subr.mxu0 0.0
    %3586 = vmatpush2.msra.mxu0 0.0
    %3587 = vmatprep.subr.mxu0 0.0
    %3588 = vmatpush2.msra.mxu0 0.0
    %3589 = vmatprep.subr.mxu0 0.0
    %3590 = vmatpush2.msra.mxu0 0.0
    %3591 = vmatprep.subr.mxu0 0.0
    %3592 = vmatpush2.msra.mxu0 0.0
    %3593 = vmatprep.subr.mxu0 0.0
    %3594 = vmatpush2.msra.mxu0 0.0
    %3595 = vmatprep.subr.mxu0 0.0
    %3596 = vmatpush2.msra.mxu0 0.0
    %3597 = vmatprep.subr.mxu0 0.0
    %3598 = vmatpush2.msra.mxu0 0.0
    %3599 = vmatprep.mubr.f32.mxu0 0.0
    %3600 = vmatmul.mubr.f32.gmra.mxu0 %v3530
    %v3601 = vpop.f32.mrf.mxu0
    %v3602 = vadd.f32 %v1645, %v3601
    %v3603 = vpop.f32.mrf.mxu0
    %3604 = vmatprep.mubr.f32.mxu0 0.0
    %3605 = vmatmul.mubr.f32.gmra.mxu0 %v3533
    %v3606 = vpop.f32.mrf.mxu0
    %v3607 = vadd.f32 %v1645, %v3606
    %v3608 = vpop.f32.mrf.mxu0
    %3609 = vdwg.mxu0
    %v3610 = vtanh.pop %v3602
    %v3611 = vtanh.pop %v3607
    %v3612 = vmul.f32 %v3610, %v1651
    %v3613 = vmul.f32 %v3611, %v1651
    %v3614 = vsel %vm351, %v3612, 0.0
    %3615 = vadd.xlane.f32.xlu0 %v3614
    %v3616 = vpop.xlane.xlu0 %3615
    %v3617 = vsel %vm351, %v3613, 0.0
    %3618 = vadd.xlane.f32.xlu0 %v3617
    %v3619 = vpop.xlane.xlu0 %3618
    %v3622 = vlaneseq
    %v3623 = vshrl.u32 %v3622, 7
    %v3624 = vsub.s32 %v1665, %v3623
    %v3625 = vrot.slane %v3616, %v3624
    %v3626 = vlaneseq
    %v3627 = vshrl.u32 %v3626, 7
    %v3628 = vsub.s32 %v1665, %v3627
    %v3629 = vrot.slane %v3619, %v3628
    %v3630 = vsel %vm569, %v3629, %v3625
    %v3632 = vsel %vm2402, %v3630, -inf
    %3633 = vmax.xlane.f32.xlu0 %v3632
    %v3634 = vpop.xlane.xlu0 %3633
    %v3636 = vlaneseq
    %v3637 = vshrl.u32 %v3636, 7
    %v3638 = vsub.s32 0, %v3637
    %v3639 = vrot.slane %v3634, %v3638
    %v3640 = vlaneseq
    %v3641 = vshrl.u32 %v3640, 7
    %v3642 = vsub.s32 1, %v3641
    %v3643 = vrot.slane %v3634, %v3642
    %v3646 = vsub.f32 %v3616, %v3639
    %v3647 = vsub.f32 %v3619, %v3643
    %v3648 = vmul.f32 %v3646, 1.442695
    %v3649 = vpow.pop %v3648
    %v3650 = vmul.f32 %v3647, 1.442695
    %v3651 = vpow.pop %v3650
    %3654 = vset.pattern.permute.xlu0 0
    %3655 = vperm.xlu0 %3654, %v3649
    %v3656 = vpop.permute.xlu0 %3655
    %3657 = vset.pattern.permute.xlu0 0
    %3658 = vperm.xlu0 %3657, %v3651
    %v3659 = vpop.permute.xlu0 %3658
    %v3660 = vlaneseq
    %v3661 = vshrl.u32 %v3660, 7
    %v3662 = vsub.s32 %v1665, %v3661
    %v3663 = vrot.slane %v3656, %v3662
    %v3664 = vlaneseq
    %v3665 = vshrl.u32 %v3664, 7
    %v3666 = vsub.s32 %v1665, %v3665
    %v3667 = vrot.slane %v3659, %v3666
    %v3668 = vsel %vm569, %v3667, %v3663
    %v3670 = vsel %vm2402, %v3668, 0.0
    %3671 = vadd.xlane.f32.xlu0 %v3670
    %v3672 = vpop.xlane.xlu0 %3671
    %v3674 = vlaneseq
    %v3675 = vshrl.u32 %v3674, 7
    %v3676 = vsub.s32 0, %v3675
    %v3677 = vrot.slane %v3672, %v3676
    %v3678 = vlaneseq
    %v3679 = vshrl.u32 %v3678, 7
    %v3680 = vsub.s32 1, %v3679
    %v3681 = vrot.slane %v3672, %v3680
    %v3684 = vrcp.pop %v3677
    %v3685 = vmul.f32 %v3649, %v3684
    %v3686 = vrcp.pop %v3681
    %v3687 = vmul.f32 %v3651, %v3686
    %3689 = vset.pattern.permute.xlu0 0
    %3690 = vperm.xlu0 %3689, %v3685
    %v3691 = vpop.permute.xlu0 %3690
    %3694 = vset.pattern.permute.xlu0 0
    %3695 = vperm.xlu0 %3694, %v3687
    %v3696 = vpop.permute.xlu0 %3695
    %v3698 = vmul.f32 %v3691, %v1548
    %v3699 = vmul.f32 %v3696, %v1549
    %v3700 = vsel %vm2471, %v3698, 0.0
    %v3701 = vrot.slane %v3700, 4
    %v3702 = vadd.f32 %v3700, %v3701
    %v3703 = vrot.slane %v3702, 2
    %v3704 = vadd.f32 %v3702, %v3703
    %v3705 = vrot.slane %v3704, 1
    %v3706 = vadd.f32 %v3704, %v3705
    %v3707 = vsel %vm2471, %v3699, 0.0
    %v3708 = vrot.slane %v3707, 4
    %v3709 = vadd.f32 %v3707, %v3708
    %v3710 = vrot.slane %v3709, 2
    %v3711 = vadd.f32 %v3709, %v3710
    %v3712 = vrot.slane %v3711, 1
    %v3713 = vadd.f32 %v3711, %v3712
    %v3716 = vsel %vm569, %v3713, %v3706
    %3717 = vrot.lane.b32.xlu0 %v3716, 96
    %v3718 = vpop.permute.xlu0 %3717
    %v3719 = vsel %vm351, %v3718, 0
    %3721 = vmatprep.subr.mxu0 0.0
    %3722 = vmatpush1.msra.mxu0 0.0
    %3723 = vmatprep.subr.mxu0 0.0
    %3724 = vmatpush1.msra.mxu0 0.0
    %3725 = vmatprep.subr.mxu0 0.0
    %3726 = vmatpush1.msra.mxu0 0.0
    %3727 = vmatprep.subr.mxu0 0.0
    %3728 = vmatpush1.msra.mxu0 0.0
    %3729 = vmatprep.subr.mxu0 0.0
    %3730 = vmatpush1.msra.mxu0 0.0
    %3731 = vmatprep.subr.mxu0 0.0
    %3732 = vmatpush1.msra.mxu0 0.0
    %3733 = vmatprep.subr.mxu0 0.0
    %3734 = vmatpush1.msra.mxu0 0.0
    %3735 = vmatprep.subr.mxu0 0.0
    %3736 = vmatpush1.msra.mxu0 0.0
    %3737 = vmatprep.subr.mxu0 0.0
    %3738 = vmatpush1.msra.mxu0 0.0
    %3739 = vmatprep.subr.mxu0 0.0
    %3740 = vmatpush1.msra.mxu0 0.0
    %3741 = vmatprep.subr.mxu0 0.0
    %3742 = vmatpush1.msra.mxu0 0.0
    %3743 = vmatprep.subr.mxu0 0.0
    %3744 = vmatpush1.msra.mxu0 0.0
    %3745 = vmatprep.subr.mxu0 0.0
    %3746 = vmatpush1.msra.mxu0 %v230
    %3747 = vmatprep.subr.mxu0 0.0
    %3748 = vmatpush1.msra.mxu0 %v229
    %3749 = vmatprep.subr.mxu0 0.0
    %3750 = vmatpush1.msra.mxu0 %v228
    %3751 = vmatprep.subr.mxu0 0.0
    %3752 = vmatpush1.msra.mxu0 %v227
    %3753 = vmatprep.subr.mxu0 0.0
    %3754 = vmatpush2.msra.mxu0 0.0
    %3755 = vmatprep.subr.mxu0 0.0
    %3756 = vmatpush2.msra.mxu0 0.0
    %3757 = vmatprep.subr.mxu0 0.0
    %3758 = vmatpush2.msra.mxu0 0.0
    %3759 = vmatprep.subr.mxu0 0.0
    %3760 = vmatpush2.msra.mxu0 0.0
    %3761 = vmatprep.subr.mxu0 0.0
    %3762 = vmatpush2.msra.mxu0 0.0
    %3763 = vmatprep.subr.mxu0 0.0
    %3764 = vmatpush2.msra.mxu0 0.0
    %3765 = vmatprep.subr.mxu0 0.0
    %3766 = vmatpush2.msra.mxu0 0.0
    %3767 = vmatprep.subr.mxu0 0.0
    %3768 = vmatpush2.msra.mxu0 0.0
    %3769 = vmatprep.subr.mxu0 0.0
    %3770 = vmatpush2.msra.mxu0 0.0
    %3771 = vmatprep.subr.mxu0 0.0
    %3772 = vmatpush2.msra.mxu0 0.0
    %3773 = vmatprep.subr.mxu0 0.0
    %3774 = vmatpush2.msra.mxu0 0.0
    %3775 = vmatprep.subr.mxu0 0.0
    %3776 = vmatpush2.msra.mxu0 0.0
    %3777 = vmatprep.subr.mxu0 0.0
    %3778 = vmatpush2.msra.mxu0 0.0
    %3779 = vmatprep.subr.mxu0 0.0
    %3780 = vmatpush2.msra.mxu0 0.0
    %3781 = vmatprep.subr.mxu0 0.0
    %3782 = vmatpush2.msra.mxu0 0.0
    %3783 = vmatprep.subr.mxu0 0.0
    %3784 = vmatpush2.msra.mxu0 0.0
    %3785 = vmatprep.mubr.f32.mxu0 0.0
    %3786 = vmatmul.mubr.f32.gmra.mxu0 %v3719
    %v3787 = vpop.f32.mrf.mxu0
    %v3788 = vadd.f32 0.0, %v3787
    %v3789 = vpop.f32.mrf.mxu0
    %3790 = vdwg.mxu0
    %v3793 = vunpack.c.l.s4 1966171168
    %v3794 = vunpack.c.0.s8 %v3793
    %v3795 = vlaneseq
    %v3796 = vshrl.u32 %v3795, 7
    %v3797 = vsub.s32 %v3794, %v3796
    %v3798 = vrot.slane %v3788, %v3797
    %v3799 = vcombine.high %v3798, %v3798
    %v3801 = vunpack.c.l.s4 1966171168
    %v3802 = vunpack.c.0.s8 %v3801
    %v3803 = vlaneseq
    %v3804 = vshrl.u32 %v3803, 7
    %v3805 = vsub.s32 %v3802, %v3804
    %v3806 = vrot.slane %v3798, %v3805
    %v3808 = vunpack.c.l.s4 1966171168
    %v3809 = vunpack.c.0.s8 %v3808
    %v3810 = vlaneseq
    %v3811 = vshrl.u32 %v3810, 7
    %v3812 = vsub.s32 %v3809, %v3811
    %v3813 = vrot.slane %v3799, %v3812
    %v3816 = vadd.f32 %v2143, %v3806
    %v3817 = vadd.f32 %v2146, %v3813
    %v3820 = vunpack.c.l.s4 1966171168
    %v3821 = vunpack.c.0.s8 %v3820
    %v3822 = vlaneseq
    %v3823 = vshrl.u32 %v3822, 7
    %v3824 = vsub.s32 %v3821, %v3823
    %v3825 = vrot.slane %v3491, %v3824
    %v3826 = vcombine.high %v3825, %v3825
    %v3828 = vunpack.c.l.s4 1966171168
    %v3829 = vunpack.c.0.s8 %v3828
    %v3830 = vlaneseq
    %v3831 = vshrl.u32 %v3830, 7
    %v3832 = vsub.s32 %v3829, %v3831
    %v3833 = vrot.slane %v3825, %v3832
    %v3835 = vunpack.c.l.s4 1966171168
    %v3836 = vunpack.c.0.s8 %v3835
    %v3837 = vlaneseq
    %v3838 = vshrl.u32 %v3837, 7
    %v3839 = vsub.s32 %v3836, %v3838
    %v3840 = vrot.slane %v3826, %v3839
    %3841 = vrot.lane.b32.xlu0 %v3833, 96
    %v3842 = vpop.permute.xlu0 %3841
    %3843 = vrot.lane.b32.xlu0 %v3840, 96
    %v3844 = vpop.permute.xlu0 %3843
    %v3847 = vadd.f32 %v3816, %v3842
    %v3848 = vadd.f32 %v3817, %v3844
    %v3849 = vxor.u32 %v3847, 2147483648
    %v3850 = vxor.u32 %v3848, 2147483648
    %v3851 = vmul.f32 %v3849, 1.442695
    %v3852 = vpow.pop %v3851
    %v3853 = vmul.f32 %v3850, 1.442695
    %v3854 = vpow.pop %v3853
    %v3855 = vadd.f32 %v3852, 1.0
    %v3856 = vadd.f32 %v3854, 1.0
    %v3857 = vrcp.pop %v3855
    %v3858 = vmul.f32 1.0, %v3857
    %v3859 = vrcp.pop %v3856
    %v3860 = vmul.f32 1.0, %v3859
    %3861 = vrot.lane.b32.xlu0 %v3833, 32
    %v3862 = vpop.permute.xlu0 %3861
    %3863 = vrot.lane.b32.xlu0 %v3840, 32
    %v3864 = vpop.permute.xlu0 %3863
    %v3867 = vmul.f32 %v3858, %v3862
    %v3868 = vmul.f32 %v3860, %v3864
    %3871 = vrot.lane.b32.xlu0 %v3867, 64
    %v3872 = vpop.permute.xlu0 %3871
    %3873 = vrot.lane.b32.xlu0 %v3868, 64
    %v3874 = vpop.permute.xlu0 %3873
    %v3877 = vadd.f32 %v3816, %v3872
    %v3878 = vadd.f32 %v3817, %v3874
    %v3879 = vtanh.pop %v3877
    %v3880 = vtanh.pop %v3878
    %v3881 = vsub.f32 1.0, %v3858
    %v3882 = vsub.f32 1.0, %v3860
    %3885 = vrot.lane.b32.xlu0 %v3879, 96
    %v3886 = vpop.permute.xlu0 %3885
    %3887 = vrot.lane.b32.xlu0 %v3880, 96
    %v3888 = vpop.permute.xlu0 %3887
    %v3891 = vmul.f32 %v3881, %v3886
    %v3892 = vmul.f32 %v3882, %v3888
    %v3893 = vmul.f32 %v3858, %v3299
    %v3894 = vmul.f32 %v3860, %v3300
    %v3895 = vadd.f32 %v3891, %v3893
    %v3896 = vadd.f32 %v3892, %v3894
    %v3899 = vcombine.low %v3895, %v3896
    %v3901 = vunpack.c.l.s4 1966171168
    %v3902 = vunpack.c.0.s8 %v3901
    %v3903 = vlaneseq
    %v3904 = vshrl.u32 %v3903, 7
    %v3905 = vsub.s32 %v3902, %v3904
    %v3906 = vrot.slane %v3899, %v3905
    %v3908 = vunpack.c.l.s4 1966171168
    %v3909 = vunpack.c.0.s8 %v3908
    %v3910 = vlaneseq
    %v3911 = vshrl.u32 %v3910, 7
    %v3912 = vsub.s32 %v3909, %v3911
    %v3913 = vrot.slane %v3906, %v3912
    %3914 = vrot.lane.b32.xlu0 %v3913, 96
    %v3915 = vpop.permute.xlu0 %3914
    %v3916 = vsel %vm351, %v3915, 0
    %3918 = vmatprep.subr.mxu0 0.0
    %3919 = vmatpush1.msra.mxu0 0.0
    %3920 = vmatprep.subr.mxu0 0.0
    %3921 = vmatpush1.msra.mxu0 0.0
    %3922 = vmatprep.subr.mxu0 0.0
    %3923 = vmatpush1.msra.mxu0 0.0
    %3924 = vmatprep.subr.mxu0 0.0
    %3925 = vmatpush1.msra.mxu0 0.0
    %3926 = vmatprep.subr.mxu0 0.0
    %3927 = vmatpush1.msra.mxu0 0.0
    %3928 = vmatprep.subr.mxu0 0.0
    %3929 = vmatpush1.msra.mxu0 0.0
    %3930 = vmatprep.subr.mxu0 0.0
    %3931 = vmatpush1.msra.mxu0 0.0
    %3932 = vmatprep.subr.mxu0 0.0
    %3933 = vmatpush1.msra.mxu0 0.0
    %3934 = vmatprep.subr.mxu0 0.0
    %3935 = vmatpush1.msra.mxu0 0.0
    %3936 = vmatprep.subr.mxu0 0.0
    %3937 = vmatpush1.msra.mxu0 0.0
    %3938 = vmatprep.subr.mxu0 0.0
    %3939 = vmatpush1.msra.mxu0 0.0
    %3940 = vmatprep.subr.mxu0 0.0
    %3941 = vmatpush1.msra.mxu0 0.0
    %3942 = vmatprep.subr.mxu0 0.0
    %3943 = vmatpush1.msra.mxu0 %v252
    %3944 = vmatprep.subr.mxu0 0.0
    %3945 = vmatpush1.msra.mxu0 %v251
    %3946 = vmatprep.subr.mxu0 0.0
    %3947 = vmatpush1.msra.mxu0 %v250
    %3948 = vmatprep.subr.mxu0 0.0
    %3949 = vmatpush1.msra.mxu0 %v249
    %3950 = vmatprep.subr.mxu0 0.0
    %3951 = vmatpush2.msra.mxu0 0.0
    %3952 = vmatprep.subr.mxu0 0.0
    %3953 = vmatpush2.msra.mxu0 0.0
    %3954 = vmatprep.subr.mxu0 0.0
    %3955 = vmatpush2.msra.mxu0 0.0
    %3956 = vmatprep.subr.mxu0 0.0
    %3957 = vmatpush2.msra.mxu0 0.0
    %3958 = vmatprep.subr.mxu0 0.0
    %3959 = vmatpush2.msra.mxu0 0.0
    %3960 = vmatprep.subr.mxu0 0.0
    %3961 = vmatpush2.msra.mxu0 0.0
    %3962 = vmatprep.subr.mxu0 0.0
    %3963 = vmatpush2.msra.mxu0 0.0
    %3964 = vmatprep.subr.mxu0 0.0
    %3965 = vmatpush2.msra.mxu0 0.0
    %3966 = vmatprep.subr.mxu0 0.0
    %3967 = vmatpush2.msra.mxu0 0.0
    %3968 = vmatprep.subr.mxu0 0.0
    %3969 = vmatpush2.msra.mxu0 0.0
    %3970 = vmatprep.subr.mxu0 0.0
    %3971 = vmatpush2.msra.mxu0 0.0
    %3972 = vmatprep.subr.mxu0 0.0
    %3973 = vmatpush2.msra.mxu0 0.0
    %3974 = vmatprep.subr.mxu0 0.0
    %3975 = vmatpush2.msra.mxu0 0.0
    %3976 = vmatprep.subr.mxu0 0.0
    %3977 = vmatpush2.msra.mxu0 0.0
    %3978 = vmatprep.subr.mxu0 0.0
    %3979 = vmatpush2.msra.mxu0 0.0
    %3980 = vmatprep.subr.mxu0 0.0
    %3981 = vmatpush2.msra.mxu0 0.0
    %3982 = vmatprep.mubr.f32.mxu0 0.0
    %3983 = vmatmul.mubr.f32.gmra.mxu0 %v3916
    %v3984 = vpop.f32.mrf.mxu0
    %v3985 = vadd.f32 %v1662, %v3984
    %v3986 = vpop.f32.mrf.mxu0
    %3987 = vdwg.mxu0
    %v3988 = vsel %vm1532, %v3985, -inf
    %3989 = vmax.xlane.f32.xlu0 %v3988
    %v3990 = vpop.xlane.xlu0 %3989
    %v3991 = vsub.f32 %v3985, %v3990
    %v3992 = vmul.f32 %v3991, 1.442695
    %v3993 = vpow.pop %v3992
    %v3994 = vsel %vm1532, %v3993, 0.0
    %3995 = vadd.xlane.f32.xlu0 %v3994
    %v3996 = vpop.xlane.xlu0 %3995
    %v3997 = vlog2.pop %v3996
    %v3998 = vmul.f32 %v3997, 0.6931472
    %v3999 = vsub.f32 %v3991, %v3998
    %vm4000 = vcmp.ge.f32.partialorder %v3985, %v3990
    %v4001 = vsel %vm4000, %v1665, 128
    %v4002 = vsel %vm1532, %v4001, 2147483647
    %v4003 = vand.u32 %v4002, 65535
    %v4004 = vshra.s32 %v4002, 16
    %v4005 = vcvt.s32.f32 %v4003
    %v4006 = vcvt.s32.f32 %v4004
    %4007 = vmin.xlane.f32.xlu0 %v4006
    %v4008 = vpop.xlane.xlu0 %4007
    %vm4009 = vcmp.eq.f32.partialorder %v4006, %v4008
    %v4010 = vsel %vm4009, %v4005, inf
    %4011 = vmin.xlane.f32.xlu0 %v4010
    %v4012 = vpop.xlane.xlu0 %4011
    %v4013 = vcvt.f32.s32 %v4012
    %v4014 = vcvt.f32.s32 %v4008
    %v4015 = vshll.u32 %v4014, 16
    %v4016 = vadd.s32 %v4015, %v4013
    %4017 = vmatprep.subr.mxu0 0.0
    %4018 = vmatpush1.msra.mxu0 0.0
    %4019 = vmatprep.subr.mxu0 0.0
    %4020 = vmatpush1.msra.mxu0 0.0
    %4021 = vmatprep.subr.mxu0 0.0
    %4022 = vmatpush1.msra.mxu0 0.0
    %4023 = vmatprep.subr.mxu0 0.0
    %4024 = vmatpush1.msra.mxu0 0.0
    %4025 = vmatprep.subr.mxu0 0.0
    %4026 = vmatpush1.msra.mxu0 0.0
    %4027 = vmatprep.subr.mxu0 0.0
    %4028 = vmatpush1.msra.mxu0 0.0
    %4029 = vmatprep.subr.mxu0 0.0
    %4030 = vmatpush1.msra.mxu0 0.0
    %4031 = vmatprep.subr.mxu0 0.0
    %4032 = vmatpush1.msra.mxu0 0.0
    %4033 = vmatprep.subr.mxu0 0.0
    %4034 = vmatpush1.msra.mxu0 0.0
    %4035 = vmatprep.subr.mxu0 0.0
    %4036 = vmatpush1.msra.mxu0 0.0
    %4037 = vmatprep.subr.mxu0 0.0
    %4038 = vmatpush1.msra.mxu0 0.0
    %4039 = vmatprep.subr.mxu0 0.0
    %4040 = vmatpush1.msra.mxu0 0.0
    %4041 = vmatprep.subr.mxu0 0.0
    %4042 = vmatpush1.msra.mxu0 %v222
    %4043 = vmatprep.subr.mxu0 0.0
    %4044 = vmatpush1.msra.mxu0 %v221
    %4045 = vmatprep.subr.mxu0 0.0
    %4046 = vmatpush1.msra.mxu0 %v220
    %4047 = vmatprep.subr.mxu0 0.0
    %4048 = vmatpush1.msra.mxu0 %v219
    %4049 = vmatprep.subr.mxu0 0.0
    %4050 = vmatpush2.msra.mxu0 0.0
    %4051 = vmatprep.subr.mxu0 0.0
    %4052 = vmatpush2.msra.mxu0 0.0
    %4053 = vmatprep.subr.mxu0 0.0
    %4054 = vmatpush2.msra.mxu0 0.0
    %4055 = vmatprep.subr.mxu0 0.0
    %4056 = vmatpush2.msra.mxu0 0.0
    %4057 = vmatprep.subr.mxu0 0.0
    %4058 = vmatpush2.msra.mxu0 0.0
    %4059 = vmatprep.subr.mxu0 0.0
    %4060 = vmatpush2.msra.mxu0 0.0
    %4061 = vmatprep.subr.mxu0 0.0
    %4062 = vmatpush2.msra.mxu0 0.0
    %4063 = vmatprep.subr.mxu0 0.0
    %4064 = vmatpush2.msra.mxu0 0.0
    %4065 = vmatprep.subr.mxu0 0.0
    %4066 = vmatpush2.msra.mxu0 0.0
    %4067 = vmatprep.subr.mxu0 0.0
    %4068 = vmatpush2.msra.mxu0 0.0
    %4069 = vmatprep.subr.mxu0 0.0
    %4070 = vmatpush2.msra.mxu0 0.0
    %4071 = vmatprep.subr.mxu0 0.0
    %4072 = vmatpush2.msra.mxu0 0.0
    %4073 = vmatprep.subr.mxu0 0.0
    %4074 = vmatpush2.msra.mxu0 0.0
    %4075 = vmatprep.subr.mxu0 0.0
    %4076 = vmatpush2.msra.mxu0 0.0
    %4077 = vmatprep.subr.mxu0 0.0
    %4078 = vmatpush2.msra.mxu0 0.0
    %4079 = vmatprep.subr.mxu0 0.0
    %4080 = vmatpush2.msra.mxu0 0.0
    %4081 = vmatprep.mubr.f32.mxu0 0.0
    %4082 = vmatmul.mubr.f32.gmra.mxu0 %v3916
    %v4083 = vpop.f32.mrf.mxu0
    %v4084 = vadd.f32 0.0, %v4083
    %v4085 = vpop.f32.mrf.mxu0
    %4086 = vdwg.mxu0
    %v4087 = vadd.f32 %v4084, %v2259
    %v4090 = vunpack.c.l.s4 1966171168
    %v4091 = vunpack.c.0.s8 %v4090
    %v4092 = vlaneseq
    %v4093 = vshrl.u32 %v4092, 7
    %v4094 = vsub.s32 %v4091, %v4093
    %v4095 = vrot.slane %v4084, %v4094
    %v4096 = vcombine.high %v4095, %v4095
    %v4098 = vunpack.c.l.s4 1966171168
    %v4099 = vunpack.c.0.s8 %v4098
    %v4100 = vlaneseq
    %v4101 = vshrl.u32 %v4100, 7
    %v4102 = vsub.s32 %v4099, %v4101
    %v4103 = vrot.slane %v4095, %v4102
    %v4105 = vunpack.c.l.s4 1966171168
    %v4106 = vunpack.c.0.s8 %v4105
    %v4107 = vlaneseq
    %v4108 = vshrl.u32 %v4107, 7
    %v4109 = vsub.s32 %v4106, %v4108
    %v4110 = vrot.slane %v4096, %v4109
    %v4111 = vlaneseq
    %v4112 = vshrl.u32 %v4111, 7
    %v4113 = vsub.s32 0, %v4112
    %v4114 = vrot.slane %v4103, %v4113
    %v4115 = vlaneseq
    %v4116 = vshrl.u32 %v4115, 7
    %v4117 = vsub.s32 0, %v4116
    %v4118 = vrot.slane %v4110, %v4117
    %v4121 = vadd.f32 %v1633, %v4114
    %v4122 = vadd.f32 %v1638, %v4118
    %v4123 = vtanh.pop %v4121
    %v4124 = vtanh.pop %v4122
    %v4126 = vsel %vm351, %v4123, 0
    %v4129 = vsel %vm351, %v4124, 0
    %4131 = vmatprep.subr.mxu0 0.0
    %4132 = vmatpush1.msra.mxu0 0.0
    %4133 = vmatprep.subr.mxu0 0.0
    %4134 = vmatpush1.msra.mxu0 0.0
    %4135 = vmatprep.subr.mxu0 0.0
    %4136 = vmatpush1.msra.mxu0 0.0
    %4137 = vmatprep.subr.mxu0 0.0
    %4138 = vmatpush1.msra.mxu0 0.0
    %4139 = vmatprep.subr.mxu0 0.0
    %4140 = vmatpush1.msra.mxu0 0.0
    %4141 = vmatprep.subr.mxu0 0.0
    %4142 = vmatpush1.msra.mxu0 0.0
    %4143 = vmatprep.subr.mxu0 0.0
    %4144 = vmatpush1.msra.mxu0 0.0
    %4145 = vmatprep.subr.mxu0 0.0
    %4146 = vmatpush1.msra.mxu0 0.0
    %4147 = vmatprep.subr.mxu0 0.0
    %4148 = vmatpush1.msra.mxu0 0.0
    %4149 = vmatprep.subr.mxu0 0.0
    %4150 = vmatpush1.msra.mxu0 0.0
    %4151 = vmatprep.subr.mxu0 0.0
    %4152 = vmatpush1.msra.mxu0 0.0
    %4153 = vmatprep.subr.mxu0 0.0
    %4154 = vmatpush1.msra.mxu0 0.0
    %4155 = vmatprep.subr.mxu0 0.0
    %4156 = vmatpush1.msra.mxu0 %v216
    %4157 = vmatprep.subr.mxu0 0.0
    %4158 = vmatpush1.msra.mxu0 %v215
    %4159 = vmatprep.subr.mxu0 0.0
    %4160 = vmatpush1.msra.mxu0 %v214
    %4161 = vmatprep.subr.mxu0 0.0
    %4162 = vmatpush1.msra.mxu0 %v213
    %4163 = vmatprep.subr.mxu0 0.0
    %4164 = vmatpush2.msra.mxu0 0.0
    %4165 = vmatprep.subr.mxu0 0.0
    %4166 = vmatpush2.msra.mxu0 0.0
    %4167 = vmatprep.subr.mxu0 0.0
    %4168 = vmatpush2.msra.mxu0 0.0
    %4169 = vmatprep.subr.mxu0 0.0
    %4170 = vmatpush2.msra.mxu0 0.0
    %4171 = vmatprep.subr.mxu0 0.0
    %4172 = vmatpush2.msra.mxu0 0.0
    %4173 = vmatprep.subr.mxu0 0.0
    %4174 = vmatpush2.msra.mxu0 0.0
    %4175 = vmatprep.subr.mxu0 0.0
    %4176 = vmatpush2.msra.mxu0 0.0
    %4177 = vmatprep.subr.mxu0 0.0
    %4178 = vmatpush2.msra.mxu0 0.0
    %4179 = vmatprep.subr.mxu0 0.0
    %4180 = vmatpush2.msra.mxu0 0.0
    %4181 = vmatprep.subr.mxu0 0.0
    %4182 = vmatpush2.msra.mxu0 0.0
    %4183 = vmatprep.subr.mxu0 0.0
    %4184 = vmatpush2.msra.mxu0 0.0
    %4185 = vmatprep.subr.mxu0 0.0
    %4186 = vmatpush2.msra.mxu0 0.0
    %4187 = vmatprep.subr.mxu0 0.0
    %4188 = vmatpush2.msra.mxu0 0.0
    %4189 = vmatprep.subr.mxu0 0.0
    %4190 = vmatpush2.msra.mxu0 0.0
    %4191 = vmatprep.subr.mxu0 0.0
    %4192 = vmatpush2.msra.mxu0 0.0
    %4193 = vmatprep.subr.mxu0 0.0
    %4194 = vmatpush2.msra.mxu0 0.0
    %4195 = vmatprep.mubr.f32.mxu0 0.0
    %4196 = vmatmul.mubr.f32.gmra.mxu0 %v4126
    %v4197 = vpop.f32.mrf.mxu0
    %v4198 = vadd.f32 %v1645, %v4197
    %v4199 = vpop.f32.mrf.mxu0
    %4200 = vmatprep.mubr.f32.mxu0 0.0
    %4201 = vmatmul.mubr.f32.gmra.mxu0 %v4129
    %v4202 = vpop.f32.mrf.mxu0
    %v4203 = vadd.f32 %v1645, %v4202
    %v4204 = vpop.f32.mrf.mxu0
    %4205 = vdwg.mxu0
    %v4206 = vtanh.pop %v4198
    %v4207 = vtanh.pop %v4203
    %v4208 = vmul.f32 %v4206, %v1651
    %v4209 = vmul.f32 %v4207, %v1651
    %v4210 = vsel %vm351, %v4208, 0.0
    %4211 = vadd.xlane.f32.xlu0 %v4210
    %v4212 = vpop.xlane.xlu0 %4211
    %v4213 = vsel %vm351, %v4209, 0.0
    %4214 = vadd.xlane.f32.xlu0 %v4213
    %v4215 = vpop.xlane.xlu0 %4214
    %v4218 = vlaneseq
    %v4219 = vshrl.u32 %v4218, 7
    %v4220 = vsub.s32 %v1665, %v4219
    %v4221 = vrot.slane %v4212, %v4220
    %v4222 = vlaneseq
    %v4223 = vshrl.u32 %v4222, 7
    %v4224 = vsub.s32 %v1665, %v4223
    %v4225 = vrot.slane %v4215, %v4224
    %v4226 = vsel %vm569, %v4225, %v4221
    %v4228 = vsel %vm2402, %v4226, -inf
    %4229 = vmax.xlane.f32.xlu0 %v4228
    %v4230 = vpop.xlane.xlu0 %4229
    %v4232 = vlaneseq
    %v4233 = vshrl.u32 %v4232, 7
    %v4234 = vsub.s32 0, %v4233
    %v4235 = vrot.slane %v4230, %v4234
    %v4236 = vlaneseq
    %v4237 = vshrl.u32 %v4236, 7
    %v4238 = vsub.s32 1, %v4237
    %v4239 = vrot.slane %v4230, %v4238
    %v4242 = vsub.f32 %v4212, %v4235
    %v4243 = vsub.f32 %v4215, %v4239
    %v4244 = vmul.f32 %v4242, 1.442695
    %v4245 = vpow.pop %v4244
    %v4246 = vmul.f32 %v4243, 1.442695
    %v4247 = vpow.pop %v4246
    %4250 = vset.pattern.permute.xlu0 0
    %4251 = vperm.xlu0 %4250, %v4245
    %v4252 = vpop.permute.xlu0 %4251
    %4253 = vset.pattern.permute.xlu0 0
    %4254 = vperm.xlu0 %4253, %v4247
    %v4255 = vpop.permute.xlu0 %4254
    %v4256 = vlaneseq
    %v4257 = vshrl.u32 %v4256, 7
    %v4258 = vsub.s32 %v1665, %v4257
    %v4259 = vrot.slane %v4252, %v4258
    %v4260 = vlaneseq
    %v4261 = vshrl.u32 %v4260, 7
    %v4262 = vsub.s32 %v1665, %v4261
    %v4263 = vrot.slane %v4255, %v4262
    %v4264 = vsel %vm569, %v4263, %v4259
    %v4266 = vsel %vm2402, %v4264, 0.0
    %4267 = vadd.xlane.f32.xlu0 %v4266
    %v4268 = vpop.xlane.xlu0 %4267
    %v4270 = vlaneseq
    %v4271 = vshrl.u32 %v4270, 7
    %v4272 = vsub.s32 0, %v4271
    %v4273 = vrot.slane %v4268, %v4272
    %v4274 = vlaneseq
    %v4275 = vshrl.u32 %v4274, 7
    %v4276 = vsub.s32 1, %v4275
    %v4277 = vrot.slane %v4268, %v4276
    %v4280 = vrcp.pop %v4273
    %v4281 = vmul.f32 %v4245, %v4280
    %v4282 = vrcp.pop %v4277
    %v4283 = vmul.f32 %v4247, %v4282
    %4285 = vset.pattern.permute.xlu0 0
    %4286 = vperm.xlu0 %4285, %v4281
    %v4287 = vpop.permute.xlu0 %4286
    %4290 = vset.pattern.permute.xlu0 0
    %4291 = vperm.xlu0 %4290, %v4283
    %v4292 = vpop.permute.xlu0 %4291
    %v4294 = vmul.f32 %v4287, %v1548
    %v4295 = vmul.f32 %v4292, %v1549
    %v4296 = vsel %vm2471, %v4294, 0.0
    %v4297 = vrot.slane %v4296, 4
    %v4298 = vadd.f32 %v4296, %v4297
    %v4299 = vrot.slane %v4298, 2
    %v4300 = vadd.f32 %v4298, %v4299
    %v4301 = vrot.slane %v4300, 1
    %v4302 = vadd.f32 %v4300, %v4301
    %v4303 = vsel %vm2471, %v4295, 0.0
    %v4304 = vrot.slane %v4303, 4
    %v4305 = vadd.f32 %v4303, %v4304
    %v4306 = vrot.slane %v4305, 2
    %v4307 = vadd.f32 %v4305, %v4306
    %v4308 = vrot.slane %v4307, 1
    %v4309 = vadd.f32 %v4307, %v4308
    %v4312 = vsel %vm569, %v4309, %v4302
    %4313 = vrot.lane.b32.xlu0 %v4312, 96
    %v4314 = vpop.permute.xlu0 %4313
    %v4315 = vsel %vm351, %v4314, 0
    %4317 = vmatprep.subr.mxu0 0.0
    %4318 = vmatpush1.msra.mxu0 0.0
    %4319 = vmatprep.subr.mxu0 0.0
    %4320 = vmatpush1.msra.mxu0 0.0
    %4321 = vmatprep.subr.mxu0 0.0
    %4322 = vmatpush1.msra.mxu0 0.0
    %4323 = vmatprep.subr.mxu0 0.0
    %4324 = vmatpush1.msra.mxu0 0.0
    %4325 = vmatprep.subr.mxu0 0.0
    %4326 = vmatpush1.msra.mxu0 0.0
    %4327 = vmatprep.subr.mxu0 0.0
    %4328 = vmatpush1.msra.mxu0 0.0
    %4329 = vmatprep.subr.mxu0 0.0
    %4330 = vmatpush1.msra.mxu0 0.0
    %4331 = vmatprep.subr.mxu0 0.0
    %4332 = vmatpush1.msra.mxu0 0.0
    %4333 = vmatprep.subr.mxu0 0.0
    %4334 = vmatpush1.msra.mxu0 0.0
    %4335 = vmatprep.subr.mxu0 0.0
    %4336 = vmatpush1.msra.mxu0 0.0
    %4337 = vmatprep.subr.mxu0 0.0
    %4338 = vmatpush1.msra.mxu0 0.0
    %4339 = vmatprep.subr.mxu0 0.0
    %4340 = vmatpush1.msra.mxu0 0.0
    %4341 = vmatprep.subr.mxu0 0.0
    %4342 = vmatpush1.msra.mxu0 %v230
    %4343 = vmatprep.subr.mxu0 0.0
    %4344 = vmatpush1.msra.mxu0 %v229
    %4345 = vmatprep.subr.mxu0 0.0
    %4346 = vmatpush1.msra.mxu0 %v228
    %4347 = vmatprep.subr.mxu0 0.0
    %4348 = vmatpush1.msra.mxu0 %v227
    %4349 = vmatprep.subr.mxu0 0.0
    %4350 = vmatpush2.msra.mxu0 0.0
    %4351 = vmatprep.subr.mxu0 0.0
    %4352 = vmatpush2.msra.mxu0 0.0
    %4353 = vmatprep.subr.mxu0 0.0
    %4354 = vmatpush2.msra.mxu0 0.0
    %4355 = vmatprep.subr.mxu0 0.0
    %4356 = vmatpush2.msra.mxu0 0.0
    %4357 = vmatprep.subr.mxu0 0.0
    %4358 = vmatpush2.msra.mxu0 0.0
    %4359 = vmatprep.subr.mxu0 0.0
    %4360 = vmatpush2.msra.mxu0 0.0
    %4361 = vmatprep.subr.mxu0 0.0
    %4362 = vmatpush2.msra.mxu0 0.0
    %4363 = vmatprep.subr.mxu0 0.0
    %4364 = vmatpush2.msra.mxu0 0.0
    %4365 = vmatprep.subr.mxu0 0.0
    %4366 = vmatpush2.msra.mxu0 0.0
    %4367 = vmatprep.subr.mxu0 0.0
    %4368 = vmatpush2.msra.mxu0 0.0
    %4369 = vmatprep.subr.mxu0 0.0
    %4370 = vmatpush2.msra.mxu0 0.0
    %4371 = vmatprep.subr.mxu0 0.0
    %4372 = vmatpush2.msra.mxu0 0.0
    %4373 = vmatprep.subr.mxu0 0.0
    %4374 = vmatpush2.msra.mxu0 0.0
    %4375 = vmatprep.subr.mxu0 0.0
    %4376 = vmatpush2.msra.mxu0 0.0
    %4377 = vmatprep.subr.mxu0 0.0
    %4378 = vmatpush2.msra.mxu0 0.0
    %4379 = vmatprep.subr.mxu0 0.0
    %4380 = vmatpush2.msra.mxu0 0.0
    %4381 = vmatprep.mubr.f32.mxu0 0.0
    %4382 = vmatmul.mubr.f32.gmra.mxu0 %v4315
    %v4383 = vpop.f32.mrf.mxu0
    %v4384 = vadd.f32 0.0, %v4383
    %v4385 = vpop.f32.mrf.mxu0
    %4386 = vdwg.mxu0
    %v4389 = vunpack.c.l.s4 1966171168
    %v4390 = vunpack.c.0.s8 %v4389
    %v4391 = vlaneseq
    %v4392 = vshrl.u32 %v4391, 7
    %v4393 = vsub.s32 %v4390, %v4392
    %v4394 = vrot.slane %v4384, %v4393
    %v4395 = vcombine.high %v4394, %v4394
    %v4397 = vunpack.c.l.s4 1966171168
    %v4398 = vunpack.c.0.s8 %v4397
    %v4399 = vlaneseq
    %v4400 = vshrl.u32 %v4399, 7
    %v4401 = vsub.s32 %v4398, %v4400
    %v4402 = vrot.slane %v4394, %v4401
    %v4404 = vunpack.c.l.s4 1966171168
    %v4405 = vunpack.c.0.s8 %v4404
    %v4406 = vlaneseq
    %v4407 = vshrl.u32 %v4406, 7
    %v4408 = vsub.s32 %v4405, %v4407
    %v4409 = vrot.slane %v4395, %v4408
    %v4412 = vadd.f32 %v2145, %v4402
    %v4413 = vadd.f32 %v2161, %v4409
    %v4416 = vunpack.c.l.s4 1966171168
    %v4417 = vunpack.c.0.s8 %v4416
    %v4418 = vlaneseq
    %v4419 = vshrl.u32 %v4418, 7
    %v4420 = vsub.s32 %v4417, %v4419
    %v4421 = vrot.slane %v4087, %v4420
    %v4422 = vcombine.high %v4421, %v4421
    %v4424 = vunpack.c.l.s4 1966171168
    %v4425 = vunpack.c.0.s8 %v4424
    %v4426 = vlaneseq
    %v4427 = vshrl.u32 %v4426, 7
    %v4428 = vsub.s32 %v4425, %v4427
    %v4429 = vrot.slane %v4421, %v4428
    %v4431 = vunpack.c.l.s4 1966171168
    %v4432 = vunpack.c.0.s8 %v4431
    %v4433 = vlaneseq
    %v4434 = vshrl.u32 %v4433, 7
    %v4435 = vsub.s32 %v4432, %v4434
    %v4436 = vrot.slane %v4422, %v4435
    %4437 = vrot.lane.b32.xlu0 %v4429, 96
    %v4438 = vpop.permute.xlu0 %4437
    %4439 = vrot.lane.b32.xlu0 %v4436, 96
    %v4440 = vpop.permute.xlu0 %4439
    %v4443 = vadd.f32 %v4412, %v4438
    %v4444 = vadd.f32 %v4413, %v4440
    %v4445 = vxor.u32 %v4443, 2147483648
    %v4446 = vxor.u32 %v4444, 2147483648
    %v4447 = vmul.f32 %v4445, 1.442695
    %v4448 = vpow.pop %v4447
    %v4449 = vmul.f32 %v4446, 1.442695
    %v4450 = vpow.pop %v4449
    %v4451 = vadd.f32 %v4448, 1.0
    %v4452 = vadd.f32 %v4450, 1.0
    %v4453 = vrcp.pop %v4451
    %v4454 = vmul.f32 1.0, %v4453
    %v4455 = vrcp.pop %v4452
    %v4456 = vmul.f32 1.0, %v4455
    %4457 = vrot.lane.b32.xlu0 %v4429, 32
    %v4458 = vpop.permute.xlu0 %4457
    %4459 = vrot.lane.b32.xlu0 %v4436, 32
    %v4460 = vpop.permute.xlu0 %4459
    %v4463 = vmul.f32 %v4454, %v4458
    %v4464 = vmul.f32 %v4456, %v4460
    %4467 = vrot.lane.b32.xlu0 %v4463, 64
    %v4468 = vpop.permute.xlu0 %4467
    %4469 = vrot.lane.b32.xlu0 %v4464, 64
    %v4470 = vpop.permute.xlu0 %4469
    %v4473 = vadd.f32 %v4412, %v4468
    %v4474 = vadd.f32 %v4413, %v4470
    %v4475 = vtanh.pop %v4473
    %v4476 = vtanh.pop %v4474
    %v4477 = vsub.f32 1.0, %v4454
    %v4478 = vsub.f32 1.0, %v4456
    %4481 = vrot.lane.b32.xlu0 %v4475, 96
    %v4482 = vpop.permute.xlu0 %4481
    %4483 = vrot.lane.b32.xlu0 %v4476, 96
    %v4484 = vpop.permute.xlu0 %4483
    %v4487 = vmul.f32 %v4477, %v4482
    %v4488 = vmul.f32 %v4478, %v4484
    %v4489 = vmul.f32 %v4454, %v3895
    %v4490 = vmul.f32 %v4456, %v3896
    %v4491 = vadd.f32 %v4487, %v4489
    %v4492 = vadd.f32 %v4488, %v4490
    %v4495 = vcombine.low %v4491, %v4492
    %v4497 = vunpack.c.l.s4 1966171168
    %v4498 = vunpack.c.0.s8 %v4497
    %v4499 = vlaneseq
    %v4500 = vshrl.u32 %v4499, 7
    %v4501 = vsub.s32 %v4498, %v4500
    %v4502 = vrot.slane %v4495, %v4501
    %v4504 = vunpack.c.l.s4 1966171168
    %v4505 = vunpack.c.0.s8 %v4504
    %v4506 = vlaneseq
    %v4507 = vshrl.u32 %v4506, 7
    %v4508 = vsub.s32 %v4505, %v4507
    %v4509 = vrot.slane %v4502, %v4508
    %4510 = vrot.lane.b32.xlu0 %v4509, 96
    %v4511 = vpop.permute.xlu0 %4510
    %v4512 = vsel %vm351, %v4511, 0
    %4514 = vmatprep.subr.mxu0 0.0
    %4515 = vmatpush1.msra.mxu0 0.0
    %4516 = vmatprep.subr.mxu0 0.0
    %4517 = vmatpush1.msra.mxu0 0.0
    %4518 = vmatprep.subr.mxu0 0.0
    %4519 = vmatpush1.msra.mxu0 0.0
    %4520 = vmatprep.subr.mxu0 0.0
    %4521 = vmatpush1.msra.mxu0 0.0
    %4522 = vmatprep.subr.mxu0 0.0
    %4523 = vmatpush1.msra.mxu0 0.0
    %4524 = vmatprep.subr.mxu0 0.0
    %4525 = vmatpush1.msra.mxu0 0.0
    %4526 = vmatprep.subr.mxu0 0.0
    %4527 = vmatpush1.msra.mxu0 0.0
    %4528 = vmatprep.subr.mxu0 0.0
    %4529 = vmatpush1.msra.mxu0 0.0
    %4530 = vmatprep.subr.mxu0 0.0
    %4531 = vmatpush1.msra.mxu0 0.0
    %4532 = vmatprep.subr.mxu0 0.0
    %4533 = vmatpush1.msra.mxu0 0.0
    %4534 = vmatprep.subr.mxu0 0.0
    %4535 = vmatpush1.msra.mxu0 0.0
    %4536 = vmatprep.subr.mxu0 0.0
    %4537 = vmatpush1.msra.mxu0 0.0
    %4538 = vmatprep.subr.mxu0 0.0
    %4539 = vmatpush1.msra.mxu0 %v252
    %4540 = vmatprep.subr.mxu0 0.0
    %4541 = vmatpush1.msra.mxu0 %v251
    %4542 = vmatprep.subr.mxu0 0.0
    %4543 = vmatpush1.msra.mxu0 %v250
    %4544 = vmatprep.subr.mxu0 0.0
    %4545 = vmatpush1.msra.mxu0 %v249
    %4546 = vmatprep.subr.mxu0 0.0
    %4547 = vmatpush2.msra.mxu0 0.0
    %4548 = vmatprep.subr.mxu0 0.0
    %4549 = vmatpush2.msra.mxu0 0.0
    %4550 = vmatprep.subr.mxu0 0.0
    %4551 = vmatpush2.msra.mxu0 0.0
    %4552 = vmatprep.subr.mxu0 0.0
    %4553 = vmatpush2.msra.mxu0 0.0
    %4554 = vmatprep.subr.mxu0 0.0
    %4555 = vmatpush2.msra.mxu0 0.0
    %4556 = vmatprep.subr.mxu0 0.0
    %4557 = vmatpush2.msra.mxu0 0.0
    %4558 = vmatprep.subr.mxu0 0.0
    %4559 = vmatpush2.msra.mxu0 0.0
    %4560 = vmatprep.subr.mxu0 0.0
    %4561 = vmatpush2.msra.mxu0 0.0
    %4562 = vmatprep.subr.mxu0 0.0
    %4563 = vmatpush2.msra.mxu0 0.0
    %4564 = vmatprep.subr.mxu0 0.0
    %4565 = vmatpush2.msra.mxu0 0.0
    %4566 = vmatprep.subr.mxu0 0.0
    %4567 = vmatpush2.msra.mxu0 0.0
    %4568 = vmatprep.subr.mxu0 0.0
    %4569 = vmatpush2.msra.mxu0 0.0
    %4570 = vmatprep.subr.mxu0 0.0
    %4571 = vmatpush2.msra.mxu0 0.0
    %4572 = vmatprep.subr.mxu0 0.0
    %4573 = vmatpush2.msra.mxu0 0.0
    %4574 = vmatprep.subr.mxu0 0.0
    %4575 = vmatpush2.msra.mxu0 0.0
    %4576 = vmatprep.subr.mxu0 0.0
    %4577 = vmatpush2.msra.mxu0 0.0
    %4578 = vmatprep.mubr.f32.mxu0 0.0
    %4579 = vmatmul.mubr.f32.gmra.mxu0 %v4512
    %v4580 = vpop.f32.mrf.mxu0
    %v4581 = vadd.f32 %v1662, %v4580
    %v4582 = vpop.f32.mrf.mxu0
    %4583 = vdwg.mxu0
    %v4584 = vsel %vm1532, %v4581, -inf
    %4585 = vmax.xlane.f32.xlu0 %v4584
    %v4586 = vpop.xlane.xlu0 %4585
    %v4587 = vsub.f32 %v4581, %v4586
    %v4588 = vmul.f32 %v4587, 1.442695
    %v4589 = vpow.pop %v4588
    %v4590 = vsel %vm1532, %v4589, 0.0
    %4591 = vadd.xlane.f32.xlu0 %v4590
    %v4592 = vpop.xlane.xlu0 %4591
    %v4593 = vlog2.pop %v4592
    %v4594 = vmul.f32 %v4593, 0.6931472
    %v4595 = vsub.f32 %v4587, %v4594
    %vm4596 = vcmp.ge.f32.partialorder %v4581, %v4586
    %v4597 = vsel %vm4596, %v1665, 128
    %v4598 = vsel %vm1532, %v4597, 2147483647
    %v4599 = vand.u32 %v4598, 65535
    %v4600 = vshra.s32 %v4598, 16
    %v4601 = vcvt.s32.f32 %v4599
    %v4602 = vcvt.s32.f32 %v4600
    %4603 = vmin.xlane.f32.xlu0 %v4602
    %v4604 = vpop.xlane.xlu0 %4603
    %vm4605 = vcmp.eq.f32.partialorder %v4602, %v4604
    %v4606 = vsel %vm4605, %v4601, inf
    %4607 = vmin.xlane.f32.xlu0 %v4606
    %v4608 = vpop.xlane.xlu0 %4607
    %v4609 = vcvt.f32.s32 %v4608
    %v4610 = vcvt.f32.s32 %v4604
    %v4611 = vshll.u32 %v4610, 16
    %v4612 = vadd.s32 %v4611, %v4609
    %4613 = vmatprep.subr.mxu0 0.0
    %4614 = vmatpush1.msra.mxu0 0.0
    %4615 = vmatprep.subr.mxu0 0.0
    %4616 = vmatpush1.msra.mxu0 0.0
    %4617 = vmatprep.subr.mxu0 0.0
    %4618 = vmatpush1.msra.mxu0 0.0
    %4619 = vmatprep.subr.mxu0 0.0
    %4620 = vmatpush1.msra.mxu0 0.0
    %4621 = vmatprep.subr.mxu0 0.0
    %4622 = vmatpush1.msra.mxu0 0.0
    %4623 = vmatprep.subr.mxu0 0.0
    %4624 = vmatpush1.msra.mxu0 0.0
    %4625 = vmatprep.subr.mxu0 0.0
    %4626 = vmatpush1.msra.mxu0 0.0
    %4627 = vmatprep.subr.mxu0 0.0
    %4628 = vmatpush1.msra.mxu0 0.0
    %4629 = vmatprep.subr.mxu0 0.0
    %4630 = vmatpush1.msra.mxu0 0.0
    %4631 = vmatprep.subr.mxu0 0.0
    %4632 = vmatpush1.msra.mxu0 0.0
    %4633 = vmatprep.subr.mxu0 0.0
    %4634 = vmatpush1.msra.mxu0 0.0
    %4635 = vmatprep.subr.mxu0 0.0
    %4636 = vmatpush1.msra.mxu0 0.0
    %4637 = vmatprep.subr.mxu0 0.0
    %4638 = vmatpush1.msra.mxu0 %v222
    %4639 = vmatprep.subr.mxu0 0.0
    %4640 = vmatpush1.msra.mxu0 %v221
    %4641 = vmatprep.subr.mxu0 0.0
    %4642 = vmatpush1.msra.mxu0 %v220
    %4643 = vmatprep.subr.mxu0 0.0
    %4644 = vmatpush1.msra.mxu0 %v219
    %4645 = vmatprep.subr.mxu0 0.0
    %4646 = vmatpush2.msra.mxu0 0.0
    %4647 = vmatprep.subr.mxu0 0.0
    %4648 = vmatpush2.msra.mxu0 0.0
    %4649 = vmatprep.subr.mxu0 0.0
    %4650 = vmatpush2.msra.mxu0 0.0
    %4651 = vmatprep.subr.mxu0 0.0
    %4652 = vmatpush2.msra.mxu0 0.0
    %4653 = vmatprep.subr.mxu0 0.0
    %4654 = vmatpush2.msra.mxu0 0.0
    %4655 = vmatprep.subr.mxu0 0.0
    %4656 = vmatpush2.msra.mxu0 0.0
    %4657 = vmatprep.subr.mxu0 0.0
    %4658 = vmatpush2.msra.mxu0 0.0
    %4659 = vmatprep.subr.mxu0 0.0
    %4660 = vmatpush2.msra.mxu0 0.0
    %4661 = vmatprep.subr.mxu0 0.0
    %4662 = vmatpush2.msra.mxu0 0.0
    %4663 = vmatprep.subr.mxu0 0.0
    %4664 = vmatpush2.msra.mxu0 0.0
    %4665 = vmatprep.subr.mxu0 0.0
    %4666 = vmatpush2.msra.mxu0 0.0
    %4667 = vmatprep.subr.mxu0 0.0
    %4668 = vmatpush2.msra.mxu0 0.0
    %4669 = vmatprep.subr.mxu0 0.0
    %4670 = vmatpush2.msra.mxu0 0.0
    %4671 = vmatprep.subr.mxu0 0.0
    %4672 = vmatpush2.msra.mxu0 0.0
    %4673 = vmatprep.subr.mxu0 0.0
    %4674 = vmatpush2.msra.mxu0 0.0
    %4675 = vmatprep.subr.mxu0 0.0
    %4676 = vmatpush2.msra.mxu0 0.0
    %4677 = vmatprep.mubr.f32.mxu0 0.0
    %4678 = vmatmul.mubr.f32.gmra.mxu0 %v4512
    %v4679 = vpop.f32.mrf.mxu0
    %v4680 = vadd.f32 0.0, %v4679
    %v4681 = vpop.f32.mrf.mxu0
    %4682 = vdwg.mxu0
    %v4683 = vadd.f32 %v4680, %v2259
    %v4686 = vunpack.c.l.s4 1966171168
    %v4687 = vunpack.c.0.s8 %v4686
    %v4688 = vlaneseq
    %v4689 = vshrl.u32 %v4688, 7
    %v4690 = vsub.s32 %v4687, %v4689
    %v4691 = vrot.slane %v4680, %v4690
    %v4692 = vcombine.high %v4691, %v4691
    %v4694 = vunpack.c.l.s4 1966171168
    %v4695 = vunpack.c.0.s8 %v4694
    %v4696 = vlaneseq
    %v4697 = vshrl.u32 %v4696, 7
    %v4698 = vsub.s32 %v4695, %v4697
    %v4699 = vrot.slane %v4691, %v4698
    %v4701 = vunpack.c.l.s4 1966171168
    %v4702 = vunpack.c.0.s8 %v4701
    %v4703 = vlaneseq
    %v4704 = vshrl.u32 %v4703, 7
    %v4705 = vsub.s32 %v4702, %v4704
    %v4706 = vrot.slane %v4692, %v4705
    %v4707 = vlaneseq
    %v4708 = vshrl.u32 %v4707, 7
    %v4709 = vsub.s32 0, %v4708
    %v4710 = vrot.slane %v4699, %v4709
    %v4711 = vlaneseq
    %v4712 = vshrl.u32 %v4711, 7
    %v4713 = vsub.s32 0, %v4712
    %v4714 = vrot.slane %v4706, %v4713
    %v4717 = vadd.f32 %v1633, %v4710
    %v4718 = vadd.f32 %v1638, %v4714
    %v4719 = vtanh.pop %v4717
    %v4720 = vtanh.pop %v4718
    %v4722 = vsel %vm351, %v4719, 0
    %v4725 = vsel %vm351, %v4720, 0
    %4727 = vmatprep.subr.mxu0 0.0
    %4728 = vmatpush1.msra.mxu0 0.0
    %4729 = vmatprep.subr.mxu0 0.0
    %4730 = vmatpush1.msra.mxu0 0.0
    %4731 = vmatprep.subr.mxu0 0.0
    %4732 = vmatpush1.msra.mxu0 0.0
    %4733 = vmatprep.subr.mxu0 0.0
    %4734 = vmatpush1.msra.mxu0 0.0
    %4735 = vmatprep.subr.mxu0 0.0
    %4736 = vmatpush1.msra.mxu0 0.0
    %4737 = vmatprep.subr.mxu0 0.0
    %4738 = vmatpush1.msra.mxu0 0.0
    %4739 = vmatprep.subr.mxu0 0.0
    %4740 = vmatpush1.msra.mxu0 0.0
    %4741 = vmatprep.subr.mxu0 0.0
    %4742 = vmatpush1.msra.mxu0 0.0
    %4743 = vmatprep.subr.mxu0 0.0
    %4744 = vmatpush1.msra.mxu0 0.0
    %4745 = vmatprep.subr.mxu0 0.0
    %4746 = vmatpush1.msra.mxu0 0.0
    %4747 = vmatprep.subr.mxu0 0.0
    %4748 = vmatpush1.msra.mxu0 0.0
    %4749 = vmatprep.subr.mxu0 0.0
    %4750 = vmatpush1.msra.mxu0 0.0
    %4751 = vmatprep.subr.mxu0 0.0
    %4752 = vmatpush1.msra.mxu0 %v216
    %4753 = vmatprep.subr.mxu0 0.0
    %4754 = vmatpush1.msra.mxu0 %v215
    %4755 = vmatprep.subr.mxu0 0.0
    %4756 = vmatpush1.msra.mxu0 %v214
    %4757 = vmatprep.subr.mxu0 0.0
    %4758 = vmatpush1.msra.mxu0 %v213
    %4759 = vmatprep.subr.mxu0 0.0
    %4760 = vmatpush2.msra.mxu0 0.0
    %4761 = vmatprep.subr.mxu0 0.0
    %4762 = vmatpush2.msra.mxu0 0.0
    %4763 = vmatprep.subr.mxu0 0.0
    %4764 = vmatpush2.msra.mxu0 0.0
    %4765 = vmatprep.subr.mxu0 0.0
    %4766 = vmatpush2.msra.mxu0 0.0
    %4767 = vmatprep.subr.mxu0 0.0
    %4768 = vmatpush2.msra.mxu0 0.0
    %4769 = vmatprep.subr.mxu0 0.0
    %4770 = vmatpush2.msra.mxu0 0.0
    %4771 = vmatprep.subr.mxu0 0.0
    %4772 = vmatpush2.msra.mxu0 0.0
    %4773 = vmatprep.subr.mxu0 0.0
    %4774 = vmatpush2.msra.mxu0 0.0
    %4775 = vmatprep.subr.mxu0 0.0
    %4776 = vmatpush2.msra.mxu0 0.0
    %4777 = vmatprep.subr.mxu0 0.0
    %4778 = vmatpush2.msra.mxu0 0.0
    %4779 = vmatprep.subr.mxu0 0.0
    %4780 = vmatpush2.msra.mxu0 0.0
    %4781 = vmatprep.subr.mxu0 0.0
    %4782 = vmatpush2.msra.mxu0 0.0
    %4783 = vmatprep.subr.mxu0 0.0
    %4784 = vmatpush2.msra.mxu0 0.0
    %4785 = vmatprep.subr.mxu0 0.0
    %4786 = vmatpush2.msra.mxu0 0.0
    %4787 = vmatprep.subr.mxu0 0.0
    %4788 = vmatpush2.msra.mxu0 0.0
    %4789 = vmatprep.subr.mxu0 0.0
    %4790 = vmatpush2.msra.mxu0 0.0
    %4791 = vmatprep.mubr.f32.mxu0 0.0
    %4792 = vmatmul.mubr.f32.gmra.mxu0 %v4722
    %v4793 = vpop.f32.mrf.mxu0
    %v4794 = vadd.f32 %v1645, %v4793
    %v4795 = vpop.f32.mrf.mxu0
    %4796 = vmatprep.mubr.f32.mxu0 0.0
    %4797 = vmatmul.mubr.f32.gmra.mxu0 %v4725
    %v4798 = vpop.f32.mrf.mxu0
    %v4799 = vadd.f32 %v1645, %v4798
    %v4800 = vpop.f32.mrf.mxu0
    %4801 = vdwg.mxu0
    %v4802 = vtanh.pop %v4794
    %v4803 = vtanh.pop %v4799
    %v4804 = vmul.f32 %v4802, %v1651
    %v4805 = vmul.f32 %v4803, %v1651
    %v4806 = vsel %vm351, %v4804, 0.0
    %4807 = vadd.xlane.f32.xlu0 %v4806
    %v4808 = vpop.xlane.xlu0 %4807
    %v4809 = vsel %vm351, %v4805, 0.0
    %4810 = vadd.xlane.f32.xlu0 %v4809
    %v4811 = vpop.xlane.xlu0 %4810
    %v4814 = vlaneseq
    %v4815 = vshrl.u32 %v4814, 7
    %v4816 = vsub.s32 %v1665, %v4815
    %v4817 = vrot.slane %v4808, %v4816
    %v4818 = vlaneseq
    %v4819 = vshrl.u32 %v4818, 7
    %v4820 = vsub.s32 %v1665, %v4819
    %v4821 = vrot.slane %v4811, %v4820
    %v4822 = vsel %vm569, %v4821, %v4817
    %v4824 = vsel %vm2402, %v4822, -inf
    %4825 = vmax.xlane.f32.xlu0 %v4824
    %v4826 = vpop.xlane.xlu0 %4825
    %v4828 = vlaneseq
    %v4829 = vshrl.u32 %v4828, 7
    %v4830 = vsub.s32 0, %v4829
    %v4831 = vrot.slane %v4826, %v4830
    %v4832 = vlaneseq
    %v4833 = vshrl.u32 %v4832, 7
    %v4834 = vsub.s32 1, %v4833
    %v4835 = vrot.slane %v4826, %v4834
    %v4838 = vsub.f32 %v4808, %v4831
    %v4839 = vsub.f32 %v4811, %v4835
    %v4840 = vmul.f32 %v4838, 1.442695
    %v4841 = vpow.pop %v4840
    %v4842 = vmul.f32 %v4839, 1.442695
    %v4843 = vpow.pop %v4842
    %4846 = vset.pattern.permute.xlu0 0
    %4847 = vperm.xlu0 %4846, %v4841
    %v4848 = vpop.permute.xlu0 %4847
    %4849 = vset.pattern.permute.xlu0 0
    %4850 = vperm.xlu0 %4849, %v4843
    %v4851 = vpop.permute.xlu0 %4850
    %v4852 = vlaneseq
    %v4853 = vshrl.u32 %v4852, 7
    %v4854 = vsub.s32 %v1665, %v4853
    %v4855 = vrot.slane %v4848, %v4854
    %v4856 = vlaneseq
    %v4857 = vshrl.u32 %v4856, 7
    %v4858 = vsub.s32 %v1665, %v4857
    %v4859 = vrot.slane %v4851, %v4858
    %v4860 = vsel %vm569, %v4859, %v4855
    %v4862 = vsel %vm2402, %v4860, 0.0
    %4863 = vadd.xlane.f32.xlu0 %v4862
    %v4864 = vpop.xlane.xlu0 %4863
    %v4866 = vlaneseq
    %v4867 = vshrl.u32 %v4866, 7
    %v4868 = vsub.s32 0, %v4867
    %v4869 = vrot.slane %v4864, %v4868
    %v4870 = vlaneseq
    %v4871 = vshrl.u32 %v4870, 7
    %v4872 = vsub.s32 1, %v4871
    %v4873 = vrot.slane %v4864, %v4872
    %v4876 = vrcp.pop %v4869
    %v4877 = vmul.f32 %v4841, %v4876
    %v4878 = vrcp.pop %v4873
    %v4879 = vmul.f32 %v4843, %v4878
    %4881 = vset.pattern.permute.xlu0 0
    %4882 = vperm.xlu0 %4881, %v4877
    %v4883 = vpop.permute.xlu0 %4882
    %4886 = vset.pattern.permute.xlu0 0
    %4887 = vperm.xlu0 %4886, %v4879
    %v4888 = vpop.permute.xlu0 %4887
    %v4890 = vmul.f32 %v4883, %v1548
    %v4891 = vmul.f32 %v4888, %v1549
    %v4892 = vsel %vm2471, %v4890, 0.0
    %v4893 = vrot.slane %v4892, 4
    %v4894 = vadd.f32 %v4892, %v4893
    %v4895 = vrot.slane %v4894, 2
    %v4896 = vadd.f32 %v4894, %v4895
    %v4897 = vrot.slane %v4896, 1
    %v4898 = vadd.f32 %v4896, %v4897
    %v4899 = vsel %vm2471, %v4891, 0.0
    %v4900 = vrot.slane %v4899, 4
    %v4901 = vadd.f32 %v4899, %v4900
    %v4902 = vrot.slane %v4901, 2
    %v4903 = vadd.f32 %v4901, %v4902
    %v4904 = vrot.slane %v4903, 1
    %v4905 = vadd.f32 %v4903, %v4904
    %v4908 = vsel %vm569, %v4905, %v4898
    %4909 = vrot.lane.b32.xlu0 %v4908, 96
    %v4910 = vpop.permute.xlu0 %4909
    %v4911 = vsel %vm351, %v4910, 0
    %4913 = vmatprep.subr.mxu0 0.0
    %4914 = vmatpush1.msra.mxu0 0.0
    %4915 = vmatprep.subr.mxu0 0.0
    %4916 = vmatpush1.msra.mxu0 0.0
    %4917 = vmatprep.subr.mxu0 0.0
    %4918 = vmatpush1.msra.mxu0 0.0
    %4919 = vmatprep.subr.mxu0 0.0
    %4920 = vmatpush1.msra.mxu0 0.0
    %4921 = vmatprep.subr.mxu0 0.0
    %4922 = vmatpush1.msra.mxu0 0.0
    %4923 = vmatprep.subr.mxu0 0.0
    %4924 = vmatpush1.msra.mxu0 0.0
    %4925 = vmatprep.subr.mxu0 0.0
    %4926 = vmatpush1.msra.mxu0 0.0
    %4927 = vmatprep.subr.mxu0 0.0
    %4928 = vmatpush1.msra.mxu0 0.0
    %4929 = vmatprep.subr.mxu0 0.0
    %4930 = vmatpush1.msra.mxu0 0.0
    %4931 = vmatprep.subr.mxu0 0.0
    %4932 = vmatpush1.msra.mxu0 0.0
    %4933 = vmatprep.subr.mxu0 0.0
    %4934 = vmatpush1.msra.mxu0 0.0
    %4935 = vmatprep.subr.mxu0 0.0
    %4936 = vmatpush1.msra.mxu0 0.0
    %4937 = vmatprep.subr.mxu0 0.0
    %4938 = vmatpush1.msra.mxu0 %v230
    %4939 = vmatprep.subr.mxu0 0.0
    %4940 = vmatpush1.msra.mxu0 %v229
    %4941 = vmatprep.subr.mxu0 0.0
    %4942 = vmatpush1.msra.mxu0 %v228
    %4943 = vmatprep.subr.mxu0 0.0
    %4944 = vmatpush1.msra.mxu0 %v227
    %4945 = vmatprep.subr.mxu0 0.0
    %4946 = vmatpush2.msra.mxu0 0.0
    %4947 = vmatprep.subr.mxu0 0.0
    %4948 = vmatpush2.msra.mxu0 0.0
    %4949 = vmatprep.subr.mxu0 0.0
    %4950 = vmatpush2.msra.mxu0 0.0
    %4951 = vmatprep.subr.mxu0 0.0
    %4952 = vmatpush2.msra.mxu0 0.0
    %4953 = vmatprep.subr.mxu0 0.0
    %4954 = vmatpush2.msra.mxu0 0.0
    %4955 = vmatprep.subr.mxu0 0.0
    %4956 = vmatpush2.msra.mxu0 0.0
    %4957 = vmatprep.subr.mxu0 0.0
    %4958 = vmatpush2.msra.mxu0 0.0
    %4959 = vmatprep.subr.mxu0 0.0
    %4960 = vmatpush2.msra.mxu0 0.0
    %4961 = vmatprep.subr.mxu0 0.0
    %4962 = vmatpush2.msra.mxu0 0.0
    %4963 = vmatprep.subr.mxu0 0.0
    %4964 = vmatpush2.msra.mxu0 0.0
    %4965 = vmatprep.subr.mxu0 0.0
    %4966 = vmatpush2.msra.mxu0 0.0
    %4967 = vmatprep.subr.mxu0 0.0
    %4968 = vmatpush2.msra.mxu0 0.0
    %4969 = vmatprep.subr.mxu0 0.0
    %4970 = vmatpush2.msra.mxu0 0.0
    %4971 = vmatprep.subr.mxu0 0.0
    %4972 = vmatpush2.msra.mxu0 0.0
    %4973 = vmatprep.subr.mxu0 0.0
    %4974 = vmatpush2.msra.mxu0 0.0
    %4975 = vmatprep.subr.mxu0 0.0
    %4976 = vmatpush2.msra.mxu0 0.0
    %4977 = vmatprep.mubr.f32.mxu0 0.0
    %4978 = vmatmul.mubr.f32.gmra.mxu0 %v4911
    %v4979 = vpop.f32.mrf.mxu0
    %v4980 = vadd.f32 0.0, %v4979
    %v4981 = vpop.f32.mrf.mxu0
    %4982 = vdwg.mxu0
    %v4985 = vunpack.c.l.s4 1966171168
    %v4986 = vunpack.c.0.s8 %v4985
    %v4987 = vlaneseq
    %v4988 = vshrl.u32 %v4987, 7
    %v4989 = vsub.s32 %v4986, %v4988
    %v4990 = vrot.slane %v4980, %v4989
    %v4991 = vcombine.high %v4990, %v4990
    %v4993 = vunpack.c.l.s4 1966171168
    %v4994 = vunpack.c.0.s8 %v4993
    %v4995 = vlaneseq
    %v4996 = vshrl.u32 %v4995, 7
    %v4997 = vsub.s32 %v4994, %v4996
    %v4998 = vrot.slane %v4990, %v4997
    %v5000 = vunpack.c.l.s4 1966171168
    %v5001 = vunpack.c.0.s8 %v5000
    %v5002 = vlaneseq
    %v5003 = vshrl.u32 %v5002, 7
    %v5004 = vsub.s32 %v5001, %v5003
    %v5005 = vrot.slane %v4991, %v5004
    %v5008 = vadd.f32 %v2128, %v4998
    %v5009 = vadd.f32 %v2168, %v5005
    %v5012 = vunpack.c.l.s4 1966171168
    %v5013 = vunpack.c.0.s8 %v5012
    %v5014 = vlaneseq
    %v5015 = vshrl.u32 %v5014, 7
    %v5016 = vsub.s32 %v5013, %v5015
    %v5017 = vrot.slane %v4683, %v5016
    %v5018 = vcombine.high %v5017, %v5017
    %v5020 = vunpack.c.l.s4 1966171168
    %v5021 = vunpack.c.0.s8 %v5020
    %v5022 = vlaneseq
    %v5023 = vshrl.u32 %v5022, 7
    %v5024 = vsub.s32 %v5021, %v5023
    %v5025 = vrot.slane %v5017, %v5024
    %v5027 = vunpack.c.l.s4 1966171168
    %v5028 = vunpack.c.0.s8 %v5027
    %v5029 = vlaneseq
    %v5030 = vshrl.u32 %v5029, 7
    %v5031 = vsub.s32 %v5028, %v5030
    %v5032 = vrot.slane %v5018, %v5031
    %5033 = vrot.lane.b32.xlu0 %v5025, 96
    %v5034 = vpop.permute.xlu0 %5033
    %5035 = vrot.lane.b32.xlu0 %v5032, 96
    %v5036 = vpop.permute.xlu0 %5035
    %v5039 = vadd.f32 %v5008, %v5034
    %v5040 = vadd.f32 %v5009, %v5036
    %v5041 = vxor.u32 %v5039, 2147483648
    %v5042 = vxor.u32 %v5040, 2147483648
    %v5043 = vmul.f32 %v5041, 1.442695
    %v5044 = vpow.pop %v5043
    %v5045 = vmul.f32 %v5042, 1.442695
    %v5046 = vpow.pop %v5045
    %v5047 = vadd.f32 %v5044, 1.0
    %v5048 = vadd.f32 %v5046, 1.0
    %v5049 = vrcp.pop %v5047
    %v5050 = vmul.f32 1.0, %v5049
    %v5051 = vrcp.pop %v5048
    %v5052 = vmul.f32 1.0, %v5051
    %5053 = vrot.lane.b32.xlu0 %v5025, 32
    %v5054 = vpop.permute.xlu0 %5053
    %5055 = vrot.lane.b32.xlu0 %v5032, 32
    %v5056 = vpop.permute.xlu0 %5055
    %v5059 = vmul.f32 %v5050, %v5054
    %v5060 = vmul.f32 %v5052, %v5056
    %5063 = vrot.lane.b32.xlu0 %v5059, 64
    %v5064 = vpop.permute.xlu0 %5063
    %5065 = vrot.lane.b32.xlu0 %v5060, 64
    %v5066 = vpop.permute.xlu0 %5065
    %v5069 = vadd.f32 %v5008, %v5064
    %v5070 = vadd.f32 %v5009, %v5066
    %v5071 = vtanh.pop %v5069
    %v5072 = vtanh.pop %v5070
    %v5073 = vsub.f32 1.0, %v5050
    %v5074 = vsub.f32 1.0, %v5052
    %5077 = vrot.lane.b32.xlu0 %v5071, 96
    %v5078 = vpop.permute.xlu0 %5077
    %5079 = vrot.lane.b32.xlu0 %v5072, 96
    %v5080 = vpop.permute.xlu0 %5079
    %v5083 = vmul.f32 %v5073, %v5078
    %v5084 = vmul.f32 %v5074, %v5080
    %v5085 = vmul.f32 %v5050, %v4491
    %v5086 = vmul.f32 %v5052, %v4492
    %v5087 = vadd.f32 %v5083, %v5085
    %v5088 = vadd.f32 %v5084, %v5086
    %v5091 = vcombine.low %v5087, %v5088
    %v5093 = vunpack.c.l.s4 1966171168
    %v5094 = vunpack.c.0.s8 %v5093
    %v5095 = vlaneseq
    %v5096 = vshrl.u32 %v5095, 7
    %v5097 = vsub.s32 %v5094, %v5096
    %v5098 = vrot.slane %v5091, %v5097
    %v5100 = vunpack.c.l.s4 1966171168
    %v5101 = vunpack.c.0.s8 %v5100
    %v5102 = vlaneseq
    %v5103 = vshrl.u32 %v5102, 7
    %v5104 = vsub.s32 %v5101, %v5103
    %v5105 = vrot.slane %v5098, %v5104
    %5106 = vrot.lane.b32.xlu0 %v5105, 96
    %v5107 = vpop.permute.xlu0 %5106
    %v5108 = vsel %vm351, %v5107, 0
    %5110 = vmatprep.subr.mxu0 0.0
    %5111 = vmatpush1.msra.mxu0 0.0
    %5112 = vmatprep.subr.mxu0 0.0
    %5113 = vmatpush1.msra.mxu0 0.0
    %5114 = vmatprep.subr.mxu0 0.0
    %5115 = vmatpush1.msra.mxu0 0.0
    %5116 = vmatprep.subr.mxu0 0.0
    %5117 = vmatpush1.msra.mxu0 0.0
    %5118 = vmatprep.subr.mxu0 0.0
    %5119 = vmatpush1.msra.mxu0 0.0
    %5120 = vmatprep.subr.mxu0 0.0
    %5121 = vmatpush1.msra.mxu0 0.0
    %5122 = vmatprep.subr.mxu0 0.0
    %5123 = vmatpush1.msra.mxu0 0.0
    %5124 = vmatprep.subr.mxu0 0.0
    %5125 = vmatpush1.msra.mxu0 0.0
    %5126 = vmatprep.subr.mxu0 0.0
    %5127 = vmatpush1.msra.mxu0 0.0
    %5128 = vmatprep.subr.mxu0 0.0
    %5129 = vmatpush1.msra.mxu0 0.0
    %5130 = vmatprep.subr.mxu0 0.0
    %5131 = vmatpush1.msra.mxu0 0.0
    %5132 = vmatprep.subr.mxu0 0.0
    %5133 = vmatpush1.msra.mxu0 0.0
    %5134 = vmatprep.subr.mxu0 0.0
    %5135 = vmatpush1.msra.mxu0 %v252
    %5136 = vmatprep.subr.mxu0 0.0
    %5137 = vmatpush1.msra.mxu0 %v251
    %5138 = vmatprep.subr.mxu0 0.0
    %5139 = vmatpush1.msra.mxu0 %v250
    %5140 = vmatprep.subr.mxu0 0.0
    %5141 = vmatpush1.msra.mxu0 %v249
    %5142 = vmatprep.subr.mxu0 0.0
    %5143 = vmatpush2.msra.mxu0 0.0
    %5144 = vmatprep.subr.mxu0 0.0
    %5145 = vmatpush2.msra.mxu0 0.0
    %5146 = vmatprep.subr.mxu0 0.0
    %5147 = vmatpush2.msra.mxu0 0.0
    %5148 = vmatprep.subr.mxu0 0.0
    %5149 = vmatpush2.msra.mxu0 0.0
    %5150 = vmatprep.subr.mxu0 0.0
    %5151 = vmatpush2.msra.mxu0 0.0
    %5152 = vmatprep.subr.mxu0 0.0
    %5153 = vmatpush2.msra.mxu0 0.0
    %5154 = vmatprep.subr.mxu0 0.0
    %5155 = vmatpush2.msra.mxu0 0.0
    %5156 = vmatprep.subr.mxu0 0.0
    %5157 = vmatpush2.msra.mxu0 0.0
    %5158 = vmatprep.subr.mxu0 0.0
    %5159 = vmatpush2.msra.mxu0 0.0
    %5160 = vmatprep.subr.mxu0 0.0
    %5161 = vmatpush2.msra.mxu0 0.0
    %5162 = vmatprep.subr.mxu0 0.0
    %5163 = vmatpush2.msra.mxu0 0.0
    %5164 = vmatprep.subr.mxu0 0.0
    %5165 = vmatpush2.msra.mxu0 0.0
    %5166 = vmatprep.subr.mxu0 0.0
    %5167 = vmatpush2.msra.mxu0 0.0
    %5168 = vmatprep.subr.mxu0 0.0
    %5169 = vmatpush2.msra.mxu0 0.0
    %5170 = vmatprep.subr.mxu0 0.0
    %5171 = vmatpush2.msra.mxu0 0.0
    %5172 = vmatprep.subr.mxu0 0.0
    %5173 = vmatpush2.msra.mxu0 0.0
    %5174 = vmatprep.mubr.f32.mxu0 0.0
    %5175 = vmatmul.mubr.f32.gmra.mxu0 %v5108
    %v5176 = vpop.f32.mrf.mxu0
    %v5177 = vadd.f32 %v1662, %v5176
    %v5178 = vpop.f32.mrf.mxu0
    %5179 = vdwg.mxu0
    %v5180 = vsel %vm1532, %v5177, -inf
    %5181 = vmax.xlane.f32.xlu0 %v5180
    %v5182 = vpop.xlane.xlu0 %5181
    %v5183 = vsub.f32 %v5177, %v5182
    %v5184 = vmul.f32 %v5183, 1.442695
    %v5185 = vpow.pop %v5184
    %v5186 = vsel %vm1532, %v5185, 0.0
    %5187 = vadd.xlane.f32.xlu0 %v5186
    %v5188 = vpop.xlane.xlu0 %5187
    %v5189 = vlog2.pop %v5188
    %v5190 = vmul.f32 %v5189, 0.6931472
    %v5191 = vsub.f32 %v5183, %v5190
    %vm5192 = vcmp.ge.f32.partialorder %v5177, %v5182
    %v5193 = vsel %vm5192, %v1665, 128
    %v5194 = vsel %vm1532, %v5193, 2147483647
    %v5195 = vand.u32 %v5194, 65535
    %v5196 = vshra.s32 %v5194, 16
    %v5197 = vcvt.s32.f32 %v5195
    %v5198 = vcvt.s32.f32 %v5196
    %5199 = vmin.xlane.f32.xlu0 %v5198
    %v5200 = vpop.xlane.xlu0 %5199
    %vm5201 = vcmp.eq.f32.partialorder %v5198, %v5200
    %v5202 = vsel %vm5201, %v5197, inf
    %5203 = vmin.xlane.f32.xlu0 %v5202
    %v5204 = vpop.xlane.xlu0 %5203
    %v5205 = vcvt.f32.s32 %v5204
    %v5206 = vcvt.f32.s32 %v5200
    %v5207 = vshll.u32 %v5206, 16
    %v5208 = vadd.s32 %v5207, %v5205
    %v5211 = vunpack.c.l.s4 1966171168
    %v5212 = vunpack.c.0.s8 %v5211
    %v5213 = vlaneseq
    %v5214 = vshrl.u32 %v5213, 7
    %v5215 = vsub.s32 %v5212, %v5214
    %v5216 = vrot.slane %v2807, %v5215
    %v5217 = vcombine.high %v5216, %v5216
    %v5219 = vunpack.c.l.s4 1966171168
    %v5220 = vunpack.c.0.s8 %v5219
    %v5221 = vlaneseq
    %v5222 = vshrl.u32 %v5221, 7
    %v5223 = vsub.s32 %v5220, %v5222
    %v5224 = vrot.slane %v5216, %v5223
    %v5226 = vunpack.c.l.s4 1966171168
    %v5227 = vunpack.c.0.s8 %v5226
    %v5228 = vlaneseq
    %v5229 = vshrl.u32 %v5228, 7
    %v5230 = vsub.s32 %v5227, %v5229
    %v5231 = vrot.slane %v5217, %v5230
    %v5236 = vunpack.c.l.s4 1966171168
    %v5237 = vunpack.c.0.s8 %v5236
    %v5238 = vlaneseq
    %v5239 = vshrl.u32 %v5238, 7
    %v5240 = vsub.s32 %v5237, %v5239
    %v5241 = vrot.slane %v3403, %v5240
    %v5242 = vcombine.high %v5241, %v5241
    %v5244 = vunpack.c.l.s4 1966171168
    %v5245 = vunpack.c.0.s8 %v5244
    %v5246 = vlaneseq
    %v5247 = vshrl.u32 %v5246, 7
    %v5248 = vsub.s32 %v5245, %v5247
    %v5249 = vrot.slane %v5241, %v5248
    %v5251 = vunpack.c.l.s4 1966171168
    %v5252 = vunpack.c.0.s8 %v5251
    %v5253 = vlaneseq
    %v5254 = vshrl.u32 %v5253, 7
    %v5255 = vsub.s32 %v5252, %v5254
    %v5256 = vrot.slane %v5242, %v5255
    %v5259 = vunpack.c.l.s4 1966171168
    %v5260 = vunpack.c.0.s8 %v5259
    %v5261 = vlaneseq
    %v5262 = vshrl.u32 %v5261, 7
    %v5263 = vsub.s32 %v5260, %v5262
    %v5264 = vrot.slane %v3999, %v5263
    %v5265 = vcombine.high %v5264, %v5264
    %v5267 = vunpack.c.l.s4 1966171168
    %v5268 = vunpack.c.0.s8 %v5267
    %v5269 = vlaneseq
    %v5270 = vshrl.u32 %v5269, 7
    %v5271 = vsub.s32 %v5268, %v5270
    %v5272 = vrot.slane %v5264, %v5271
    %v5274 = vunpack.c.l.s4 1966171168
    %v5275 = vunpack.c.0.s8 %v5274
    %v5276 = vlaneseq
    %v5277 = vshrl.u32 %v5276, 7
    %v5278 = vsub.s32 %v5275, %v5277
    %v5279 = vrot.slane %v5265, %v5278
    %v5282 = vunpack.c.l.s4 1966171168
    %v5283 = vunpack.c.0.s8 %v5282
    %v5284 = vlaneseq
    %v5285 = vshrl.u32 %v5284, 7
    %v5286 = vsub.s32 %v5283, %v5285
    %v5287 = vrot.slane %v4595, %v5286
    %v5288 = vcombine.high %v5287, %v5287
    %v5290 = vunpack.c.l.s4 1966171168
    %v5291 = vunpack.c.0.s8 %v5290
    %v5292 = vlaneseq
    %v5293 = vshrl.u32 %v5292, 7
    %v5294 = vsub.s32 %v5291, %v5293
    %v5295 = vrot.slane %v5287, %v5294
    %v5297 = vunpack.c.l.s4 1966171168
    %v5298 = vunpack.c.0.s8 %v5297
    %v5299 = vlaneseq
    %v5300 = vshrl.u32 %v5299, 7
    %v5301 = vsub.s32 %v5298, %v5300
    %v5302 = vrot.slane %v5288, %v5301
    %v5305 = vunpack.c.l.s4 1966171168
    %v5306 = vunpack.c.0.s8 %v5305
    %v5307 = vlaneseq
    %v5308 = vshrl.u32 %v5307, 7
    %v5309 = vsub.s32 %v5306, %v5308
    %v5310 = vrot.slane %v5191, %v5309
    %v5311 = vcombine.high %v5310, %v5310
    %v5313 = vunpack.c.l.s4 1966171168
    %v5314 = vunpack.c.0.s8 %v5313
    %v5315 = vlaneseq
    %v5316 = vshrl.u32 %v5315, 7
    %v5317 = vsub.s32 %v5314, %v5316
    %v5318 = vrot.slane %v5310, %v5317
    %v5320 = vunpack.c.l.s4 1966171168
    %v5321 = vunpack.c.0.s8 %v5320
    %v5322 = vlaneseq
    %v5323 = vshrl.u32 %v5322, 7
    %v5324 = vsub.s32 %v5321, %v5323
    %v5325 = vrot.slane %v5311, %v5324
    %v5326 = vlaneseq
    %v5327 = vshrl.u32 %v5326, 7
    %v5328 = vsub.s32 0, %v5327
    %v5329 = vrot.slane %v5249, %v5328
    %v5330 = vlaneseq
    %v5331 = vshrl.u32 %v5330, 7
    %v5332 = vsub.s32 0, %v5331
    %v5333 = vrot.slane %v5256, %v5332
    %v5336 = vlaneseq
    %v5337 = vshrl.u32 %v5336, 7
    %v5338 = vsub.s32 0, %v5337
    %v5339 = vrot.slane %v5272, %v5338
    %v5340 = vlaneseq
    %v5341 = vshrl.u32 %v5340, 7
    %v5342 = vsub.s32 0, %v5341
    %v5343 = vrot.slane %v5279, %v5342
    %v5346 = vlaneseq
    %v5347 = vshrl.u32 %v5346, 7
    %v5348 = vsub.s32 0, %v5347
    %v5349 = vrot.slane %v5295, %v5348
    %v5350 = vlaneseq
    %v5351 = vshrl.u32 %v5350, 7
    %v5352 = vsub.s32 0, %v5351
    %v5353 = vrot.slane %v5302, %v5352
    %v5356 = vlaneseq
    %v5357 = vshrl.u32 %v5356, 7
    %v5358 = vsub.s32 0, %v5357
    %v5359 = vrot.slane %v5318, %v5358
    %v5360 = vlaneseq
    %v5361 = vshrl.u32 %v5360, 7
    %v5362 = vsub.s32 0, %v5361
    %v5363 = vrot.slane %v5325, %v5362
    %v5366 = vsel %vm1529, %v5224, %v5329
    %v5367 = vsel %vm1529, %v5231, %v5333
    %v5368 = vsel %vm1532, %v5366, %v5339
    %v5369 = vsel %vm1532, %v5367, %v5343
    %v5370 = vsel %vm1535, %v5368, %v5349
    %v5371 = vsel %vm1535, %v5369, %v5353
    %v5372 = vsel %vm1538, %v5370, %v5359
    %v5373 = vsel %vm1538, %v5371, %v5363
    %5374 = vst [vmem:[%s21] sm:$0x1f] %v5372
    %5375 = vst [vmem:[%s21 + $0x8] sm:$0x1f] %v5373
    %vm5376 = vcmask 7168
    %v5377 = vsel %vm5376, %v2824, %v3420
    %vm5378 = vcmask 15360
    %v5379 = vsel %vm5378, %v5377, %v4016
    %vm5380 = vcmask 23552
    %v5381 = vsel %vm5380, %v5379, %v4612
    %vm5382 = vcmask 31744
    %v5383 = vsel %vm5382, %v5381, %v5208
    %vm5384 = vcmask 33792
    %5385 = vst.msk [vmem:[#allocation19] sm:$0x3] %vm5384, %v5383
    // Predicated region
    $region126: #{tpu_custom_call.1} parent=1 // pred_check
      _
    $region127: #{tpu_custom_call.1} parent=1 // pred_check_branch
      %5387 = sbr.rel (0) target = $region129
    $region128: #{tpu_custom_call.1} parent=1 // pred_region
      _
    $region129: #{tpu_custom_call.1} parent=1 // pred_fallthru
      _
    // Predicated region
    $region130: #{tpu_custom_call.1} parent=1 // pred_check
      _
    $region131: #{tpu_custom_call.1} parent=1 // pred_check_branch
      %5389 = sbr.rel (0) target = $region133
    $region132: #{tpu_custom_call.1} parent=1 // pred_region
      %s5391 = ssub.s32 32, 32
      %5392 = vsyncadd [#allocation4], %s5391
      %s5394 = sshll.u32 [#allocation19], 4
      %s5395 = int_to_ptr.vmem [resolvable:$true] %s5394
      %5397 = dma.vmem_to_hbm [thread:$0]  %s5395, 32, %s22, [#allocation4]
    $region133: #{tpu_custom_call.1} parent=1 // pred_fallthru
      _
    // Predicated region
    $region134: #{tpu_custom_call.1} parent=1 // pred_check
      _
    $region135: #{tpu_custom_call.1} parent=1 // pred_check_branch
      %5399 = sbr.rel (0) target = $region137
    $region136: #{tpu_custom_call.1} parent=1 // pred_region
      _
    $region137: #{tpu_custom_call.1} parent=1 // pred_fallthru
      _
    // Predicated region
    $region138: #{tpu_custom_call.1} parent=1 // pred_check
      _
    $region139: #{tpu_custom_call.1} parent=1 // pred_check_branch
      %5401 = sbr.rel (0) target = $region141
    $region140: #{tpu_custom_call.1} parent=1 // pred_region
      %5402 = dma.done [#allocation4], 32
    $region141: #{tpu_custom_call.1} parent=1 // pred_fallthru
      _
    %5403 = vsyncpa [#allocation3], 1
    %5404 = vsyncpa [#allocation6], 1
    %5405 = vsyncpa [#allocation9], 1
    %5406 = vsyncpa [#allocation12], 1
    %5407 = vsyncpa [#allocation15], 1
    %5408 = vsyncpa [#allocation18], 1
    %5409 = vsyncpa [#allocation4], 1

</llo_original>
